<compile_context>
chip_gen: v5e
topology: v5e:2x2
jax: 0.10.0
libtpu: 0.0.40
codegen_flags: <defaults>
</compile_context>

<pallas_src>
import functools

import jax
import jax.numpy as jnp
from jax.experimental import pallas as pl
from jax.experimental.pallas import tpu as pltpu


_CPARAMS = pltpu.CompilerParams(dimension_semantics=("parallel",))


# ----------------------------- Pallas kernels ------------------------------

def _conv_pool_kernel(p_ref, w_ref, b_ref, o_ref, *, apply_relu):
    # p_ref: (4, TM, K*K*Cin) bf16 -- im2col patches of the 4 conv-output
    #        pixels feeding each 2x2 max-pool window (window position on axis 0,
    #        pooled (n, hp, wp) raster position on axis 1).
    # w_ref: (K*K*Cin, Cout) bf16 resident weight, b_ref: (1, Cout) f32.
    # Fused conv GEMM + bias + 2x2 max-pool (+ optional ReLU) epilogue.
    w = w_ref[...]
    y0 = jnp.dot(p_ref[0], w, preferred_element_type=jnp.float32)
    y1 = jnp.dot(p_ref[1], w, preferred_element_type=jnp.float32)
    y2 = jnp.dot(p_ref[2], w, preferred_element_type=jnp.float32)
    y3 = jnp.dot(p_ref[3], w, preferred_element_type=jnp.float32)
    m = jnp.maximum(jnp.maximum(y0, y1), jnp.maximum(y2, y3)) + b_ref[...]
    if apply_relu:
        m = jnp.maximum(m, 0.0)
    o_ref[...] = m.astype(o_ref.dtype)


def _mlp_kernel(x_ref, w1_ref, b1_ref, w2_ref, b2_ref, w3_ref, b3_ref, o_ref):
    # c_fc1 -> relu -> c_fc2 -> relu -> c_fc3 -> log_softmax(dim=1); f32 accum.
    h = jnp.dot(x_ref[...], w1_ref[...], preferred_element_type=jnp.float32) + b1_ref[...]
    h = jnp.maximum(h, 0.0).astype(jnp.bfloat16)
    h = jnp.dot(h, w2_ref[...], preferred_element_type=jnp.float32) + b2_ref[...]
    h = jnp.maximum(h, 0.0).astype(jnp.bfloat16)
    h = jnp.dot(h, w3_ref[...], preferred_element_type=jnp.float32) + b3_ref[...]
    m = jnp.max(h, axis=-1, keepdims=True)
    e = jnp.exp(h - m)
    s = jnp.sum(e, axis=-1, keepdims=True)
    o_ref[...] = h - m - jnp.log(s)


# --------------------------------- glue -------------------------------------

def _im2col_pooled(x, K):
    """x: (N,H,W,C) -> (4, N*Hp*Wp, K*K*C) bf16 patches.

    Axis 0 indexes the (dh, dw) position inside each 2x2 max-pool window; row r
    of each view is the im2col patch of conv-output pixel (2*hp+dh, 2*wp+dw)
    for pooled position (n, hp, wp) in raster order.  Patches are flattened in
    (kh, kw, c) order to match the PyTorch conv weight layout.
    """
    N, H, W, C = x.shape
    Ho, Wo = H - K + 1, W - K + 1
    Hp, Wp = Ho // 2, Wo // 2
    cols = [x[:, kh:kh + Ho, kw:kw + Wo, :] for kh in range(K) for kw in range(K)]
    p = jnp.stack(cols, axis=3).reshape(N, Ho, Wo, K * K * C)
    views = [p[:, dh::2, dw::2, :].reshape(N * Hp * Wp, K * K * C)
             for dh in (0, 1) for dw in (0, 1)]
    return jnp.stack(views, axis=0)


# ----------------------------- Pallas wrappers ------------------------------

def conv_pool(x_nhwc, w_oihw, b, *, apply_relu, tm=512):
    """Fused valid conv (k=5) + 2x2/2 max-pool (+ ReLU). Returns (N,Hp,Wp,Cout) bf16."""
    N, H, W, Cin = x_nhwc.shape
    Cout, Cin2, K, _ = w_oihw.shape
    assert Cin == Cin2
    Ho, Wo = H - K + 1, W - K + 1
    Hp, Wp = Ho // 2, Wo // 2
    M = N * Hp * Wp                      # pooled output rows
    Kdim = K * K * Cin

    patches = _im2col_pooled(x_nhwc.astype(jnp.bfloat16), K)          # (4, M, Kdim)
    wmat = jnp.transpose(w_oihw, (2, 3, 1, 0)).reshape(Kdim, Cout).astype(jnp.bfloat16)
    b2 = b.reshape(1, Cout).astype(jnp.float32)

    tm = M if M <= tm else tm            # small problems: single full block
    out = pl.pallas_call(
        functools.partial(_conv_pool_kernel, apply_relu=apply_relu),
        out_shape=jax.ShapeDtypeStruct((M, Cout), jnp.bfloat16),
        grid=(pl.cdiv(M, tm),),
        in_specs=[
            pl.BlockSpec((4, tm, Kdim), lambda i: (0, i, 0)),
            pl.BlockSpec((Kdim, Cout), lambda i: (0, 0)),
            pl.BlockSpec((1, Cout), lambda i: (0, 0)),
        ],
        out_specs=pl.BlockSpec((tm, Cout), lambda i: (i, 0)),
        compiler_params=_CPARAMS,
    )(patches, wmat, b2)
    return out.reshape(N, Hp, Wp, Cout)


def mlp_logsoftmax(x, w1, b1, w2, b2, w3, b3, *, tb=512):
    """Fused fc1->relu->fc2->relu->fc3->log_softmax, tiled over batch."""
    Nb, D = x.shape
    tb = Nb if Nb <= tb else tb
    args = [
        x.astype(jnp.bfloat16),
        w1.astype(jnp.bfloat16), b1.reshape(1, -1).astype(jnp.float32),
        w2.astype(jnp.bfloat16), b2.reshape(1, -1).astype(jnp.float32),
        w3.astype(jnp.bfloat16), b3.reshape(1, -1).astype(jnp.float32),
    ]
    in_specs = [pl.BlockSpec((tb, D), lambda i: (i, 0))]
    in_specs += [pl.BlockSpec(a.shape, lambda i: (0, 0)) for a in args[1:]]
    return pl.pallas_call(
        _mlp_kernel,
        out_shape=jax.ShapeDtypeStruct((Nb, 10), jnp.float32),
        grid=(pl.cdiv(Nb, tb),),
        in_specs=in_specs,
        out_specs=pl.BlockSpec((tb, 10), lambda i: (i, 0)),
        compiler_params=_CPARAMS,
    )(*args)


# ------------------------------ forward pass --------------------------------

def svhn_forward(x_nchw, params):
    if x_nchw.shape[1] == 1:                       # grayscale -> repeat to 3 ch
        x_nchw = jnp.tile(x_nchw, (1, 3, 1, 1))
    N = x_nchw.shape[0]
    x = jnp.transpose(x_nchw, (0, 2, 3, 1)).astype(jnp.bfloat16)   # NCHW -> NHWC

    # f_conv1 + f_pool1 + f_relu1 (fused): (N,32,32,3) -> (N,14,14,32)
    y1 = conv_pool(x, params["conv1_w"], params["conv1_b"], apply_relu=True)

    # f_conv2 + f_pool2 (no relu, fused): (N,14,14,32) -> (N,5,5,48)
    y2 = conv_pool(y1, params["conv2_w"], params["conv2_b"], apply_relu=False)

    # feature.view(-1, 48*5*5): flatten in NCHW (c, h, w) order like PyTorch.
    feat = jnp.transpose(y2, (0, 3, 1, 2)).reshape(N, 48 * 5 * 5)

    # c_fc1 -> relu -> c_fc2 -> relu -> c_fc3 -> log_softmax (fused kernel)
    return mlp_logsoftmax(
        feat,
        params["fc1_w"], params["fc1_b"],
        params["fc2_w"], params["fc2_b"],
        params["fc3_w"], params["fc3_b"],
    )


def init_params(key):
    """Deterministic PyTorch-style uniform(-1/sqrt(fan_in), 1/sqrt(fan_in)) init."""
    ks = jax.random.split(key, 10)

    def u(k, shape, fan_in):
        bound = 1.0 / float(fan_in) ** 0.5
        return jax.random.uniform(k, shape, jnp.float32, -bound, bound)

    return {
        "conv1_w": u(ks[0], (32, 3, 5, 5), 3 * 5 * 5),
        "conv1_b": u(ks[1], (32,), 3 * 5 * 5),
        "conv2_w": u(ks[2], (48, 32, 5, 5), 32 * 5 * 5),
        "conv2_b": u(ks[3], (48,), 32 * 5 * 5),
        "fc1_w":   u(ks[4], (1200, 100), 1200),   # stored (in, out)
        "fc1_b":   u(ks[5], (100,), 1200),
        "fc2_w":   u(ks[6], (100, 100), 100),
        "fc2_b":   u(ks[7], (100,), 100),
        "fc3_w":   u(ks[8], (100, 10), 100),
        "fc3_b":   u(ks[9], (10,), 100),
    }


if __name__ == "__main__":
    key = jax.random.PRNGKey(0)
    pkey, xkey = jax.random.split(key)
    params = init_params(pkey)

    # The module's 48*5*5 = 1200 flatten implies 32x32 spatial input (SVHN).
    x = jax.random.normal(xkey, (2, 3, 32, 32), jnp.float32)      # NCHW

    fwd = jax.jit(functools.partial(svhn_forward, params=params))
    out = jax.block_until_ready(fwd(x))

    assert out.shape == (2, 10), out.shape
    # log-softmax rows must exponentiate-sum to 1
    assert jnp.allclose(jnp.exp(out).sum(axis=1), 1.0, atol=1e-4)
    print("KERNEL_OK")
</pallas_src>

<mosaic_0001>
module attributes {stable_mosaic.version = 11 : i64} {
  func.func @_conv_pool_kernel(%arg0: i32, %arg1: memref<4x392x75xbf16, #tpu.memory_space<vmem>>, %arg2: memref<75x32xbf16, #tpu.memory_space<vmem>>, %arg3: memref<1x32xf32, #tpu.memory_space<vmem>>, %arg4: memref<392x32xbf16, #tpu.memory_space<vmem>>) attributes {dimension_semantics = [#tpu.dimension_semantics<parallel>], iteration_bounds = array<i64: 1>, scalar_prefetch = 0 : i64, scratch_operands = 0 : i64, tpu.core_type = #tpu.core_type<tc>, window_params = [{transform_indices = @transform_0, window_bounds = array<i64: 4, 392, 75>}, {pipeline_mode = #tpu.pipeline_mode<synchronous>, transform_indices = @transform_1, window_bounds = array<i64: 75, 32>}, {pipeline_mode = #tpu.pipeline_mode<synchronous>, transform_indices = @transform_2, window_bounds = array<i64: 1, 32>}, {transform_indices = @transform_3, window_bounds = array<i64: 392, 32>}]} {
    %c0 = arith.constant 0 : index
    %c0_0 = arith.constant 0 : index
    %0 = vector.load %arg2[%c0, %c0_0] : memref<75x32xbf16, #tpu.memory_space<vmem>>, vector<75x32xbf16>
    %c0_1 = arith.constant 0 : index
    %c0_2 = arith.constant 0 : index
    %c0_3 = arith.constant 0 : index
    %1 = vector.load %arg1[%c0_1, %c0_2, %c0_3] : memref<4x392x75xbf16, #tpu.memory_space<vmem>>, vector<1x392x75xbf16>
    %2 = vector.shape_cast %1 : vector<1x392x75xbf16> to vector<392x75xbf16>
    %cst = arith.constant dense<0.000000e+00> : vector<392x32xf32>
    %3 = tpu.matmul %2, %0, %cst {dimension_numbers = #tpu.dot_dimension_numbers<[1], [0], [0], [1], [0, 0, 1, 1], [], []>} : vector<392x75xbf16>, vector<75x32xbf16>, vector<392x32xf32> -> vector<392x32xf32>
    %c1 = arith.constant 1 : index
    %c0_4 = arith.constant 0 : index
    %c0_5 = arith.constant 0 : index
    %4 = vector.load %arg1[%c1, %c0_4, %c0_5] : memref<4x392x75xbf16, #tpu.memory_space<vmem>>, vector<1x392x75xbf16>
    %5 = vector.shape_cast %4 : vector<1x392x75xbf16> to vector<392x75xbf16>
    %cst_6 = arith.constant dense<0.000000e+00> : vector<392x32xf32>
    %6 = tpu.matmul %5, %0, %cst_6 {dimension_numbers = #tpu.dot_dimension_numbers<[1], [0], [0], [1], [0, 0, 1, 1], [], []>} : vector<392x75xbf16>, vector<75x32xbf16>, vector<392x32xf32> -> vector<392x32xf32>
    %c2 = arith.constant 2 : index
    %c0_7 = arith.constant 0 : index
    %c0_8 = arith.constant 0 : index
    %7 = vector.load %arg1[%c2, %c0_7, %c0_8] : memref<4x392x75xbf16, #tpu.memory_space<vmem>>, vector<1x392x75xbf16>
    %8 = vector.shape_cast %7 : vector<1x392x75xbf16> to vector<392x75xbf16>
    %cst_9 = arith.constant dense<0.000000e+00> : vector<392x32xf32>
    %9 = tpu.matmul %8, %0, %cst_9 {dimension_numbers = #tpu.dot_dimension_numbers<[1], [0], [0], [1], [0, 0, 1, 1], [], []>} : vector<392x75xbf16>, vector<75x32xbf16>, vector<392x32xf32> -> vector<392x32xf32>
    %c3 = arith.constant 3 : index
    %c0_10 = arith.constant 0 : index
    %c0_11 = arith.constant 0 : index
    %10 = vector.load %arg1[%c3, %c0_10, %c0_11] : memref<4x392x75xbf16, #tpu.memory_space<vmem>>, vector<1x392x75xbf16>
    %11 = vector.shape_cast %10 : vector<1x392x75xbf16> to vector<392x75xbf16>
    %cst_12 = arith.constant dense<0.000000e+00> : vector<392x32xf32>
    %12 = tpu.matmul %11, %0, %cst_12 {dimension_numbers = #tpu.dot_dimension_numbers<[1], [0], [0], [1], [0, 0, 1, 1], [], []>} : vector<392x75xbf16>, vector<75x32xbf16>, vector<392x32xf32> -> vector<392x32xf32>
    %13 = arith.maximumf %3, %6 : vector<392x32xf32>
    %14 = arith.maximumf %9, %12 : vector<392x32xf32>
    %15 = arith.maximumf %13, %14 : vector<392x32xf32>
    %c0_13 = arith.constant 0 : index
    %c0_14 = arith.constant 0 : index
    %16 = vector.load %arg3[%c0_13, %c0_14] : memref<1x32xf32, #tpu.memory_space<vmem>>, vector<1x32xf32>
    %17 = vector.broadcast %16 : vector<1x32xf32> to vector<392x32xf32>
    %18 = arith.addf %15, %17 : vector<392x32xf32>
    %cst_15 = arith.constant 0.000000e+00 : f32
    %19 = vector.broadcast %cst_15 : f32 to vector<392x32xf32>
    %20 = arith.maximumf %18, %19 : vector<392x32xf32>
    %21 = arith.truncf %20 : vector<392x32xf32> to vector<392x32xbf16>
    %c0_16 = arith.constant 0 : index
    %c0_17 = arith.constant 0 : index
    %22 = vector.load %arg4[%c0_16, %c0_17] : memref<392x32xbf16, #tpu.memory_space<vmem>>, vector<392x32xbf16>
    tpu.vector_store %arg4[%c0_16, %c0_17], %21 {strides = array<i32>} : memref<392x32xbf16, #tpu.memory_space<vmem>>, vector<392x32xbf16>,
    return
  }
  func.func @transform_0(%arg0: i32) -> (i32, i32, i32) {
    %c0_i32 = arith.constant 0 : i32
    %c0_i32_0 = arith.constant 0 : i32
    %c0_i32_1 = arith.constant 0 : i32
    return %c0_i32, %arg0, %c0_i32_0 : i32, i32, i32
  }
  func.func @transform_1(%arg0: i32) -> (i32, i32) {
    %c0_i32 = arith.constant 0 : i32
    %c0_i32_0 = arith.constant 0 : i32
    %c0_i32_1 = arith.constant 0 : i32
    return %c0_i32, %c0_i32_0 : i32, i32
  }
  func.func @transform_2(%arg0: i32) -> (i32, i32) {
    %c0_i32 = arith.constant 0 : i32
    %c0_i32_0 = arith.constant 0 : i32
    %c0_i32_1 = arith.constant 0 : i32
    return %c0_i32, %c0_i32_0 : i32, i32
  }
  func.func @transform_3(%arg0: i32) -> (i32, i32) {
    %c0_i32 = arith.constant 0 : i32
    %c0_i32_0 = arith.constant 0 : i32
    return %arg0, %c0_i32 : i32, i32
  }
}

module attributes {stable_mosaic.version = 11 : i64} {
  func.func @_conv_pool_kernel(%arg0: i32, %arg1: memref<4x50x800xbf16, #tpu.memory_space<vmem>>, %arg2: memref<800x48xbf16, #tpu.memory_space<vmem>>, %arg3: memref<1x48xf32, #tpu.memory_space<vmem>>, %arg4: memref<50x48xbf16, #tpu.memory_space<vmem>>) attributes {dimension_semantics = [#tpu.dimension_semantics<parallel>], iteration_bounds = array<i64: 1>, scalar_prefetch = 0 : i64, scratch_operands = 0 : i64, tpu.core_type = #tpu.core_type<tc>, window_params = [{transform_indices = @transform_0, window_bounds = array<i64: 4, 50, 800>}, {pipeline_mode = #tpu.pipeline_mode<synchronous>, transform_indices = @transform_1, window_bounds = array<i64: 800, 48>}, {pipeline_mode = #tpu.pipeline_mode<synchronous>, transform_indices = @transform_2, window_bounds = array<i64: 1, 48>}, {transform_indices = @transform_3, window_bounds = array<i64: 50, 48>}]} {
    %c0 = arith.constant 0 : index
    %c0_0 = arith.constant 0 : index
    %0 = vector.load %arg2[%c0, %c0_0] : memref<800x48xbf16, #tpu.memory_space<vmem>>, vector<800x48xbf16>
    %c0_1 = arith.constant 0 : index
    %c0_2 = arith.constant 0 : index
    %c0_3 = arith.constant 0 : index
    %1 = vector.load %arg1[%c0_1, %c0_2, %c0_3] : memref<4x50x800xbf16, #tpu.memory_space<vmem>>, vector<1x50x800xbf16>
    %2 = vector.shape_cast %1 : vector<1x50x800xbf16> to vector<50x800xbf16>
    %cst = arith.constant dense<0.000000e+00> : vector<50x48xf32>
    %3 = tpu.matmul %2, %0, %cst {dimension_numbers = #tpu.dot_dimension_numbers<[1], [0], [0], [1], [0, 0, 1, 1], [], []>} : vector<50x800xbf16>, vector<800x48xbf16>, vector<50x48xf32> -> vector<50x48xf32>
    %c1 = arith.constant 1 : index
    %c0_4 = arith.constant 0 : index
    %c0_5 = arith.constant 0 : index
    %4 = vector.load %arg1[%c1, %c0_4, %c0_5] : memref<4x50x800xbf16, #tpu.memory_space<vmem>>, vector<1x50x800xbf16>
    %5 = vector.shape_cast %4 : vector<1x50x800xbf16> to vector<50x800xbf16>
    %cst_6 = arith.constant dense<0.000000e+00> : vector<50x48xf32>
    %6 = tpu.matmul %5, %0, %cst_6 {dimension_numbers = #tpu.dot_dimension_numbers<[1], [0], [0], [1], [0, 0, 1, 1], [], []>} : vector<50x800xbf16>, vector<800x48xbf16>, vector<50x48xf32> -> vector<50x48xf32>
    %c2 = arith.constant 2 : index
    %c0_7 = arith.constant 0 : index
    %c0_8 = arith.constant 0 : index
    %7 = vector.load %arg1[%c2, %c0_7, %c0_8] : memref<4x50x800xbf16, #tpu.memory_space<vmem>>, vector<1x50x800xbf16>
    %8 = vector.shape_cast %7 : vector<1x50x800xbf16> to vector<50x800xbf16>
    %cst_9 = arith.constant dense<0.000000e+00> : vector<50x48xf32>
    %9 = tpu.matmul %8, %0, %cst_9 {dimension_numbers = #tpu.dot_dimension_numbers<[1], [0], [0], [1], [0, 0, 1, 1], [], []>} : vector<50x800xbf16>, vector<800x48xbf16>, vector<50x48xf32> -> vector<50x48xf32>
    %c3 = arith.constant 3 : index
    %c0_10 = arith.constant 0 : index
    %c0_11 = arith.constant 0 : index
    %10 = vector.load %arg1[%c3, %c0_10, %c0_11] : memref<4x50x800xbf16, #tpu.memory_space<vmem>>, vector<1x50x800xbf16>
    %11 = vector.shape_cast %10 : vector<1x50x800xbf16> to vector<50x800xbf16>
    %cst_12 = arith.constant dense<0.000000e+00> : vector<50x48xf32>
    %12 = tpu.matmul %11, %0, %cst_12 {dimension_numbers = #tpu.dot_dimension_numbers<[1], [0], [0], [1], [0, 0, 1, 1], [], []>} : vector<50x800xbf16>, vector<800x48xbf16>, vector<50x48xf32> -> vector<50x48xf32>
    %13 = arith.maximumf %3, %6 : vector<50x48xf32>
    %14 = arith.maximumf %9, %12 : vector<50x48xf32>
    %15 = arith.maximumf %13, %14 : vector<50x48xf32>
    %c0_13 = arith.constant 0 : index
    %c0_14 = arith.constant 0 : index
    %16 = vector.load %arg3[%c0_13, %c0_14] : memref<1x48xf32, #tpu.memory_space<vmem>>, vector<1x48xf32>
    %17 = vector.broadcast %16 : vector<1x48xf32> to vector<50x48xf32>
    %18 = arith.addf %15, %17 : vector<50x48xf32>
    %19 = arith.truncf %18 : vector<50x48xf32> to vector<50x48xbf16>
    %c0_15 = arith.constant 0 : index
    %c0_16 = arith.constant 0 : index
    %20 = vector.load %arg4[%c0_15, %c0_16] : memref<50x48xbf16, #tpu.memory_space<vmem>>, vector<50x48xbf16>
    tpu.vector_store %arg4[%c0_15, %c0_16], %19 {strides = array<i32>} : memref<50x48xbf16, #tpu.memory_space<vmem>>, vector<50x48xbf16>,
    return
  }
  func.func @transform_0(%arg0: i32) -> (i32, i32, i32) {
    %c0_i32 = arith.constant 0 : i32
    %c0_i32_0 = arith.constant 0 : i32
    %c0_i32_1 = arith.constant 0 : i32
    return %c0_i32, %arg0, %c0_i32_0 : i32, i32, i32
  }
  func.func @transform_1(%arg0: i32) -> (i32, i32) {
    %c0_i32 = arith.constant 0 : i32
    %c0_i32_0 = arith.constant 0 : i32
    %c0_i32_1 = arith.constant 0 : i32
    return %c0_i32, %c0_i32_0 : i32, i32
  }
  func.func @transform_2(%arg0: i32) -> (i32, i32) {
    %c0_i32 = arith.constant 0 : i32
    %c0_i32_0 = arith.constant 0 : i32
    %c0_i32_1 = arith.constant 0 : i32
    return %c0_i32, %c0_i32_0 : i32, i32
  }
  func.func @transform_3(%arg0: i32) -> (i32, i32) {
    %c0_i32 = arith.constant 0 : i32
    %c0_i32_0 = arith.constant 0 : i32
    return %arg0, %c0_i32 : i32, i32
  }
}

module attributes {stable_mosaic.version = 11 : i64} {
  func.func @_mlp_kernel(%arg0: i32, %arg1: memref<2x1200xbf16, #tpu.memory_space<vmem>>, %arg2: memref<1200x100xbf16, #tpu.memory_space<vmem>>, %arg3: memref<1x100xf32, #tpu.memory_space<vmem>>, %arg4: memref<100x100xbf16, #tpu.memory_space<vmem>>, %arg5: memref<1x100xf32, #tpu.memory_space<vmem>>, %arg6: memref<100x10xbf16, #tpu.memory_space<vmem>>, %arg7: memref<1x10xf32, #tpu.memory_space<vmem>>, %arg8: memref<2x10xf32, #tpu.memory_space<vmem>>) attributes {dimension_semantics = [#tpu.dimension_semantics<parallel>], iteration_bounds = array<i64: 1>, scalar_prefetch = 0 : i64, scratch_operands = 0 : i64, tpu.core_type = #tpu.core_type<tc>, window_params = [{transform_indices = @transform_0, window_bounds = array<i64: 2, 1200>}, {pipeline_mode = #tpu.pipeline_mode<synchronous>, transform_indices = @transform_1, window_bounds = array<i64: 1200, 100>}, {pipeline_mode = #tpu.pipeline_mode<synchronous>, transform_indices = @transform_2, window_bounds = array<i64: 1, 100>}, {pipeline_mode = #tpu.pipeline_mode<synchronous>, transform_indices = @transform_3, window_bounds = array<i64: 100, 100>}, {pipeline_mode = #tpu.pipeline_mode<synchronous>, transform_indices = @transform_4, window_bounds = array<i64: 1, 100>}, {pipeline_mode = #tpu.pipeline_mode<synchronous>, transform_indices = @transform_5, window_bounds = array<i64: 100, 10>}, {pipeline_mode = #tpu.pipeline_mode<synchronous>, transform_indices = @transform_6, window_bounds = array<i64: 1, 10>}, {transform_indices = @transform_7, window_bounds = array<i64: 2, 10>}]} {
    %c0 = arith.constant 0 : index
    %c0_0 = arith.constant 0 : index
    %0 = vector.load %arg1[%c0, %c0_0] : memref<2x1200xbf16, #tpu.memory_space<vmem>>, vector<2x1200xbf16>
    %c0_1 = arith.constant 0 : index
    %c0_2 = arith.constant 0 : index
    %1 = vector.load %arg2[%c0_1, %c0_2] : memref<1200x100xbf16, #tpu.memory_space<vmem>>, vector<1200x100xbf16>
    %cst = arith.constant dense<0.000000e+00> : vector<2x100xf32>
    %2 = tpu.matmul %0, %1, %cst {dimension_numbers = #tpu.dot_dimension_numbers<[1], [0], [0], [1], [0, 0, 1, 1], [], []>} : vector<2x1200xbf16>, vector<1200x100xbf16>, vector<2x100xf32> -> vector<2x100xf32>
    %c0_3 = arith.constant 0 : index
    %c0_4 = arith.constant 0 : index
    %3 = vector.load %arg3[%c0_3, %c0_4] : memref<1x100xf32, #tpu.memory_space<vmem>>, vector<1x100xf32>
    %4 = vector.broadcast %3 : vector<1x100xf32> to vector<2x100xf32>
    %5 = arith.addf %2, %4 : vector<2x100xf32>
    %cst_5 = arith.constant 0.000000e+00 : f32
    %6 = vector.broadcast %cst_5 : f32 to vector<2x100xf32>
    %7 = arith.maximumf %5, %6 : vector<2x100xf32>
    %8 = arith.truncf %7 : vector<2x100xf32> to vector<2x100xbf16>
    %c0_6 = arith.constant 0 : index
    %c0_7 = arith.constant 0 : index
    %9 = vector.load %arg4[%c0_6, %c0_7] : memref<100x100xbf16, #tpu.memory_space<vmem>>, vector<100x100xbf16>
    %cst_8 = arith.constant dense<0.000000e+00> : vector<2x100xf32>
    %10 = tpu.matmul %8, %9, %cst_8 {dimension_numbers = #tpu.dot_dimension_numbers<[1], [0], [0], [1], [0, 0, 1, 1], [], []>} : vector<2x100xbf16>, vector<100x100xbf16>, vector<2x100xf32> -> vector<2x100xf32>
    %c0_9 = arith.constant 0 : index
    %c0_10 = arith.constant 0 : index
    %11 = vector.load %arg5[%c0_9, %c0_10] : memref<1x100xf32, #tpu.memory_space<vmem>>, vector<1x100xf32>
    %12 = vector.broadcast %11 : vector<1x100xf32> to vector<2x100xf32>
    %13 = arith.addf %10, %12 : vector<2x100xf32>
    %cst_11 = arith.constant 0.000000e+00 : f32
    %14 = vector.broadcast %cst_11 : f32 to vector<2x100xf32>
    %15 = arith.maximumf %13, %14 : vector<2x100xf32>
    %16 = arith.truncf %15 : vector<2x100xf32> to vector<2x100xbf16>
    %c0_12 = arith.constant 0 : index
    %c0_13 = arith.constant 0 : index
    %17 = vector.load %arg6[%c0_12, %c0_13] : memref<100x10xbf16, #tpu.memory_space<vmem>>, vector<100x10xbf16>
    %cst_14 = arith.constant dense<0.000000e+00> : vector<2x10xf32>
    %18 = tpu.matmul %16, %17, %cst_14 {dimension_numbers = #tpu.dot_dimension_numbers<[1], [0], [0], [1], [0, 0, 1, 1], [], []>} : vector<2x100xbf16>, vector<100x10xbf16>, vector<2x10xf32> -> vector<2x10xf32>
    %c0_15 = arith.constant 0 : index
    %c0_16 = arith.constant 0 : index
    %19 = vector.load %arg7[%c0_15, %c0_16] : memref<1x10xf32, #tpu.memory_space<vmem>>, vector<1x10xf32>
    %20 = vector.broadcast %19 : vector<1x10xf32> to vector<2x10xf32>
    %21 = arith.addf %18, %20 : vector<2x10xf32>
    %cst_17 = arith.constant dense<0xFF800000> : vector<2xf32>
    %22 = vector.multi_reduction <maximumf>, %21, %cst_17 [1] : vector<2x10xf32> to vector<2xf32>
    %23 = vector.shape_cast %22 : vector<2xf32> to vector<2x1xf32>
    %24 = vector.broadcast %23 : vector<2x1xf32> to vector<2x10xf32>
    %25 = arith.subf %21, %24 : vector<2x10xf32>
    %26 = math.exp %25 : vector<2x10xf32>
    %cst_18 = arith.constant dense<0.000000e+00> : vector<2xf32>
    %27 = vector.multi_reduction <add>, %26, %cst_18 [1] : vector<2x10xf32> to vector<2xf32>
    %28 = vector.shape_cast %27 : vector<2xf32> to vector<2x1xf32>
    %29 = vector.broadcast %23 : vector<2x1xf32> to vector<2x10xf32>
    %30 = arith.subf %21, %29 : vector<2x10xf32>
    %31 = math.log %28 : vector<2x1xf32>
    %32 = vector.broadcast %31 : vector<2x1xf32> to vector<2x10xf32>
    %33 = arith.subf %30, %32 : vector<2x10xf32>
    %c0_19 = arith.constant 0 : index
    %c0_20 = arith.constant 0 : index
    %34 = vector.load %arg8[%c0_19, %c0_20] : memref<2x10xf32, #tpu.memory_space<vmem>>, vector<2x10xf32>
    tpu.vector_store %arg8[%c0_19, %c0_20], %33 {strides = array<i32>} : memref<2x10xf32, #tpu.memory_space<vmem>>, vector<2x10xf32>,
    return
  }
  func.func @transform_0(%arg0: i32) -> (i32, i32) {
    %c0_i32 = arith.constant 0 : i32
    %c0_i32_0 = arith.constant 0 : i32
    return %arg0, %c0_i32 : i32, i32
  }
  func.func @transform_1(%arg0: i32) -> (i32, i32) {
    %c0_i32 = arith.constant 0 : i32
    %c0_i32_0 = arith.constant 0 : i32
    %c0_i32_1 = arith.constant 0 : i32
    return %c0_i32, %c0_i32_0 : i32, i32
  }
  func.func @transform_2(%arg0: i32) -> (i32, i32) {
    %c0_i32 = arith.constant 0 : i32
    %c0_i32_0 = arith.constant 0 : i32
    %c0_i32_1 = arith.constant 0 : i32
    return %c0_i32, %c0_i32_0 : i32, i32
  }
  func.func @transform_3(%arg0: i32) -> (i32, i32) {
    %c0_i32 = arith.constant 0 : i32
    %c0_i32_0 = arith.constant 0 : i32
    %c0_i32_1 = arith.constant 0 : i32
    return %c0_i32, %c0_i32_0 : i32, i32
  }
  func.func @transform_4(%arg0: i32) -> (i32, i32) {
    %c0_i32 = arith.constant 0 : i32
    %c0_i32_0 = arith.constant 0 : i32
    %c0_i32_1 = arith.constant 0 : i32
    return %c0_i32, %c0_i32_0 : i32, i32
  }
  func.func @transform_5(%arg0: i32) -> (i32, i32) {
    %c0_i32 = arith.constant 0 : i32
    %c0_i32_0 = arith.constant 0 : i32
    %c0_i32_1 = arith.constant 0 : i32
    return %c0_i32, %c0_i32_0 : i32, i32
  }
  func.func @transform_6(%arg0: i32) -> (i32, i32) {
    %c0_i32 = arith.constant 0 : i32
    %c0_i32_0 = arith.constant 0 : i32
    %c0_i32_1 = arith.constant 0 : i32
    return %c0_i32, %c0_i32_0 : i32, i32
  }
  func.func @transform_7(%arg0: i32) -> (i32, i32) {
    %c0_i32 = arith.constant 0 : i32
    %c0_i32_0 = arith.constant 0 : i32
    return %arg0, %c0_i32 : i32, i32
  }
}

</mosaic_0001>

<llo_original>
// kernel: svhn_forward.3
$region0: #{svhn_forward.3}
  #allocation0 [shape = 'u32[]', space=smem, size = 0x4, offset = 0x4, fixed_abs, tag = 'smem constant byte address 0x4 - core index']
  #allocation1 [shape = 'u32[72,128]{1,0:T(1,128)}', space=vmem, size = 0x9000, scoped, tag = 'internal scratch']
  %s0 = inlined_call_operand.vmem [shape: bf16[4,392,75], index: 0, kind: input, shape index: {}]
  %s1 = inlined_call_operand.vmem [shape: bf16[75,32], index: 1, kind: input, shape index: {}]
  %s2 = inlined_call_operand.vmem [shape: f32[1,32], index: 2, kind: input, shape index: {}]
  %s3 = inlined_call_operand.vmem [shape: bf16[392,32], index: 3, kind: output, shape index: {}]
  %s4 = sld [smem:[#allocation0]]
  $region22: #{svhn_forward.3} parent=0
    _
  %s6 = ssub.s32 1, %s4
  %s7 = scalar_select 0, %s6, %s4
  // Predicated region
  $region2: #{svhn_forward.3} parent=0 // pred_check
    _
  $region3: #{svhn_forward.3} parent=0 // pred_check_branch
    %9 = sbr.rel (0) target = $region5
  $region4: #{svhn_forward.3} parent=0 // pred_region
    _
  $region5: #{svhn_forward.3} parent=0 // pred_fallthru
    _
  // Predicated region
  $region6: #{svhn_forward.3} parent=0 // pred_check
    _
  $region7: #{svhn_forward.3} parent=0 // pred_check_branch
    %11 = sbr.rel (0) target = $region9
  $region8: #{svhn_forward.3} parent=0 // pred_region
    _
  $region9: #{svhn_forward.3} parent=0 // pred_fallthru
    _
  // Predicated region
  $region10: #{svhn_forward.3} parent=0 // pred_check
    _
  $region11: #{svhn_forward.3} parent=0 // pred_check_branch
    %13 = sbr.rel (0) target = $region13
  $region12: #{svhn_forward.3} parent=0 // pred_region
    _
  $region13: #{svhn_forward.3} parent=0 // pred_fallthru
    _
  %v15 = vld [vmem:[%s1] sm:$0xf]
  %v16 = vld [vmem:[%s1 + $0x4] sm:$0xf]
  %v17 = vld [vmem:[%s1 + $0x8] sm:$0xf]
  %v18 = vld [vmem:[%s1 + $0xc] sm:$0xf]
  %v19 = vld [vmem:[%s1 + $0x10] sm:$0xf]
  %v20 = vld [vmem:[%s1 + $0x14] sm:$0xf]
  %v21 = vld [vmem:[%s1 + $0x18] sm:$0xf]
  %v22 = vld [vmem:[%s1 + $0x1c] sm:$0xf]
  %v23 = vld [vmem:[%s1 + $0x20] sm:$0xf]
  %v24 = vld [vmem:[%s1 + $0x24] sm:$0x3]
  %v25 = vld [vmem:[%s0] sm:$0xf]
  %v26 = vld [vmem:[%s0 + $0x4] sm:$0xf]
  %v27 = vld [vmem:[%s0 + $0x8] sm:$0xf]
  %v28 = vld [vmem:[%s0 + $0xc] sm:$0xf]
  %v29 = vld [vmem:[%s0 + $0x10] sm:$0xf]
  %v30 = vld [vmem:[%s0 + $0x14] sm:$0xf]
  %v31 = vld [vmem:[%s0 + $0x18] sm:$0xf]
  %v32 = vld [vmem:[%s0 + $0x1c] sm:$0xf]
  %v33 = vld [vmem:[%s0 + $0x20] sm:$0xf]
  %v34 = vld [vmem:[%s0 + $0x24] sm:$0xf]
  %v35 = vld [vmem:[%s0 + $0x28] sm:$0xf]
  %v36 = vld [vmem:[%s0 + $0x2c] sm:$0xf]
  %v37 = vld [vmem:[%s0 + $0x30] sm:$0xf]
  %v38 = vld [vmem:[%s0 + $0x34] sm:$0xf]
  %v39 = vld [vmem:[%s0 + $0x38] sm:$0xf]
  %v40 = vld [vmem:[%s0 + $0x3c] sm:$0xf]
  %v41 = vld [vmem:[%s0 + $0x40] sm:$0xf]
  %v42 = vld [vmem:[%s0 + $0x44] sm:$0xf]
  %v43 = vld [vmem:[%s0 + $0x48] sm:$0xf]
  %v44 = vld [vmem:[%s0 + $0x4c] sm:$0xf]
  %v45 = vld [vmem:[%s0 + $0x50] sm:$0xf]
  %v46 = vld [vmem:[%s0 + $0x54] sm:$0xf]
  %v47 = vld [vmem:[%s0 + $0x58] sm:$0xf]
  %v48 = vld [vmem:[%s0 + $0x5c] sm:$0xf]
  %v49 = vld [vmem:[%s0 + $0x60] sm:$0xf]
  %v50 = vld [vmem:[%s0 + $0x64] sm:$0xf]
  %v51 = vld [vmem:[%s0 + $0x68] sm:$0xf]
  %v52 = vld [vmem:[%s0 + $0x6c] sm:$0xf]
  %v53 = vld [vmem:[%s0 + $0x70] sm:$0xf]
  %v54 = vld [vmem:[%s0 + $0x74] sm:$0xf]
  %v55 = vld [vmem:[%s0 + $0x78] sm:$0xf]
  %v56 = vld [vmem:[%s0 + $0x7c] sm:$0xf]
  %v57 = vld [vmem:[%s0 + $0x80] sm:$0xf]
  %v58 = vld [vmem:[%s0 + $0x84] sm:$0xf]
  %v59 = vld [vmem:[%s0 + $0x88] sm:$0xf]
  %v60 = vld [vmem:[%s0 + $0x8c] sm:$0xf]
  %v61 = vld [vmem:[%s0 + $0x90] sm:$0xf]
  %v62 = vld [vmem:[%s0 + $0x94] sm:$0xf]
  %v63 = vld [vmem:[%s0 + $0x98] sm:$0xf]
  %v64 = vld [vmem:[%s0 + $0x9c] sm:$0xf]
  %v65 = vld [vmem:[%s0 + $0xa0] sm:$0xf]
  %v66 = vld [vmem:[%s0 + $0xa4] sm:$0xf]
  %v67 = vld [vmem:[%s0 + $0xa8] sm:$0xf]
  %v68 = vld [vmem:[%s0 + $0xac] sm:$0xf]
  %v69 = vld [vmem:[%s0 + $0xb0] sm:$0xf]
  %v70 = vld [vmem:[%s0 + $0xb4] sm:$0xf]
  %v71 = vld [vmem:[%s0 + $0xb8] sm:$0xf]
  %v72 = vld [vmem:[%s0 + $0xbc] sm:$0xf]
  %v73 = vld [vmem:[%s0 + $0xc0] sm:$0xf]
  %v123 = vunpack.c.l.b16 %v25
  %v124 = vunpack.c.l.b16 %v26
  %v125 = vunpack.c.l.b16 %v27
  %v126 = vunpack.c.l.b16 %v28
  %v127 = vunpack.c.l.b16 %v29
  %v128 = vunpack.c.l.b16 %v30
  %v129 = vunpack.c.l.b16 %v31
  %v130 = vunpack.c.l.b16 %v32
  %v131 = vunpack.c.l.b16 %v33
  %v132 = vunpack.c.l.b16 %v34
  %v133 = vunpack.c.l.b16 %v35
  %v134 = vunpack.c.l.b16 %v36
  %v135 = vunpack.c.l.b16 %v37
  %v136 = vunpack.c.l.b16 %v38
  %v137 = vunpack.c.l.b16 %v39
  %v138 = vunpack.c.l.b16 %v40
  %v139 = vunpack.c.l.b16 %v41
  %v140 = vunpack.c.l.b16 %v42
  %v141 = vunpack.c.l.b16 %v43
  %v142 = vunpack.c.l.b16 %v44
  %v143 = vunpack.c.l.b16 %v45
  %v144 = vunpack.c.l.b16 %v46
  %v145 = vunpack.c.l.b16 %v47
  %v146 = vunpack.c.l.b16 %v48
  %v147 = vunpack.c.l.b16 %v49
  %v148 = vunpack.c.l.b16 %v50
  %v149 = vunpack.c.l.b16 %v51
  %v150 = vunpack.c.l.b16 %v52
  %v151 = vunpack.c.l.b16 %v53
  %v152 = vunpack.c.l.b16 %v54
  %v153 = vunpack.c.l.b16 %v55
  %v154 = vunpack.c.l.b16 %v56
  %v155 = vunpack.c.l.b16 %v57
  %v156 = vunpack.c.l.b16 %v58
  %v157 = vunpack.c.l.b16 %v59
  %v158 = vunpack.c.l.b16 %v60
  %v159 = vunpack.c.l.b16 %v61
  %v160 = vunpack.c.l.b16 %v62
  %v161 = vunpack.c.l.b16 %v63
  %v162 = vunpack.c.l.b16 %v64
  %v163 = vunpack.c.l.b16 %v65
  %v164 = vunpack.c.l.b16 %v66
  %v165 = vunpack.c.l.b16 %v67
  %v166 = vunpack.c.l.b16 %v68
  %v167 = vunpack.c.l.b16 %v69
  %v168 = vunpack.c.l.b16 %v70
  %v169 = vunpack.c.l.b16 %v71
  %v170 = vunpack.c.l.b16 %v72
  %v171 = vunpack.c.l.b16 %v73
  %v172 = vpack.c.b16 %v124, %v123
  %v173 = vpack.c.b16 %v126, %v125
  %v174 = vpack.c.b16 %v128, %v127
  %v175 = vpack.c.b16 %v130, %v129
  %v176 = vpack.c.b16 %v132, %v131
  %v177 = vpack.c.b16 %v134, %v133
  %v178 = vpack.c.b16 %v136, %v135
  %v179 = vpack.c.b16 %v138, %v137
  %v180 = vpack.c.b16 %v140, %v139
  %v181 = vpack.c.b16 %v142, %v141
  %v182 = vpack.c.b16 %v144, %v143
  %v183 = vpack.c.b16 %v146, %v145
  %v184 = vpack.c.b16 %v148, %v147
  %v185 = vpack.c.b16 %v150, %v149
  %v186 = vpack.c.b16 %v152, %v151
  %v187 = vpack.c.b16 %v154, %v153
  %v188 = vpack.c.b16 %v156, %v155
  %v189 = vpack.c.b16 %v158, %v157
  %v190 = vpack.c.b16 %v160, %v159
  %v191 = vpack.c.b16 %v162, %v161
  %v192 = vpack.c.b16 %v164, %v163
  %v193 = vpack.c.b16 %v166, %v165
  %v194 = vpack.c.b16 %v168, %v167
  %v195 = vpack.c.b16 %v170, %v169
  %v196 = vpack.c.b16 %v171, %v171
  %v207 = vunpack.c.l.b16 %v15
  %v208 = vunpack.c.l.b16 %v16
  %v209 = vunpack.c.l.b16 %v17
  %v210 = vunpack.c.l.b16 %v18
  %v211 = vunpack.c.l.b16 %v19
  %v212 = vunpack.c.l.b16 %v20
  %v213 = vunpack.c.l.b16 %v21
  %v214 = vunpack.c.l.b16 %v22
  %v215 = vunpack.c.l.b16 %v23
  %v216 = vunpack.c.l.b16 %v24
  %v217 = vpack.c.b16 %v208, %v207
  %v218 = vpack.c.b16 %v210, %v209
  %v219 = vpack.c.b16 %v212, %v211
  %v220 = vpack.c.b16 %v214, %v213
  %v221 = vpack.c.b16 %v216, %v215
  %vm226 = vcmask 613376
  %v228 = vsel %vm226, %v172, 0
  %v231 = vsel %vm226, %v173, 0
  %v234 = vsel %vm226, %v174, 0
  %v237 = vsel %vm226, %v175, 0
  %v240 = vsel %vm226, %v176, 0
  %v243 = vsel %vm226, %v177, 0
  %v246 = vsel %vm226, %v178, 0
  %v249 = vsel %vm226, %v179, 0
  %v252 = vsel %vm226, %v180, 0
  %v255 = vsel %vm226, %v181, 0
  %v258 = vsel %vm226, %v182, 0
  %v261 = vsel %vm226, %v183, 0
  %v264 = vsel %vm226, %v184, 0
  %v267 = vsel %vm226, %v185, 0
  %v270 = vsel %vm226, %v186, 0
  %v273 = vsel %vm226, %v187, 0
  %v276 = vsel %vm226, %v188, 0
  %v279 = vsel %vm226, %v189, 0
  %v282 = vsel %vm226, %v190, 0
  %v285 = vsel %vm226, %v191, 0
  %v288 = vsel %vm226, %v192, 0
  %v291 = vsel %vm226, %v193, 0
  %v294 = vsel %vm226, %v194, 0
  %v297 = vsel %vm226, %v195, 0
  %v300 = vsel %vm226, %v196, 0
  %vm302 = vcmask 1044480
  %vm303 = vcmask 1045504
  %v304 = vsel %vm302, 4294967295, 65535
  %v305 = vsel %vm303, %v304, 0
  %v307 = vand.u32 %v221, %v305
  %309 = vmatpush.bf16.msra.mxu0 0
  %310 = vmatpush.bf16.msra.mxu0 0
  %311 = vmatpush.bf16.msra.mxu0 0
  %312 = vmatpush.bf16.msra.mxu0 %v307
  %313 = vmatpush.bf16.msra.mxu0 %v220
  %314 = vmatpush.bf16.msra.mxu0 %v219
  %315 = vmatpush.bf16.msra.mxu0 %v218
  %316 = vmatpush.bf16.msra.mxu0 %v217
  %317 = vmatmul.bf16.gmra.mxu0 %v228
  %v318 = vpop.f32.mrf.mxu0
  %v319 = vadd.f32 0.0, %v318
  %v320 = vpop.f32.mrf.mxu0
  %v321 = vadd.f32 0.0, %v320
  %322 = vmatmul.bf16.gmra.mxu0 %v231
  %v323 = vpop.f32.mrf.mxu0
  %v324 = vadd.f32 0.0, %v323
  %v325 = vpop.f32.mrf.mxu0
  %v326 = vadd.f32 0.0, %v325
  %327 = vmatmul.bf16.gmra.mxu0 %v234
  %v328 = vpop.f32.mrf.mxu0
  %v329 = vadd.f32 0.0, %v328
  %v330 = vpop.f32.mrf.mxu0
  %v331 = vadd.f32 0.0, %v330
  %332 = vmatmul.bf16.gmra.mxu0 %v237
  %v333 = vpop.f32.mrf.mxu0
  %v334 = vadd.f32 0.0, %v333
  %v335 = vpop.f32.mrf.mxu0
  %v336 = vadd.f32 0.0, %v335
  %337 = vmatmul.bf16.gmra.mxu0 %v240
  %v338 = vpop.f32.mrf.mxu0
  %v339 = vadd.f32 0.0, %v338
  %v340 = vpop.f32.mrf.mxu0
  %v341 = vadd.f32 0.0, %v340
  %342 = vmatmul.bf16.gmra.mxu0 %v243
  %v343 = vpop.f32.mrf.mxu0
  %v344 = vadd.f32 0.0, %v343
  %v345 = vpop.f32.mrf.mxu0
  %v346 = vadd.f32 0.0, %v345
  %347 = vmatmul.bf16.gmra.mxu0 %v246
  %v348 = vpop.f32.mrf.mxu0
  %v349 = vadd.f32 0.0, %v348
  %v350 = vpop.f32.mrf.mxu0
  %v351 = vadd.f32 0.0, %v350
  %352 = vmatmul.bf16.gmra.mxu0 %v249
  %v353 = vpop.f32.mrf.mxu0
  %v354 = vadd.f32 0.0, %v353
  %v355 = vpop.f32.mrf.mxu0
  %v356 = vadd.f32 0.0, %v355
  %357 = vmatmul.bf16.gmra.mxu0 %v252
  %v358 = vpop.f32.mrf.mxu0
  %v359 = vadd.f32 0.0, %v358
  %v360 = vpop.f32.mrf.mxu0
  %v361 = vadd.f32 0.0, %v360
  %362 = vmatmul.bf16.gmra.mxu0 %v255
  %v363 = vpop.f32.mrf.mxu0
  %v364 = vadd.f32 0.0, %v363
  %v365 = vpop.f32.mrf.mxu0
  %v366 = vadd.f32 0.0, %v365
  %367 = vmatmul.bf16.gmra.mxu0 %v258
  %v368 = vpop.f32.mrf.mxu0
  %v369 = vadd.f32 0.0, %v368
  %v370 = vpop.f32.mrf.mxu0
  %v371 = vadd.f32 0.0, %v370
  %372 = vmatmul.bf16.gmra.mxu0 %v261
  %v373 = vpop.f32.mrf.mxu0
  %v374 = vadd.f32 0.0, %v373
  %v375 = vpop.f32.mrf.mxu0
  %v376 = vadd.f32 0.0, %v375
  %377 = vmatmul.bf16.gmra.mxu0 %v264
  %v378 = vpop.f32.mrf.mxu0
  %v379 = vadd.f32 0.0, %v378
  %v380 = vpop.f32.mrf.mxu0
  %v381 = vadd.f32 0.0, %v380
  %382 = vmatmul.bf16.gmra.mxu0 %v267
  %v383 = vpop.f32.mrf.mxu0
  %v384 = vadd.f32 0.0, %v383
  %v385 = vpop.f32.mrf.mxu0
  %v386 = vadd.f32 0.0, %v385
  %387 = vmatmul.bf16.gmra.mxu0 %v270
  %v388 = vpop.f32.mrf.mxu0
  %v389 = vadd.f32 0.0, %v388
  %v390 = vpop.f32.mrf.mxu0
  %v391 = vadd.f32 0.0, %v390
  %392 = vmatmul.bf16.gmra.mxu0 %v273
  %v393 = vpop.f32.mrf.mxu0
  %v394 = vadd.f32 0.0, %v393
  %v395 = vpop.f32.mrf.mxu0
  %v396 = vadd.f32 0.0, %v395
  %397 = vmatmul.bf16.gmra.mxu0 %v276
  %v398 = vpop.f32.mrf.mxu0
  %v399 = vadd.f32 0.0, %v398
  %v400 = vpop.f32.mrf.mxu0
  %v401 = vadd.f32 0.0, %v400
  %402 = vmatmul.bf16.gmra.mxu0 %v279
  %v403 = vpop.f32.mrf.mxu0
  %v404 = vadd.f32 0.0, %v403
  %v405 = vpop.f32.mrf.mxu0
  %v406 = vadd.f32 0.0, %v405
  %407 = vmatmul.bf16.gmra.mxu0 %v282
  %v408 = vpop.f32.mrf.mxu0
  %v409 = vadd.f32 0.0, %v408
  %v410 = vpop.f32.mrf.mxu0
  %v411 = vadd.f32 0.0, %v410
  %412 = vmatmul.bf16.gmra.mxu0 %v285
  %v413 = vpop.f32.mrf.mxu0
  %v414 = vadd.f32 0.0, %v413
  %v415 = vpop.f32.mrf.mxu0
  %v416 = vadd.f32 0.0, %v415
  %417 = vmatmul.bf16.gmra.mxu0 %v288
  %v418 = vpop.f32.mrf.mxu0
  %v419 = vadd.f32 0.0, %v418
  %v420 = vpop.f32.mrf.mxu0
  %v421 = vadd.f32 0.0, %v420
  %422 = vmatmul.bf16.gmra.mxu0 %v291
  %v423 = vpop.f32.mrf.mxu0
  %v424 = vadd.f32 0.0, %v423
  %v425 = vpop.f32.mrf.mxu0
  %v426 = vadd.f32 0.0, %v425
  %427 = vmatmul.bf16.gmra.mxu0 %v294
  %v428 = vpop.f32.mrf.mxu0
  %v429 = vadd.f32 0.0, %v428
  %v430 = vpop.f32.mrf.mxu0
  %v431 = vadd.f32 0.0, %v430
  %432 = vmatmul.bf16.gmra.mxu0 %v297
  %v433 = vpop.f32.mrf.mxu0
  %v434 = vadd.f32 0.0, %v433
  %v435 = vpop.f32.mrf.mxu0
  %v436 = vadd.f32 0.0, %v435
  %437 = vmatmul.bf16.gmra.mxu0 %v300
  %v438 = vpop.f32.mrf.mxu0
  %v439 = vadd.f32 0.0, %v438
  %v440 = vpop.f32.mrf.mxu0
  %441 = vdwg.mxu0
  %s442 = scalar_lea.vmem %s0, 196
  %v443 = vld [vmem:[%s442] sm:$0xf]
  %v444 = vld [vmem:[%s442 + $0x4] sm:$0xf]
  %v445 = vld [vmem:[%s442 + $0x8] sm:$0xf]
  %v446 = vld [vmem:[%s442 + $0xc] sm:$0xf]
  %v447 = vld [vmem:[%s442 + $0x10] sm:$0xf]
  %v448 = vld [vmem:[%s442 + $0x14] sm:$0xf]
  %v449 = vld [vmem:[%s442 + $0x18] sm:$0xf]
  %v450 = vld [vmem:[%s442 + $0x1c] sm:$0xf]
  %v451 = vld [vmem:[%s442 + $0x20] sm:$0xf]
  %v452 = vld [vmem:[%s442 + $0x24] sm:$0xf]
  %v453 = vld [vmem:[%s442 + $0x28] sm:$0xf]
  %v454 = vld [vmem:[%s442 + $0x2c] sm:$0xf]
  %v455 = vld [vmem:[%s442 + $0x30] sm:$0xf]
  %v456 = vld [vmem:[%s442 + $0x34] sm:$0xf]
  %v457 = vld [vmem:[%s442 + $0x38] sm:$0xf]
  %v458 = vld [vmem:[%s442 + $0x3c] sm:$0xf]
  %v459 = vld [vmem:[%s442 + $0x40] sm:$0xf]
  %v460 = vld [vmem:[%s442 + $0x44] sm:$0xf]
  %v461 = vld [vmem:[%s442 + $0x48] sm:$0xf]
  %v462 = vld [vmem:[%s442 + $0x4c] sm:$0xf]
  %v463 = vld [vmem:[%s442 + $0x50] sm:$0xf]
  %v464 = vld [vmem:[%s442 + $0x54] sm:$0xf]
  %v465 = vld [vmem:[%s442 + $0x58] sm:$0xf]
  %v466 = vld [vmem:[%s442 + $0x5c] sm:$0xf]
  %v467 = vld [vmem:[%s442 + $0x60] sm:$0xf]
  %v468 = vld [vmem:[%s442 + $0x64] sm:$0xf]
  %v469 = vld [vmem:[%s442 + $0x68] sm:$0xf]
  %v470 = vld [vmem:[%s442 + $0x6c] sm:$0xf]
  %v471 = vld [vmem:[%s442 + $0x70] sm:$0xf]
  %v472 = vld [vmem:[%s442 + $0x74] sm:$0xf]
  %v473 = vld [vmem:[%s442 + $0x78] sm:$0xf]
  %v474 = vld [vmem:[%s442 + $0x7c] sm:$0xf]
  %v475 = vld [vmem:[%s442 + $0x80] sm:$0xf]
  %v476 = vld [vmem:[%s442 + $0x84] sm:$0xf]
  %v477 = vld [vmem:[%s442 + $0x88] sm:$0xf]
  %v478 = vld [vmem:[%s442 + $0x8c] sm:$0xf]
  %v479 = vld [vmem:[%s442 + $0x90] sm:$0xf]
  %v480 = vld [vmem:[%s442 + $0x94] sm:$0xf]
  %v481 = vld [vmem:[%s442 + $0x98] sm:$0xf]
  %v482 = vld [vmem:[%s442 + $0x9c] sm:$0xf]
  %v483 = vld [vmem:[%s442 + $0xa0] sm:$0xf]
  %v484 = vld [vmem:[%s442 + $0xa4] sm:$0xf]
  %v485 = vld [vmem:[%s442 + $0xa8] sm:$0xf]
  %v486 = vld [vmem:[%s442 + $0xac] sm:$0xf]
  %v487 = vld [vmem:[%s442 + $0xb0] sm:$0xf]
  %v488 = vld [vmem:[%s442 + $0xb4] sm:$0xf]
  %v489 = vld [vmem:[%s442 + $0xb8] sm:$0xf]
  %v490 = vld [vmem:[%s442 + $0xbc] sm:$0xf]
  %v491 = vld [vmem:[%s442 + $0xc0] sm:$0xf]
  %v541 = vunpack.c.l.b16 %v443
  %v542 = vunpack.c.l.b16 %v444
  %v543 = vunpack.c.l.b16 %v445
  %v544 = vunpack.c.l.b16 %v446
  %v545 = vunpack.c.l.b16 %v447
  %v546 = vunpack.c.l.b16 %v448
  %v547 = vunpack.c.l.b16 %v449
  %v548 = vunpack.c.l.b16 %v450
  %v549 = vunpack.c.l.b16 %v451
  %v550 = vunpack.c.l.b16 %v452
  %v551 = vunpack.c.l.b16 %v453
  %v552 = vunpack.c.l.b16 %v454
  %v553 = vunpack.c.l.b16 %v455
  %v554 = vunpack.c.l.b16 %v456
  %v555 = vunpack.c.l.b16 %v457
  %v556 = vunpack.c.l.b16 %v458
  %v557 = vunpack.c.l.b16 %v459
  %v558 = vunpack.c.l.b16 %v460
  %v559 = vunpack.c.l.b16 %v461
  %v560 = vunpack.c.l.b16 %v462
  %v561 = vunpack.c.l.b16 %v463
  %v562 = vunpack.c.l.b16 %v464
  %v563 = vunpack.c.l.b16 %v465
  %v564 = vunpack.c.l.b16 %v466
  %v565 = vunpack.c.l.b16 %v467
  %v566 = vunpack.c.l.b16 %v468
  %v567 = vunpack.c.l.b16 %v469
  %v568 = vunpack.c.l.b16 %v470
  %v569 = vunpack.c.l.b16 %v471
  %v570 = vunpack.c.l.b16 %v472
  %v571 = vunpack.c.l.b16 %v473
  %v572 = vunpack.c.l.b16 %v474
  %v573 = vunpack.c.l.b16 %v475
  %v574 = vunpack.c.l.b16 %v476
  %v575 = vunpack.c.l.b16 %v477
  %v576 = vunpack.c.l.b16 %v478
  %v577 = vunpack.c.l.b16 %v479
  %v578 = vunpack.c.l.b16 %v480
  %v579 = vunpack.c.l.b16 %v481
  %v580 = vunpack.c.l.b16 %v482
  %v581 = vunpack.c.l.b16 %v483
  %v582 = vunpack.c.l.b16 %v484
  %v583 = vunpack.c.l.b16 %v485
  %v584 = vunpack.c.l.b16 %v486
  %v585 = vunpack.c.l.b16 %v487
  %v586 = vunpack.c.l.b16 %v488
  %v587 = vunpack.c.l.b16 %v489
  %v588 = vunpack.c.l.b16 %v490
  %v589 = vunpack.c.l.b16 %v491
  %v590 = vpack.c.b16 %v542, %v541
  %v591 = vpack.c.b16 %v544, %v543
  %v592 = vpack.c.b16 %v546, %v545
  %v593 = vpack.c.b16 %v548, %v547
  %v594 = vpack.c.b16 %v550, %v549
  %v595 = vpack.c.b16 %v552, %v551
  %v596 = vpack.c.b16 %v554, %v553
  %v597 = vpack.c.b16 %v556, %v555
  %v598 = vpack.c.b16 %v558, %v557
  %v599 = vpack.c.b16 %v560, %v559
  %v600 = vpack.c.b16 %v562, %v561
  %v601 = vpack.c.b16 %v564, %v563
  %v602 = vpack.c.b16 %v566, %v565
  %v603 = vpack.c.b16 %v568, %v567
  %v604 = vpack.c.b16 %v570, %v569
  %v605 = vpack.c.b16 %v572, %v571
  %v606 = vpack.c.b16 %v574, %v573
  %v607 = vpack.c.b16 %v576, %v575
  %v608 = vpack.c.b16 %v578, %v577
  %v609 = vpack.c.b16 %v580, %v579
  %v610 = vpack.c.b16 %v582, %v581
  %v611 = vpack.c.b16 %v584, %v583
  %v612 = vpack.c.b16 %v586, %v585
  %v613 = vpack.c.b16 %v588, %v587
  %v614 = vpack.c.b16 %v589, %v589
  %v616 = vsel %vm226, %v590, 0
  %v619 = vsel %vm226, %v591, 0
  %v622 = vsel %vm226, %v592, 0
  %v625 = vsel %vm226, %v593, 0
  %v628 = vsel %vm226, %v594, 0
  %v631 = vsel %vm226, %v595, 0
  %v634 = vsel %vm226, %v596, 0
  %v637 = vsel %vm226, %v597, 0
  %v640 = vsel %vm226, %v598, 0
  %v643 = vsel %vm226, %v599, 0
  %v646 = vsel %vm226, %v600, 0
  %v649 = vsel %vm226, %v601, 0
  %v652 = vsel %vm226, %v602, 0
  %v655 = vsel %vm226, %v603, 0
  %v658 = vsel %vm226, %v604, 0
  %v661 = vsel %vm226, %v605, 0
  %v664 = vsel %vm226, %v606, 0
  %v667 = vsel %vm226, %v607, 0
  %v670 = vsel %vm226, %v608, 0
  %v673 = vsel %vm226, %v609, 0
  %v676 = vsel %vm226, %v610, 0
  %v679 = vsel %vm226, %v611, 0
  %v682 = vsel %vm226, %v612, 0
  %v685 = vsel %vm226, %v613, 0
  %v688 = vsel %vm226, %v614, 0
  %690 = vmatpush.bf16.msra.mxu0 0
  %691 = vmatpush.bf16.msra.mxu0 0
  %692 = vmatpush.bf16.msra.mxu0 0
  %693 = vmatpush.bf16.msra.mxu0 %v307
  %694 = vmatpush.bf16.msra.mxu0 %v220
  %695 = vmatpush.bf16.msra.mxu0 %v219
  %696 = vmatpush.bf16.msra.mxu0 %v218
  %697 = vmatpush.bf16.msra.mxu0 %v217
  %698 = vmatmul.bf16.gmra.mxu0 %v616
  %v699 = vpop.f32.mrf.mxu0
  %v700 = vadd.f32 0.0, %v699
  %v701 = vpop.f32.mrf.mxu0
  %v702 = vadd.f32 0.0, %v701
  %703 = vmatmul.bf16.gmra.mxu0 %v619
  %v704 = vpop.f32.mrf.mxu0
  %v705 = vadd.f32 0.0, %v704
  %v706 = vpop.f32.mrf.mxu0
  %v707 = vadd.f32 0.0, %v706
  %708 = vmatmul.bf16.gmra.mxu0 %v622
  %v709 = vpop.f32.mrf.mxu0
  %v710 = vadd.f32 0.0, %v709
  %v711 = vpop.f32.mrf.mxu0
  %v712 = vadd.f32 0.0, %v711
  %713 = vmatmul.bf16.gmra.mxu0 %v625
  %v714 = vpop.f32.mrf.mxu0
  %v715 = vadd.f32 0.0, %v714
  %v716 = vpop.f32.mrf.mxu0
  %v717 = vadd.f32 0.0, %v716
  %718 = vmatmul.bf16.gmra.mxu0 %v628
  %v719 = vpop.f32.mrf.mxu0
  %v720 = vadd.f32 0.0, %v719
  %v721 = vpop.f32.mrf.mxu0
  %v722 = vadd.f32 0.0, %v721
  %723 = vmatmul.bf16.gmra.mxu0 %v631
  %v724 = vpop.f32.mrf.mxu0
  %v725 = vadd.f32 0.0, %v724
  %v726 = vpop.f32.mrf.mxu0
  %v727 = vadd.f32 0.0, %v726
  %728 = vmatmul.bf16.gmra.mxu0 %v634
  %v729 = vpop.f32.mrf.mxu0
  %v730 = vadd.f32 0.0, %v729
  %v731 = vpop.f32.mrf.mxu0
  %v732 = vadd.f32 0.0, %v731
  %733 = vmatmul.bf16.gmra.mxu0 %v637
  %v734 = vpop.f32.mrf.mxu0
  %v735 = vadd.f32 0.0, %v734
  %v736 = vpop.f32.mrf.mxu0
  %v737 = vadd.f32 0.0, %v736
  %738 = vmatmul.bf16.gmra.mxu0 %v640
  %v739 = vpop.f32.mrf.mxu0
  %v740 = vadd.f32 0.0, %v739
  %v741 = vpop.f32.mrf.mxu0
  %v742 = vadd.f32 0.0, %v741
  %743 = vmatmul.bf16.gmra.mxu0 %v643
  %v744 = vpop.f32.mrf.mxu0
  %v745 = vadd.f32 0.0, %v744
  %v746 = vpop.f32.mrf.mxu0
  %v747 = vadd.f32 0.0, %v746
  %748 = vmatmul.bf16.gmra.mxu0 %v646
  %v749 = vpop.f32.mrf.mxu0
  %v750 = vadd.f32 0.0, %v749
  %v751 = vpop.f32.mrf.mxu0
  %v752 = vadd.f32 0.0, %v751
  %753 = vmatmul.bf16.gmra.mxu0 %v649
  %v754 = vpop.f32.mrf.mxu0
  %v755 = vadd.f32 0.0, %v754
  %v756 = vpop.f32.mrf.mxu0
  %v757 = vadd.f32 0.0, %v756
  %758 = vmatmul.bf16.gmra.mxu0 %v652
  %v759 = vpop.f32.mrf.mxu0
  %v760 = vadd.f32 0.0, %v759
  %v761 = vpop.f32.mrf.mxu0
  %v762 = vadd.f32 0.0, %v761
  %763 = vmatmul.bf16.gmra.mxu0 %v655
  %v764 = vpop.f32.mrf.mxu0
  %v765 = vadd.f32 0.0, %v764
  %v766 = vpop.f32.mrf.mxu0
  %v767 = vadd.f32 0.0, %v766
  %768 = vmatmul.bf16.gmra.mxu0 %v658
  %v769 = vpop.f32.mrf.mxu0
  %v770 = vadd.f32 0.0, %v769
  %v771 = vpop.f32.mrf.mxu0
  %v772 = vadd.f32 0.0, %v771
  %773 = vmatmul.bf16.gmra.mxu0 %v661
  %v774 = vpop.f32.mrf.mxu0
  %v775 = vadd.f32 0.0, %v774
  %v776 = vpop.f32.mrf.mxu0
  %v777 = vadd.f32 0.0, %v776
  %778 = vmatmul.bf16.gmra.mxu0 %v664
  %v779 = vpop.f32.mrf.mxu0
  %v780 = vadd.f32 0.0, %v779
  %v781 = vpop.f32.mrf.mxu0
  %v782 = vadd.f32 0.0, %v781
  %783 = vmatmul.bf16.gmra.mxu0 %v667
  %v784 = vpop.f32.mrf.mxu0
  %v785 = vadd.f32 0.0, %v784
  %v786 = vpop.f32.mrf.mxu0
  %v787 = vadd.f32 0.0, %v786
  %788 = vmatmul.bf16.gmra.mxu0 %v670
  %v789 = vpop.f32.mrf.mxu0
  %v790 = vadd.f32 0.0, %v789
  %v791 = vpop.f32.mrf.mxu0
  %v792 = vadd.f32 0.0, %v791
  %793 = vmatmul.bf16.gmra.mxu0 %v673
  %v794 = vpop.f32.mrf.mxu0
  %v795 = vadd.f32 0.0, %v794
  %v796 = vpop.f32.mrf.mxu0
  %v797 = vadd.f32 0.0, %v796
  %798 = vmatmul.bf16.gmra.mxu0 %v676
  %v799 = vpop.f32.mrf.mxu0
  %v800 = vadd.f32 0.0, %v799
  %v801 = vpop.f32.mrf.mxu0
  %v802 = vadd.f32 0.0, %v801
  %803 = vmatmul.bf16.gmra.mxu0 %v679
  %v804 = vpop.f32.mrf.mxu0
  %v805 = vadd.f32 0.0, %v804
  %v806 = vpop.f32.mrf.mxu0
  %v807 = vadd.f32 0.0, %v806
  %808 = vmatmul.bf16.gmra.mxu0 %v682
  %v809 = vpop.f32.mrf.mxu0
  %v810 = vadd.f32 0.0, %v809
  %v811 = vpop.f32.mrf.mxu0
  %v812 = vadd.f32 0.0, %v811
  %813 = vmatmul.bf16.gmra.mxu0 %v685
  %v814 = vpop.f32.mrf.mxu0
  %v815 = vadd.f32 0.0, %v814
  %v816 = vpop.f32.mrf.mxu0
  %v817 = vadd.f32 0.0, %v816
  %818 = vmatmul.bf16.gmra.mxu0 %v688
  %v819 = vpop.f32.mrf.mxu0
  %v820 = vadd.f32 0.0, %v819
  %v821 = vpop.f32.mrf.mxu0
  %822 = vdwg.mxu0
  %s823 = scalar_lea.vmem %s0, 392
  %v824 = vld [vmem:[%s823] sm:$0xf]
  %v825 = vld [vmem:[%s823 + $0x4] sm:$0xf]
  %v826 = vld [vmem:[%s823 + $0x8] sm:$0xf]
  %v827 = vld [vmem:[%s823 + $0xc] sm:$0xf]
  %v828 = vld [vmem:[%s823 + $0x10] sm:$0xf]
  %v829 = vld [vmem:[%s823 + $0x14] sm:$0xf]
  %v830 = vld [vmem:[%s823 + $0x18] sm:$0xf]
  %v831 = vld [vmem:[%s823 + $0x1c] sm:$0xf]
  %v832 = vld [vmem:[%s823 + $0x20] sm:$0xf]
  %v833 = vld [vmem:[%s823 + $0x24] sm:$0xf]
  %v834 = vld [vmem:[%s823 + $0x28] sm:$0xf]
  %v835 = vld [vmem:[%s823 + $0x2c] sm:$0xf]
  %v836 = vld [vmem:[%s823 + $0x30] sm:$0xf]
  %v837 = vld [vmem:[%s823 + $0x34] sm:$0xf]
  %v838 = vld [vmem:[%s823 + $0x38] sm:$0xf]
  %v839 = vld [vmem:[%s823 + $0x3c] sm:$0xf]
  %v840 = vld [vmem:[%s823 + $0x40] sm:$0xf]
  %v841 = vld [vmem:[%s823 + $0x44] sm:$0xf]
  %v842 = vld [vmem:[%s823 + $0x48] sm:$0xf]
  %v843 = vld [vmem:[%s823 + $0x4c] sm:$0xf]
  %v844 = vld [vmem:[%s823 + $0x50] sm:$0xf]
  %v845 = vld [vmem:[%s823 + $0x54] sm:$0xf]
  %v846 = vld [vmem:[%s823 + $0x58] sm:$0xf]
  %v847 = vld [vmem:[%s823 + $0x5c] sm:$0xf]
  %v848 = vld [vmem:[%s823 + $0x60] sm:$0xf]
  %v849 = vld [vmem:[%s823 + $0x64] sm:$0xf]
  %v850 = vld [vmem:[%s823 + $0x68] sm:$0xf]
  %v851 = vld [vmem:[%s823 + $0x6c] sm:$0xf]
  %v852 = vld [vmem:[%s823 + $0x70] sm:$0xf]
  %v853 = vld [vmem:[%s823 + $0x74] sm:$0xf]
  %v854 = vld [vmem:[%s823 + $0x78] sm:$0xf]
  %v855 = vld [vmem:[%s823 + $0x7c] sm:$0xf]
  %v856 = vld [vmem:[%s823 + $0x80] sm:$0xf]
  %v857 = vld [vmem:[%s823 + $0x84] sm:$0xf]
  %v858 = vld [vmem:[%s823 + $0x88] sm:$0xf]
  %v859 = vld [vmem:[%s823 + $0x8c] sm:$0xf]
  %v860 = vld [vmem:[%s823 + $0x90] sm:$0xf]
  %v861 = vld [vmem:[%s823 + $0x94] sm:$0xf]
  %v862 = vld [vmem:[%s823 + $0x98] sm:$0xf]
  %v863 = vld [vmem:[%s823 + $0x9c] sm:$0xf]
  %v864 = vld [vmem:[%s823 + $0xa0] sm:$0xf]
  %v865 = vld [vmem:[%s823 + $0xa4] sm:$0xf]
  %v866 = vld [vmem:[%s823 + $0xa8] sm:$0xf]
  %v867 = vld [vmem:[%s823 + $0xac] sm:$0xf]
  %v868 = vld [vmem:[%s823 + $0xb0] sm:$0xf]
  %v869 = vld [vmem:[%s823 + $0xb4] sm:$0xf]
  %v870 = vld [vmem:[%s823 + $0xb8] sm:$0xf]
  %v871 = vld [vmem:[%s823 + $0xbc] sm:$0xf]
  %v872 = vld [vmem:[%s823 + $0xc0] sm:$0xf]
  %v922 = vunpack.c.l.b16 %v824
  %v923 = vunpack.c.l.b16 %v825
  %v924 = vunpack.c.l.b16 %v826
  %v925 = vunpack.c.l.b16 %v827
  %v926 = vunpack.c.l.b16 %v828
  %v927 = vunpack.c.l.b16 %v829
  %v928 = vunpack.c.l.b16 %v830
  %v929 = vunpack.c.l.b16 %v831
  %v930 = vunpack.c.l.b16 %v832
  %v931 = vunpack.c.l.b16 %v833
  %v932 = vunpack.c.l.b16 %v834
  %v933 = vunpack.c.l.b16 %v835
  %v934 = vunpack.c.l.b16 %v836
  %v935 = vunpack.c.l.b16 %v837
  %v936 = vunpack.c.l.b16 %v838
  %v937 = vunpack.c.l.b16 %v839
  %v938 = vunpack.c.l.b16 %v840
  %v939 = vunpack.c.l.b16 %v841
  %v940 = vunpack.c.l.b16 %v842
  %v941 = vunpack.c.l.b16 %v843
  %v942 = vunpack.c.l.b16 %v844
  %v943 = vunpack.c.l.b16 %v845
  %v944 = vunpack.c.l.b16 %v846
  %v945 = vunpack.c.l.b16 %v847
  %v946 = vunpack.c.l.b16 %v848
  %v947 = vunpack.c.l.b16 %v849
  %v948 = vunpack.c.l.b16 %v850
  %v949 = vunpack.c.l.b16 %v851
  %v950 = vunpack.c.l.b16 %v852
  %v951 = vunpack.c.l.b16 %v853
  %v952 = vunpack.c.l.b16 %v854
  %v953 = vunpack.c.l.b16 %v855
  %v954 = vunpack.c.l.b16 %v856
  %v955 = vunpack.c.l.b16 %v857
  %v956 = vunpack.c.l.b16 %v858
  %v957 = vunpack.c.l.b16 %v859
  %v958 = vunpack.c.l.b16 %v860
  %v959 = vunpack.c.l.b16 %v861
  %v960 = vunpack.c.l.b16 %v862
  %v961 = vunpack.c.l.b16 %v863
  %v962 = vunpack.c.l.b16 %v864
  %v963 = vunpack.c.l.b16 %v865
  %v964 = vunpack.c.l.b16 %v866
  %v965 = vunpack.c.l.b16 %v867
  %v966 = vunpack.c.l.b16 %v868
  %v967 = vunpack.c.l.b16 %v869
  %v968 = vunpack.c.l.b16 %v870
  %v969 = vunpack.c.l.b16 %v871
  %v970 = vunpack.c.l.b16 %v872
  %v971 = vpack.c.b16 %v923, %v922
  %v972 = vpack.c.b16 %v925, %v924
  %v973 = vpack.c.b16 %v927, %v926
  %v974 = vpack.c.b16 %v929, %v928
  %v975 = vpack.c.b16 %v931, %v930
  %v976 = vpack.c.b16 %v933, %v932
  %v977 = vpack.c.b16 %v935, %v934
  %v978 = vpack.c.b16 %v937, %v936
  %v979 = vpack.c.b16 %v939, %v938
  %v980 = vpack.c.b16 %v941, %v940
  %v981 = vpack.c.b16 %v943, %v942
  %v982 = vpack.c.b16 %v945, %v944
  %v983 = vpack.c.b16 %v947, %v946
  %v984 = vpack.c.b16 %v949, %v948
  %v985 = vpack.c.b16 %v951, %v950
  %v986 = vpack.c.b16 %v953, %v952
  %v987 = vpack.c.b16 %v955, %v954
  %v988 = vpack.c.b16 %v957, %v956
  %v989 = vpack.c.b16 %v959, %v958
  %v990 = vpack.c.b16 %v961, %v960
  %v991 = vpack.c.b16 %v963, %v962
  %v992 = vpack.c.b16 %v965, %v964
  %v993 = vpack.c.b16 %v967, %v966
  %v994 = vpack.c.b16 %v969, %v968
  %v995 = vpack.c.b16 %v970, %v970
  %v997 = vsel %vm226, %v971, 0
  %v1000 = vsel %vm226, %v972, 0
  %v1003 = vsel %vm226, %v973, 0
  %v1006 = vsel %vm226, %v974, 0
  %v1009 = vsel %vm226, %v975, 0
  %v1012 = vsel %vm226, %v976, 0
  %v1015 = vsel %vm226, %v977, 0
  %v1018 = vsel %vm226, %v978, 0
  %v1021 = vsel %vm226, %v979, 0
  %v1024 = vsel %vm226, %v980, 0
  %v1027 = vsel %vm226, %v981, 0
  %v1030 = vsel %vm226, %v982, 0
  %v1033 = vsel %vm226, %v983, 0
  %v1036 = vsel %vm226, %v984, 0
  %v1039 = vsel %vm226, %v985, 0
  %v1042 = vsel %vm226, %v986, 0
  %v1045 = vsel %vm226, %v987, 0
  %v1048 = vsel %vm226, %v988, 0
  %v1051 = vsel %vm226, %v989, 0
  %v1054 = vsel %vm226, %v990, 0
  %v1057 = vsel %vm226, %v991, 0
  %v1060 = vsel %vm226, %v992, 0
  %v1063 = vsel %vm226, %v993, 0
  %v1066 = vsel %vm226, %v994, 0
  %v1069 = vsel %vm226, %v995, 0
  %1071 = vmatpush.bf16.msra.mxu0 0
  %1072 = vmatpush.bf16.msra.mxu0 0
  %1073 = vmatpush.bf16.msra.mxu0 0
  %1074 = vmatpush.bf16.msra.mxu0 %v307
  %1075 = vmatpush.bf16.msra.mxu0 %v220
  %1076 = vmatpush.bf16.msra.mxu0 %v219
  %1077 = vmatpush.bf16.msra.mxu0 %v218
  %1078 = vmatpush.bf16.msra.mxu0 %v217
  %1079 = vmatmul.bf16.gmra.mxu0 %v997
  %v1080 = vpop.f32.mrf.mxu0
  %v1081 = vadd.f32 0.0, %v1080
  %v1082 = vpop.f32.mrf.mxu0
  %v1083 = vadd.f32 0.0, %v1082
  %1084 = vmatmul.bf16.gmra.mxu0 %v1000
  %v1085 = vpop.f32.mrf.mxu0
  %v1086 = vadd.f32 0.0, %v1085
  %v1087 = vpop.f32.mrf.mxu0
  %v1088 = vadd.f32 0.0, %v1087
  %1089 = vmatmul.bf16.gmra.mxu0 %v1003
  %v1090 = vpop.f32.mrf.mxu0
  %v1091 = vadd.f32 0.0, %v1090
  %v1092 = vpop.f32.mrf.mxu0
  %v1093 = vadd.f32 0.0, %v1092
  %1094 = vmatmul.bf16.gmra.mxu0 %v1006
  %v1095 = vpop.f32.mrf.mxu0
  %v1096 = vadd.f32 0.0, %v1095
  %v1097 = vpop.f32.mrf.mxu0
  %v1098 = vadd.f32 0.0, %v1097
  %1099 = vmatmul.bf16.gmra.mxu0 %v1009
  %v1100 = vpop.f32.mrf.mxu0
  %v1101 = vadd.f32 0.0, %v1100
  %v1102 = vpop.f32.mrf.mxu0
  %v1103 = vadd.f32 0.0, %v1102
  %1104 = vmatmul.bf16.gmra.mxu0 %v1012
  %v1105 = vpop.f32.mrf.mxu0
  %v1106 = vadd.f32 0.0, %v1105
  %v1107 = vpop.f32.mrf.mxu0
  %v1108 = vadd.f32 0.0, %v1107
  %1109 = vmatmul.bf16.gmra.mxu0 %v1015
  %v1110 = vpop.f32.mrf.mxu0
  %v1111 = vadd.f32 0.0, %v1110
  %v1112 = vpop.f32.mrf.mxu0
  %v1113 = vadd.f32 0.0, %v1112
  %1114 = vmatmul.bf16.gmra.mxu0 %v1018
  %v1115 = vpop.f32.mrf.mxu0
  %v1116 = vadd.f32 0.0, %v1115
  %v1117 = vpop.f32.mrf.mxu0
  %v1118 = vadd.f32 0.0, %v1117
  %1119 = vmatmul.bf16.gmra.mxu0 %v1021
  %v1120 = vpop.f32.mrf.mxu0
  %v1121 = vadd.f32 0.0, %v1120
  %v1122 = vpop.f32.mrf.mxu0
  %v1123 = vadd.f32 0.0, %v1122
  %1124 = vmatmul.bf16.gmra.mxu0 %v1024
  %v1125 = vpop.f32.mrf.mxu0
  %v1126 = vadd.f32 0.0, %v1125
  %v1127 = vpop.f32.mrf.mxu0
  %v1128 = vadd.f32 0.0, %v1127
  %1129 = vmatmul.bf16.gmra.mxu0 %v1027
  %v1130 = vpop.f32.mrf.mxu0
  %v1131 = vadd.f32 0.0, %v1130
  %v1132 = vpop.f32.mrf.mxu0
  %v1133 = vadd.f32 0.0, %v1132
  %1134 = vmatmul.bf16.gmra.mxu0 %v1030
  %v1135 = vpop.f32.mrf.mxu0
  %v1136 = vadd.f32 0.0, %v1135
  %v1137 = vpop.f32.mrf.mxu0
  %v1138 = vadd.f32 0.0, %v1137
  %1139 = vmatmul.bf16.gmra.mxu0 %v1033
  %v1140 = vpop.f32.mrf.mxu0
  %v1141 = vadd.f32 0.0, %v1140
  %v1142 = vpop.f32.mrf.mxu0
  %v1143 = vadd.f32 0.0, %v1142
  %1144 = vmatmul.bf16.gmra.mxu0 %v1036
  %v1145 = vpop.f32.mrf.mxu0
  %v1146 = vadd.f32 0.0, %v1145
  %v1147 = vpop.f32.mrf.mxu0
  %v1148 = vadd.f32 0.0, %v1147
  %1149 = vmatmul.bf16.gmra.mxu0 %v1039
  %v1150 = vpop.f32.mrf.mxu0
  %v1151 = vadd.f32 0.0, %v1150
  %v1152 = vpop.f32.mrf.mxu0
  %v1153 = vadd.f32 0.0, %v1152
  %1154 = vmatmul.bf16.gmra.mxu0 %v1042
  %v1155 = vpop.f32.mrf.mxu0
  %v1156 = vadd.f32 0.0, %v1155
  %v1157 = vpop.f32.mrf.mxu0
  %v1158 = vadd.f32 0.0, %v1157
  %1159 = vmatmul.bf16.gmra.mxu0 %v1045
  %v1160 = vpop.f32.mrf.mxu0
  %v1161 = vadd.f32 0.0, %v1160
  %v1162 = vpop.f32.mrf.mxu0
  %v1163 = vadd.f32 0.0, %v1162
  %1164 = vmatmul.bf16.gmra.mxu0 %v1048
  %v1165 = vpop.f32.mrf.mxu0
  %v1166 = vadd.f32 0.0, %v1165
  %v1167 = vpop.f32.mrf.mxu0
  %v1168 = vadd.f32 0.0, %v1167
  %1169 = vmatmul.bf16.gmra.mxu0 %v1051
  %v1170 = vpop.f32.mrf.mxu0
  %v1171 = vadd.f32 0.0, %v1170
  %v1172 = vpop.f32.mrf.mxu0
  %v1173 = vadd.f32 0.0, %v1172
  %1174 = vmatmul.bf16.gmra.mxu0 %v1054
  %v1175 = vpop.f32.mrf.mxu0
  %v1176 = vadd.f32 0.0, %v1175
  %v1177 = vpop.f32.mrf.mxu0
  %v1178 = vadd.f32 0.0, %v1177
  %1179 = vmatmul.bf16.gmra.mxu0 %v1057
  %v1180 = vpop.f32.mrf.mxu0
  %v1181 = vadd.f32 0.0, %v1180
  %v1182 = vpop.f32.mrf.mxu0
  %v1183 = vadd.f32 0.0, %v1182
  %1184 = vmatmul.bf16.gmra.mxu0 %v1060
  %v1185 = vpop.f32.mrf.mxu0
  %v1186 = vadd.f32 0.0, %v1185
  %v1187 = vpop.f32.mrf.mxu0
  %v1188 = vadd.f32 0.0, %v1187
  %1189 = vmatmul.bf16.gmra.mxu0 %v1063
  %v1190 = vpop.f32.mrf.mxu0
  %v1191 = vadd.f32 0.0, %v1190
  %v1192 = vpop.f32.mrf.mxu0
  %v1193 = vadd.f32 0.0, %v1192
  %1194 = vmatmul.bf16.gmra.mxu0 %v1066
  %v1195 = vpop.f32.mrf.mxu0
  %v1196 = vadd.f32 0.0, %v1195
  %v1197 = vpop.f32.mrf.mxu0
  %v1198 = vadd.f32 0.0, %v1197
  %1199 = vmatmul.bf16.gmra.mxu0 %v1069
  %v1200 = vpop.f32.mrf.mxu0
  %v1201 = vadd.f32 0.0, %v1200
  %v1202 = vpop.f32.mrf.mxu0
  %1203 = vdwg.mxu0
  %s1204 = scalar_lea.vmem %s0, 588
  %v1205 = vld [vmem:[%s1204] sm:$0xf]
  %v1206 = vld [vmem:[%s1204 + $0x4] sm:$0xf]
  %v1207 = vld [vmem:[%s1204 + $0x8] sm:$0xf]
  %v1208 = vld [vmem:[%s1204 + $0xc] sm:$0xf]
  %v1209 = vld [vmem:[%s1204 + $0x10] sm:$0xf]
  %v1210 = vld [vmem:[%s1204 + $0x14] sm:$0xf]
  %v1211 = vld [vmem:[%s1204 + $0x18] sm:$0xf]
  %v1212 = vld [vmem:[%s1204 + $0x1c] sm:$0xf]
  %v1213 = vld [vmem:[%s1204 + $0x20] sm:$0xf]
  %v1214 = vld [vmem:[%s1204 + $0x24] sm:$0xf]
  %v1215 = vld [vmem:[%s1204 + $0x28] sm:$0xf]
  %v1216 = vld [vmem:[%s1204 + $0x2c] sm:$0xf]
  %v1217 = vld [vmem:[%s1204 + $0x30] sm:$0xf]
  %v1218 = vld [vmem:[%s1204 + $0x34] sm:$0xf]
  %v1219 = vld [vmem:[%s1204 + $0x38] sm:$0xf]
  %v1220 = vld [vmem:[%s1204 + $0x3c] sm:$0xf]
  %v1221 = vld [vmem:[%s1204 + $0x40] sm:$0xf]
  %v1222 = vld [vmem:[%s1204 + $0x44] sm:$0xf]
  %v1223 = vld [vmem:[%s1204 + $0x48] sm:$0xf]
  %v1224 = vld [vmem:[%s1204 + $0x4c] sm:$0xf]
  %v1225 = vld [vmem:[%s1204 + $0x50] sm:$0xf]
  %v1226 = vld [vmem:[%s1204 + $0x54] sm:$0xf]
  %v1227 = vld [vmem:[%s1204 + $0x58] sm:$0xf]
  %v1228 = vld [vmem:[%s1204 + $0x5c] sm:$0xf]
  %v1229 = vld [vmem:[%s1204 + $0x60] sm:$0xf]
  %v1230 = vld [vmem:[%s1204 + $0x64] sm:$0xf]
  %v1231 = vld [vmem:[%s1204 + $0x68] sm:$0xf]
  %v1232 = vld [vmem:[%s1204 + $0x6c] sm:$0xf]
  %v1233 = vld [vmem:[%s1204 + $0x70] sm:$0xf]
  %v1234 = vld [vmem:[%s1204 + $0x74] sm:$0xf]
  %v1235 = vld [vmem:[%s1204 + $0x78] sm:$0xf]
  %v1236 = vld [vmem:[%s1204 + $0x7c] sm:$0xf]
  %v1237 = vld [vmem:[%s1204 + $0x80] sm:$0xf]
  %v1238 = vld [vmem:[%s1204 + $0x84] sm:$0xf]
  %v1239 = vld [vmem:[%s1204 + $0x88] sm:$0xf]
  %v1240 = vld [vmem:[%s1204 + $0x8c] sm:$0xf]
  %v1241 = vld [vmem:[%s1204 + $0x90] sm:$0xf]
  %v1242 = vld [vmem:[%s1204 + $0x94] sm:$0xf]
  %v1243 = vld [vmem:[%s1204 + $0x98] sm:$0xf]
  %v1244 = vld [vmem:[%s1204 + $0x9c] sm:$0xf]
  %v1245 = vld [vmem:[%s1204 + $0xa0] sm:$0xf]
  %v1246 = vld [vmem:[%s1204 + $0xa4] sm:$0xf]
  %v1247 = vld [vmem:[%s1204 + $0xa8] sm:$0xf]
  %v1248 = vld [vmem:[%s1204 + $0xac] sm:$0xf]
  %v1249 = vld [vmem:[%s1204 + $0xb0] sm:$0xf]
  %v1250 = vld [vmem:[%s1204 + $0xb4] sm:$0xf]
  %v1251 = vld [vmem:[%s1204 + $0xb8] sm:$0xf]
  %v1252 = vld [vmem:[%s1204 + $0xbc] sm:$0xf]
  %v1253 = vld [vmem:[%s1204 + $0xc0] sm:$0xf]
  %v1303 = vunpack.c.l.b16 %v1205
  %v1304 = vunpack.c.l.b16 %v1206
  %v1305 = vunpack.c.l.b16 %v1207
  %v1306 = vunpack.c.l.b16 %v1208
  %v1307 = vunpack.c.l.b16 %v1209
  %v1308 = vunpack.c.l.b16 %v1210
  %v1309 = vunpack.c.l.b16 %v1211
  %v1310 = vunpack.c.l.b16 %v1212
  %v1311 = vunpack.c.l.b16 %v1213
  %v1312 = vunpack.c.l.b16 %v1214
  %v1313 = vunpack.c.l.b16 %v1215
  %v1314 = vunpack.c.l.b16 %v1216
  %v1315 = vunpack.c.l.b16 %v1217
  %v1316 = vunpack.c.l.b16 %v1218
  %v1317 = vunpack.c.l.b16 %v1219
  %v1318 = vunpack.c.l.b16 %v1220
  %v1319 = vunpack.c.l.b16 %v1221
  %v1320 = vunpack.c.l.b16 %v1222
  %v1321 = vunpack.c.l.b16 %v1223
  %v1322 = vunpack.c.l.b16 %v1224
  %v1323 = vunpack.c.l.b16 %v1225
  %v1324 = vunpack.c.l.b16 %v1226
  %v1325 = vunpack.c.l.b16 %v1227
  %v1326 = vunpack.c.l.b16 %v1228
  %v1327 = vunpack.c.l.b16 %v1229
  %v1328 = vunpack.c.l.b16 %v1230
  %v1329 = vunpack.c.l.b16 %v1231
  %v1330 = vunpack.c.l.b16 %v1232
  %v1331 = vunpack.c.l.b16 %v1233
  %v1332 = vunpack.c.l.b16 %v1234
  %v1333 = vunpack.c.l.b16 %v1235
  %v1334 = vunpack.c.l.b16 %v1236
  %v1335 = vunpack.c.l.b16 %v1237
  %v1336 = vunpack.c.l.b16 %v1238
  %v1337 = vunpack.c.l.b16 %v1239
  %v1338 = vunpack.c.l.b16 %v1240
  %v1339 = vunpack.c.l.b16 %v1241
  %v1340 = vunpack.c.l.b16 %v1242
  %v1341 = vunpack.c.l.b16 %v1243
  %v1342 = vunpack.c.l.b16 %v1244
  %v1343 = vunpack.c.l.b16 %v1245
  %v1344 = vunpack.c.l.b16 %v1246
  %v1345 = vunpack.c.l.b16 %v1247
  %v1346 = vunpack.c.l.b16 %v1248
  %v1347 = vunpack.c.l.b16 %v1249
  %v1348 = vunpack.c.l.b16 %v1250
  %v1349 = vunpack.c.l.b16 %v1251
  %v1350 = vunpack.c.l.b16 %v1252
  %v1351 = vunpack.c.l.b16 %v1253
  %v1352 = vpack.c.b16 %v1304, %v1303
  %v1353 = vpack.c.b16 %v1306, %v1305
  %v1354 = vpack.c.b16 %v1308, %v1307
  %v1355 = vpack.c.b16 %v1310, %v1309
  %v1356 = vpack.c.b16 %v1312, %v1311
  %v1357 = vpack.c.b16 %v1314, %v1313
  %v1358 = vpack.c.b16 %v1316, %v1315
  %v1359 = vpack.c.b16 %v1318, %v1317
  %v1360 = vpack.c.b16 %v1320, %v1319
  %v1361 = vpack.c.b16 %v1322, %v1321
  %v1362 = vpack.c.b16 %v1324, %v1323
  %v1363 = vpack.c.b16 %v1326, %v1325
  %v1364 = vpack.c.b16 %v1328, %v1327
  %v1365 = vpack.c.b16 %v1330, %v1329
  %v1366 = vpack.c.b16 %v1332, %v1331
  %v1367 = vpack.c.b16 %v1334, %v1333
  %v1368 = vpack.c.b16 %v1336, %v1335
  %v1369 = vpack.c.b16 %v1338, %v1337
  %v1370 = vpack.c.b16 %v1340, %v1339
  %v1371 = vpack.c.b16 %v1342, %v1341
  %v1372 = vpack.c.b16 %v1344, %v1343
  %v1373 = vpack.c.b16 %v1346, %v1345
  %v1374 = vpack.c.b16 %v1348, %v1347
  %v1375 = vpack.c.b16 %v1350, %v1349
  %v1376 = vpack.c.b16 %v1351, %v1351
  %v1378 = vsel %vm226, %v1352, 0
  %v1381 = vsel %vm226, %v1353, 0
  %v1384 = vsel %vm226, %v1354, 0
  %v1387 = vsel %vm226, %v1355, 0
  %v1390 = vsel %vm226, %v1356, 0
  %v1393 = vsel %vm226, %v1357, 0
  %v1396 = vsel %vm226, %v1358, 0
  %v1399 = vsel %vm226, %v1359, 0
  %v1402 = vsel %vm226, %v1360, 0
  %v1405 = vsel %vm226, %v1361, 0
  %v1408 = vsel %vm226, %v1362, 0
  %v1411 = vsel %vm226, %v1363, 0
  %v1414 = vsel %vm226, %v1364, 0
  %v1417 = vsel %vm226, %v1365, 0
  %v1420 = vsel %vm226, %v1366, 0
  %v1423 = vsel %vm226, %v1367, 0
  %v1426 = vsel %vm226, %v1368, 0
  %v1429 = vsel %vm226, %v1369, 0
  %v1432 = vsel %vm226, %v1370, 0
  %v1435 = vsel %vm226, %v1371, 0
  %v1438 = vsel %vm226, %v1372, 0
  %v1441 = vsel %vm226, %v1373, 0
  %v1444 = vsel %vm226, %v1374, 0
  %v1447 = vsel %vm226, %v1375, 0
  %v1450 = vsel %vm226, %v1376, 0
  %1452 = vmatpush.bf16.msra.mxu0 0
  %1453 = vmatpush.bf16.msra.mxu0 0
  %1454 = vmatpush.bf16.msra.mxu0 0
  %1455 = vmatpush.bf16.msra.mxu0 %v307
  %1456 = vmatpush.bf16.msra.mxu0 %v220
  %1457 = vmatpush.bf16.msra.mxu0 %v219
  %1458 = vmatpush.bf16.msra.mxu0 %v218
  %1459 = vmatpush.bf16.msra.mxu0 %v217
  %1460 = vmatmul.bf16.gmra.mxu0 %v1378
  %v1461 = vpop.f32.mrf.mxu0
  %v1462 = vadd.f32 0.0, %v1461
  %v1463 = vpop.f32.mrf.mxu0
  %v1464 = vadd.f32 0.0, %v1463
  %1465 = vmatmul.bf16.gmra.mxu0 %v1381
  %v1466 = vpop.f32.mrf.mxu0
  %v1467 = vadd.f32 0.0, %v1466
  %v1468 = vpop.f32.mrf.mxu0
  %v1469 = vadd.f32 0.0, %v1468
  %1470 = vmatmul.bf16.gmra.mxu0 %v1384
  %v1471 = vpop.f32.mrf.mxu0
  %v1472 = vadd.f32 0.0, %v1471
  %v1473 = vpop.f32.mrf.mxu0
  %v1474 = vadd.f32 0.0, %v1473
  %1475 = vmatmul.bf16.gmra.mxu0 %v1387
  %v1476 = vpop.f32.mrf.mxu0
  %v1477 = vadd.f32 0.0, %v1476
  %v1478 = vpop.f32.mrf.mxu0
  %v1479 = vadd.f32 0.0, %v1478
  %1480 = vmatmul.bf16.gmra.mxu0 %v1390
  %v1481 = vpop.f32.mrf.mxu0
  %v1482 = vadd.f32 0.0, %v1481
  %v1483 = vpop.f32.mrf.mxu0
  %v1484 = vadd.f32 0.0, %v1483
  %1485 = vmatmul.bf16.gmra.mxu0 %v1393
  %v1486 = vpop.f32.mrf.mxu0
  %v1487 = vadd.f32 0.0, %v1486
  %v1488 = vpop.f32.mrf.mxu0
  %v1489 = vadd.f32 0.0, %v1488
  %1490 = vmatmul.bf16.gmra.mxu0 %v1396
  %v1491 = vpop.f32.mrf.mxu0
  %v1492 = vadd.f32 0.0, %v1491
  %v1493 = vpop.f32.mrf.mxu0
  %v1494 = vadd.f32 0.0, %v1493
  %1495 = vmatmul.bf16.gmra.mxu0 %v1399
  %v1496 = vpop.f32.mrf.mxu0
  %v1497 = vadd.f32 0.0, %v1496
  %v1498 = vpop.f32.mrf.mxu0
  %v1499 = vadd.f32 0.0, %v1498
  %1500 = vmatmul.bf16.gmra.mxu0 %v1402
  %v1501 = vpop.f32.mrf.mxu0
  %v1502 = vadd.f32 0.0, %v1501
  %v1503 = vpop.f32.mrf.mxu0
  %v1504 = vadd.f32 0.0, %v1503
  %1505 = vmatmul.bf16.gmra.mxu0 %v1405
  %v1506 = vpop.f32.mrf.mxu0
  %v1507 = vadd.f32 0.0, %v1506
  %v1508 = vpop.f32.mrf.mxu0
  %v1509 = vadd.f32 0.0, %v1508
  %1510 = vmatmul.bf16.gmra.mxu0 %v1408
  %v1511 = vpop.f32.mrf.mxu0
  %v1512 = vadd.f32 0.0, %v1511
  %v1513 = vpop.f32.mrf.mxu0
  %v1514 = vadd.f32 0.0, %v1513
  %1515 = vmatmul.bf16.gmra.mxu0 %v1411
  %v1516 = vpop.f32.mrf.mxu0
  %v1517 = vadd.f32 0.0, %v1516
  %v1518 = vpop.f32.mrf.mxu0
  %v1519 = vadd.f32 0.0, %v1518
  %1520 = vmatmul.bf16.gmra.mxu0 %v1414
  %v1521 = vpop.f32.mrf.mxu0
  %v1522 = vadd.f32 0.0, %v1521
  %v1523 = vpop.f32.mrf.mxu0
  %v1524 = vadd.f32 0.0, %v1523
  %1525 = vmatmul.bf16.gmra.mxu0 %v1417
  %v1526 = vpop.f32.mrf.mxu0
  %v1527 = vadd.f32 0.0, %v1526
  %v1528 = vpop.f32.mrf.mxu0
  %v1529 = vadd.f32 0.0, %v1528
  %1530 = vmatmul.bf16.gmra.mxu0 %v1420
  %v1531 = vpop.f32.mrf.mxu0
  %v1532 = vadd.f32 0.0, %v1531
  %v1533 = vpop.f32.mrf.mxu0
  %v1534 = vadd.f32 0.0, %v1533
  %1535 = vmatmul.bf16.gmra.mxu0 %v1423
  %v1536 = vpop.f32.mrf.mxu0
  %v1537 = vadd.f32 0.0, %v1536
  %v1538 = vpop.f32.mrf.mxu0
  %v1539 = vadd.f32 0.0, %v1538
  %1540 = vmatmul.bf16.gmra.mxu0 %v1426
  %v1541 = vpop.f32.mrf.mxu0
  %v1542 = vadd.f32 0.0, %v1541
  %v1543 = vpop.f32.mrf.mxu0
  %v1544 = vadd.f32 0.0, %v1543
  %1545 = vmatmul.bf16.gmra.mxu0 %v1429
  %v1546 = vpop.f32.mrf.mxu0
  %v1547 = vadd.f32 0.0, %v1546
  %v1548 = vpop.f32.mrf.mxu0
  %v1549 = vadd.f32 0.0, %v1548
  %1550 = vmatmul.bf16.gmra.mxu0 %v1432
  %v1551 = vpop.f32.mrf.mxu0
  %v1552 = vadd.f32 0.0, %v1551
  %v1553 = vpop.f32.mrf.mxu0
  %v1554 = vadd.f32 0.0, %v1553
  %1555 = vmatmul.bf16.gmra.mxu0 %v1435
  %v1556 = vpop.f32.mrf.mxu0
  %v1557 = vadd.f32 0.0, %v1556
  %v1558 = vpop.f32.mrf.mxu0
  %v1559 = vadd.f32 0.0, %v1558
  %1560 = vmatmul.bf16.gmra.mxu0 %v1438
  %v1561 = vpop.f32.mrf.mxu0
  %v1562 = vadd.f32 0.0, %v1561
  %v1563 = vpop.f32.mrf.mxu0
  %v1564 = vadd.f32 0.0, %v1563
  %1565 = vmatmul.bf16.gmra.mxu0 %v1441
  %v1566 = vpop.f32.mrf.mxu0
  %v1567 = vadd.f32 0.0, %v1566
  %v1568 = vpop.f32.mrf.mxu0
  %v1569 = vadd.f32 0.0, %v1568
  %1570 = vmatmul.bf16.gmra.mxu0 %v1444
  %v1571 = vpop.f32.mrf.mxu0
  %v1572 = vadd.f32 0.0, %v1571
  %v1573 = vpop.f32.mrf.mxu0
  %v1574 = vadd.f32 0.0, %v1573
  %1575 = vmatmul.bf16.gmra.mxu0 %v1447
  %v1576 = vpop.f32.mrf.mxu0
  %v1577 = vadd.f32 0.0, %v1576
  %v1578 = vpop.f32.mrf.mxu0
  %v1579 = vadd.f32 0.0, %v1578
  %1580 = vmatmul.bf16.gmra.mxu0 %v1450
  %v1581 = vpop.f32.mrf.mxu0
  %v1582 = vadd.f32 0.0, %v1581
  %v1583 = vpop.f32.mrf.mxu0
  %1584 = vdwg.mxu0
  %v1585 = vmax.f32 %v319, %v700
  %v1586 = vmax.f32 %v321, %v702
  %v1587 = vmax.f32 %v324, %v705
  %v1588 = vmax.f32 %v326, %v707
  %v1589 = vmax.f32 %v329, %v710
  %v1590 = vmax.f32 %v331, %v712
  %v1591 = vmax.f32 %v334, %v715
  %v1592 = vmax.f32 %v336, %v717
  %v1593 = vmax.f32 %v339, %v720
  %v1594 = vmax.f32 %v341, %v722
  %v1595 = vmax.f32 %v344, %v725
  %v1596 = vmax.f32 %v346, %v727
  %v1597 = vmax.f32 %v349, %v730
  %v1598 = vmax.f32 %v351, %v732
  %v1599 = vmax.f32 %v354, %v735
  %v1600 = vmax.f32 %v356, %v737
  %v1601 = vmax.f32 %v359, %v740
  %v1602 = vmax.f32 %v361, %v742
  %v1603 = vmax.f32 %v364, %v745
  %v1604 = vmax.f32 %v366, %v747
  %v1605 = vmax.f32 %v369, %v750
  %v1606 = vmax.f32 %v371, %v752
  %v1607 = vmax.f32 %v374, %v755
  %v1608 = vmax.f32 %v376, %v757
  %v1609 = vmax.f32 %v379, %v760
  %v1610 = vmax.f32 %v381, %v762
  %v1611 = vmax.f32 %v384, %v765
  %v1612 = vmax.f32 %v386, %v767
  %v1613 = vmax.f32 %v389, %v770
  %v1614 = vmax.f32 %v391, %v772
  %v1615 = vmax.f32 %v394, %v775
  %v1616 = vmax.f32 %v396, %v777
  %v1617 = vmax.f32 %v399, %v780
  %v1618 = vmax.f32 %v401, %v782
  %v1619 = vmax.f32 %v404, %v785
  %v1620 = vmax.f32 %v406, %v787
  %v1621 = vmax.f32 %v409, %v790
  %v1622 = vmax.f32 %v411, %v792
  %v1623 = vmax.f32 %v414, %v795
  %v1624 = vmax.f32 %v416, %v797
  %v1625 = vmax.f32 %v419, %v800
  %v1626 = vmax.f32 %v421, %v802
  %v1627 = vmax.f32 %v424, %v805
  %v1628 = vmax.f32 %v426, %v807
  %v1629 = vmax.f32 %v429, %v810
  %v1630 = vmax.f32 %v431, %v812
  %v1631 = vmax.f32 %v434, %v815
  %v1632 = vmax.f32 %v436, %v817
  %v1633 = vmax.f32 %v439, %v820
  %v1634 = vmax.f32 %v1081, %v1462
  %v1635 = vmax.f32 %v1083, %v1464
  %v1636 = vmax.f32 %v1086, %v1467
  %v1637 = vmax.f32 %v1088, %v1469
  %v1638 = vmax.f32 %v1091, %v1472
  %v1639 = vmax.f32 %v1093, %v1474
  %v1640 = vmax.f32 %v1096, %v1477
  %v1641 = vmax.f32 %v1098, %v1479
  %v1642 = vmax.f32 %v1101, %v1482
  %v1643 = vmax.f32 %v1103, %v1484
  %v1644 = vmax.f32 %v1106, %v1487
  %v1645 = vmax.f32 %v1108, %v1489
  %v1646 = vmax.f32 %v1111, %v1492
  %v1647 = vmax.f32 %v1113, %v1494
  %v1648 = vmax.f32 %v1116, %v1497
  %v1649 = vmax.f32 %v1118, %v1499
  %v1650 = vmax.f32 %v1121, %v1502
  %v1651 = vmax.f32 %v1123, %v1504
  %v1652 = vmax.f32 %v1126, %v1507
  %v1653 = vmax.f32 %v1128, %v1509
  %v1654 = vmax.f32 %v1131, %v1512
  %v1655 = vmax.f32 %v1133, %v1514
  %v1656 = vmax.f32 %v1136, %v1517
  %v1657 = vmax.f32 %v1138, %v1519
  %v1658 = vmax.f32 %v1141, %v1522
  %v1659 = vmax.f32 %v1143, %v1524
  %v1660 = vmax.f32 %v1146, %v1527
  %v1661 = vmax.f32 %v1148, %v1529
  %v1662 = vmax.f32 %v1151, %v1532
  %v1663 = vmax.f32 %v1153, %v1534
  %v1664 = vmax.f32 %v1156, %v1537
  %v1665 = vmax.f32 %v1158, %v1539
  %v1666 = vmax.f32 %v1161, %v1542
  %v1667 = vmax.f32 %v1163, %v1544
  %v1668 = vmax.f32 %v1166, %v1547
  %v1669 = vmax.f32 %v1168, %v1549
  %v1670 = vmax.f32 %v1171, %v1552
  %v1671 = vmax.f32 %v1173, %v1554
  %v1672 = vmax.f32 %v1176, %v1557
  %v1673 = vmax.f32 %v1178, %v1559
  %v1674 = vmax.f32 %v1181, %v1562
  %v1675 = vmax.f32 %v1183, %v1564
  %v1676 = vmax.f32 %v1186, %v1567
  %v1677 = vmax.f32 %v1188, %v1569
  %v1678 = vmax.f32 %v1191, %v1572
  %v1679 = vmax.f32 %v1193, %v1574
  %v1680 = vmax.f32 %v1196, %v1577
  %v1681 = vmax.f32 %v1198, %v1579
  %v1682 = vmax.f32 %v1201, %v1582
  %v1683 = vmax.f32 %v1585, %v1634
  %v1684 = vmax.f32 %v1586, %v1635
  %v1685 = vmax.f32 %v1587, %v1636
  %v1686 = vmax.f32 %v1588, %v1637
  %v1687 = vmax.f32 %v1589, %v1638
  %v1688 = vmax.f32 %v1590, %v1639
  %v1689 = vmax.f32 %v1591, %v1640
  %v1690 = vmax.f32 %v1592, %v1641
  %v1691 = vmax.f32 %v1593, %v1642
  %v1692 = vmax.f32 %v1594, %v1643
  %v1693 = vmax.f32 %v1595, %v1644
  %v1694 = vmax.f32 %v1596, %v1645
  %v1695 = vmax.f32 %v1597, %v1646
  %v1696 = vmax.f32 %v1598, %v1647
  %v1697 = vmax.f32 %v1599, %v1648
  %v1698 = vmax.f32 %v1600, %v1649
  %v1699 = vmax.f32 %v1601, %v1650
  %v1700 = vmax.f32 %v1602, %v1651
  %v1701 = vmax.f32 %v1603, %v1652
  %v1702 = vmax.f32 %v1604, %v1653
  %v1703 = vmax.f32 %v1605, %v1654
  %v1704 = vmax.f32 %v1606, %v1655
  %v1705 = vmax.f32 %v1607, %v1656
  %v1706 = vmax.f32 %v1608, %v1657
  %v1707 = vmax.f32 %v1609, %v1658
  %v1708 = vmax.f32 %v1610, %v1659
  %v1709 = vmax.f32 %v1611, %v1660
  %v1710 = vmax.f32 %v1612, %v1661
  %v1711 = vmax.f32 %v1613, %v1662
  %v1712 = vmax.f32 %v1614, %v1663
  %v1713 = vmax.f32 %v1615, %v1664
  %v1714 = vmax.f32 %v1616, %v1665
  %v1715 = vmax.f32 %v1617, %v1666
  %v1716 = vmax.f32 %v1618, %v1667
  %v1717 = vmax.f32 %v1619, %v1668
  %v1718 = vmax.f32 %v1620, %v1669
  %v1719 = vmax.f32 %v1621, %v1670
  %v1720 = vmax.f32 %v1622, %v1671
  %v1721 = vmax.f32 %v1623, %v1672
  %v1722 = vmax.f32 %v1624, %v1673
  %v1723 = vmax.f32 %v1625, %v1674
  %v1724 = vmax.f32 %v1626, %v1675
  %v1725 = vmax.f32 %v1627, %v1676
  %v1726 = vmax.f32 %v1628, %v1677
  %v1727 = vmax.f32 %v1629, %v1678
  %v1728 = vmax.f32 %v1630, %v1679
  %v1729 = vmax.f32 %v1631, %v1680
  %v1730 = vmax.f32 %v1632, %v1681
  %v1731 = vmax.f32 %v1633, %v1682
  %v1732 = vld [vmem:[%s2] sm:$0x1]
  %v1734 = vperm.slane %v1732, 0
  %v1736 = vadd.f32 %v1683, %v1734
  %v1737 = vadd.f32 %v1684, %v1734
  %v1738 = vadd.f32 %v1685, %v1734
  %v1739 = vadd.f32 %v1686, %v1734
  %v1740 = vadd.f32 %v1687, %v1734
  %v1741 = vadd.f32 %v1688, %v1734
  %v1742 = vadd.f32 %v1689, %v1734
  %v1743 = vadd.f32 %v1690, %v1734
  %v1744 = vadd.f32 %v1691, %v1734
  %v1745 = vadd.f32 %v1692, %v1734
  %v1746 = vadd.f32 %v1693, %v1734
  %v1747 = vadd.f32 %v1694, %v1734
  %v1748 = vadd.f32 %v1695, %v1734
  %v1749 = vadd.f32 %v1696, %v1734
  %v1750 = vadd.f32 %v1697, %v1734
  %v1751 = vadd.f32 %v1698, %v1734
  %v1752 = vadd.f32 %v1699, %v1734
  %v1753 = vadd.f32 %v1700, %v1734
  %v1754 = vadd.f32 %v1701, %v1734
  %v1755 = vadd.f32 %v1702, %v1734
  %v1756 = vadd.f32 %v1703, %v1734
  %v1757 = vadd.f32 %v1704, %v1734
  %v1758 = vadd.f32 %v1705, %v1734
  %v1759 = vadd.f32 %v1706, %v1734
  %v1760 = vadd.f32 %v1707, %v1734
  %v1761 = vadd.f32 %v1708, %v1734
  %v1762 = vadd.f32 %v1709, %v1734
  %v1763 = vadd.f32 %v1710, %v1734
  %v1764 = vadd.f32 %v1711, %v1734
  %v1765 = vadd.f32 %v1712, %v1734
  %v1766 = vadd.f32 %v1713, %v1734
  %v1767 = vadd.f32 %v1714, %v1734
  %v1768 = vadd.f32 %v1715, %v1734
  %v1769 = vadd.f32 %v1716, %v1734
  %v1770 = vadd.f32 %v1717, %v1734
  %v1771 = vadd.f32 %v1718, %v1734
  %v1772 = vadd.f32 %v1719, %v1734
  %v1773 = vadd.f32 %v1720, %v1734
  %v1774 = vadd.f32 %v1721, %v1734
  %v1775 = vadd.f32 %v1722, %v1734
  %v1776 = vadd.f32 %v1723, %v1734
  %v1777 = vadd.f32 %v1724, %v1734
  %v1778 = vadd.f32 %v1725, %v1734
  %v1779 = vadd.f32 %v1726, %v1734
  %v1780 = vadd.f32 %v1727, %v1734
  %v1781 = vadd.f32 %v1728, %v1734
  %v1782 = vadd.f32 %v1729, %v1734
  %v1783 = vadd.f32 %v1730, %v1734
  %v1784 = vadd.f32 %v1731, %v1734
  %v1785 = vmax.f32 %v1736, 0.0
  %v1786 = vmax.f32 %v1737, 0.0
  %v1787 = vmax.f32 %v1738, 0.0
  %v1788 = vmax.f32 %v1739, 0.0
  %v1789 = vmax.f32 %v1740, 0.0
  %v1790 = vmax.f32 %v1741, 0.0
  %v1791 = vmax.f32 %v1742, 0.0
  %v1792 = vmax.f32 %v1743, 0.0
  %v1793 = vmax.f32 %v1744, 0.0
  %v1794 = vmax.f32 %v1745, 0.0
  %v1795 = vmax.f32 %v1746, 0.0
  %v1796 = vmax.f32 %v1747, 0.0
  %v1797 = vmax.f32 %v1748, 0.0
  %v1798 = vmax.f32 %v1749, 0.0
  %v1799 = vmax.f32 %v1750, 0.0
  %v1800 = vmax.f32 %v1751, 0.0
  %v1801 = vmax.f32 %v1752, 0.0
  %v1802 = vmax.f32 %v1753, 0.0
  %v1803 = vmax.f32 %v1754, 0.0
  %v1804 = vmax.f32 %v1755, 0.0
  %v1805 = vmax.f32 %v1756, 0.0
  %v1806 = vmax.f32 %v1757, 0.0
  %v1807 = vmax.f32 %v1758, 0.0
  %v1808 = vmax.f32 %v1759, 0.0
  %v1809 = vmax.f32 %v1760, 0.0
  %v1810 = vmax.f32 %v1761, 0.0
  %v1811 = vmax.f32 %v1762, 0.0
  %v1812 = vmax.f32 %v1763, 0.0
  %v1813 = vmax.f32 %v1764, 0.0
  %v1814 = vmax.f32 %v1765, 0.0
  %v1815 = vmax.f32 %v1766, 0.0
  %v1816 = vmax.f32 %v1767, 0.0
  %v1817 = vmax.f32 %v1768, 0.0
  %v1818 = vmax.f32 %v1769, 0.0
  %v1819 = vmax.f32 %v1770, 0.0
  %v1820 = vmax.f32 %v1771, 0.0
  %v1821 = vmax.f32 %v1772, 0.0
  %v1822 = vmax.f32 %v1773, 0.0
  %v1823 = vmax.f32 %v1774, 0.0
  %v1824 = vmax.f32 %v1775, 0.0
  %v1825 = vmax.f32 %v1776, 0.0
  %v1826 = vmax.f32 %v1777, 0.0
  %v1827 = vmax.f32 %v1778, 0.0
  %v1828 = vmax.f32 %v1779, 0.0
  %v1829 = vmax.f32 %v1780, 0.0
  %v1830 = vmax.f32 %v1781, 0.0
  %v1831 = vmax.f32 %v1782, 0.0
  %v1832 = vmax.f32 %v1783, 0.0
  %v1833 = vmax.f32 %v1784, 0.0
  %v1834 = vpack.c.bf16 %v1785, %v1785
  %v1835 = vpack.c.bf16 %v1786, %v1786
  %v1836 = vpack.c.bf16 %v1787, %v1787
  %v1837 = vpack.c.bf16 %v1788, %v1788
  %v1838 = vpack.c.bf16 %v1789, %v1789
  %v1839 = vpack.c.bf16 %v1790, %v1790
  %v1840 = vpack.c.bf16 %v1791, %v1791
  %v1841 = vpack.c.bf16 %v1792, %v1792
  %v1842 = vpack.c.bf16 %v1793, %v1793
  %v1843 = vpack.c.bf16 %v1794, %v1794
  %v1844 = vpack.c.bf16 %v1795, %v1795
  %v1845 = vpack.c.bf16 %v1796, %v1796
  %v1846 = vpack.c.bf16 %v1797, %v1797
  %v1847 = vpack.c.bf16 %v1798, %v1798
  %v1848 = vpack.c.bf16 %v1799, %v1799
  %v1849 = vpack.c.bf16 %v1800, %v1800
  %v1850 = vpack.c.bf16 %v1801, %v1801
  %v1851 = vpack.c.bf16 %v1802, %v1802
  %v1852 = vpack.c.bf16 %v1803, %v1803
  %v1853 = vpack.c.bf16 %v1804, %v1804
  %v1854 = vpack.c.bf16 %v1805, %v1805
  %v1855 = vpack.c.bf16 %v1806, %v1806
  %v1856 = vpack.c.bf16 %v1807, %v1807
  %v1857 = vpack.c.bf16 %v1808, %v1808
  %v1858 = vpack.c.bf16 %v1809, %v1809
  %v1859 = vpack.c.bf16 %v1810, %v1810
  %v1860 = vpack.c.bf16 %v1811, %v1811
  %v1861 = vpack.c.bf16 %v1812, %v1812
  %v1862 = vpack.c.bf16 %v1813, %v1813
  %v1863 = vpack.c.bf16 %v1814, %v1814
  %v1864 = vpack.c.bf16 %v1815, %v1815
  %v1865 = vpack.c.bf16 %v1816, %v1816
  %v1866 = vpack.c.bf16 %v1817, %v1817
  %v1867 = vpack.c.bf16 %v1818, %v1818
  %v1868 = vpack.c.bf16 %v1819, %v1819
  %v1869 = vpack.c.bf16 %v1820, %v1820
  %v1870 = vpack.c.bf16 %v1821, %v1821
  %v1871 = vpack.c.bf16 %v1822, %v1822
  %v1872 = vpack.c.bf16 %v1823, %v1823
  %v1873 = vpack.c.bf16 %v1824, %v1824
  %v1874 = vpack.c.bf16 %v1825, %v1825
  %v1875 = vpack.c.bf16 %v1826, %v1826
  %v1876 = vpack.c.bf16 %v1827, %v1827
  %v1877 = vpack.c.bf16 %v1828, %v1828
  %v1878 = vpack.c.bf16 %v1829, %v1829
  %v1879 = vpack.c.bf16 %v1830, %v1830
  %v1880 = vpack.c.bf16 %v1831, %v1831
  %v1881 = vpack.c.bf16 %v1832, %v1832
  %v1882 = vpack.c.bf16 %v1833, %v1833
  %vm1883 = vcmask 257024
  %1884 = vst.msk [vmem:[%s3] sm:$0xf] %vm1883, %v1834
  %1885 = vst.msk [vmem:[%s3 + $0x4] sm:$0xf] %vm1883, %v1835
  %1886 = vst.msk [vmem:[%s3 + $0x8] sm:$0xf] %vm1883, %v1836
  %1887 = vst.msk [vmem:[%s3 + $0xc] sm:$0xf] %vm1883, %v1837
  %1888 = vst.msk [vmem:[%s3 + $0x10] sm:$0xf] %vm1883, %v1838
  %1889 = vst.msk [vmem:[%s3 + $0x14] sm:$0xf] %vm1883, %v1839
  %1890 = vst.msk [vmem:[%s3 + $0x18] sm:$0xf] %vm1883, %v1840
  %1891 = vst.msk [vmem:[%s3 + $0x1c] sm:$0xf] %vm1883, %v1841
  %1892 = vst.msk [vmem:[%s3 + $0x20] sm:$0xf] %vm1883, %v1842
  %1893 = vst.msk [vmem:[%s3 + $0x24] sm:$0xf] %vm1883, %v1843
  %1894 = vst.msk [vmem:[%s3 + $0x28] sm:$0xf] %vm1883, %v1844
  %1895 = vst.msk [vmem:[%s3 + $0x2c] sm:$0xf] %vm1883, %v1845
  %1896 = vst.msk [vmem:[%s3 + $0x30] sm:$0xf] %vm1883, %v1846
  %1897 = vst.msk [vmem:[%s3 + $0x34] sm:$0xf] %vm1883, %v1847
  %1898 = vst.msk [vmem:[%s3 + $0x38] sm:$0xf] %vm1883, %v1848
  %1899 = vst.msk [vmem:[%s3 + $0x3c] sm:$0xf] %vm1883, %v1849
  %1900 = vst.msk [vmem:[%s3 + $0x40] sm:$0xf] %vm1883, %v1850
  %1901 = vst.msk [vmem:[%s3 + $0x44] sm:$0xf] %vm1883, %v1851
  %1902 = vst.msk [vmem:[%s3 + $0x48] sm:$0xf] %vm1883, %v1852
  %1903 = vst.msk [vmem:[%s3 + $0x4c] sm:$0xf] %vm1883, %v1853
  %1904 = vst.msk [vmem:[%s3 + $0x50] sm:$0xf] %vm1883, %v1854
  %1905 = vst.msk [vmem:[%s3 + $0x54] sm:$0xf] %vm1883, %v1855
  %1906 = vst.msk [vmem:[%s3 + $0x58] sm:$0xf] %vm1883, %v1856
  %1907 = vst.msk [vmem:[%s3 + $0x5c] sm:$0xf] %vm1883, %v1857
  %1908 = vst.msk [vmem:[%s3 + $0x60] sm:$0xf] %vm1883, %v1858
  %1909 = vst.msk [vmem:[%s3 + $0x64] sm:$0xf] %vm1883, %v1859
  %1910 = vst.msk [vmem:[%s3 + $0x68] sm:$0xf] %vm1883, %v1860
  %1911 = vst.msk [vmem:[%s3 + $0x6c] sm:$0xf] %vm1883, %v1861
  %1912 = vst.msk [vmem:[%s3 + $0x70] sm:$0xf] %vm1883, %v1862
  %1913 = vst.msk [vmem:[%s3 + $0x74] sm:$0xf] %vm1883, %v1863
  %1914 = vst.msk [vmem:[%s3 + $0x78] sm:$0xf] %vm1883, %v1864
  %1915 = vst.msk [vmem:[%s3 + $0x7c] sm:$0xf] %vm1883, %v1865
  %1916 = vst.msk [vmem:[%s3 + $0x80] sm:$0xf] %vm1883, %v1866
  %1917 = vst.msk [vmem:[%s3 + $0x84] sm:$0xf] %vm1883, %v1867
  %1918 = vst.msk [vmem:[%s3 + $0x88] sm:$0xf] %vm1883, %v1868
  %1919 = vst.msk [vmem:[%s3 + $0x8c] sm:$0xf] %vm1883, %v1869
  %1920 = vst.msk [vmem:[%s3 + $0x90] sm:$0xf] %vm1883, %v1870
  %1921 = vst.msk [vmem:[%s3 + $0x94] sm:$0xf] %vm1883, %v1871
  %1922 = vst.msk [vmem:[%s3 + $0x98] sm:$0xf] %vm1883, %v1872
  %1923 = vst.msk [vmem:[%s3 + $0x9c] sm:$0xf] %vm1883, %v1873
  %1924 = vst.msk [vmem:[%s3 + $0xa0] sm:$0xf] %vm1883, %v1874
  %1925 = vst.msk [vmem:[%s3 + $0xa4] sm:$0xf] %vm1883, %v1875
  %1926 = vst.msk [vmem:[%s3 + $0xa8] sm:$0xf] %vm1883, %v1876
  %1927 = vst.msk [vmem:[%s3 + $0xac] sm:$0xf] %vm1883, %v1877
  %1928 = vst.msk [vmem:[%s3 + $0xb0] sm:$0xf] %vm1883, %v1878
  %1929 = vst.msk [vmem:[%s3 + $0xb4] sm:$0xf] %vm1883, %v1879
  %1930 = vst.msk [vmem:[%s3 + $0xb8] sm:$0xf] %vm1883, %v1880
  %1931 = vst.msk [vmem:[%s3 + $0xbc] sm:$0xf] %vm1883, %v1881
  %1932 = vst.msk [vmem:[%s3 + $0xc0] sm:$0xf] %vm1883, %v1882
  // Predicated region
  $region14: #{svhn_forward.3} parent=0 // pred_check
    _
  $region15: #{svhn_forward.3} parent=0 // pred_check_branch
    %1934 = sbr.rel (0) target = $region17
  $region16: #{svhn_forward.3} parent=0 // pred_region
    _
  $region17: #{svhn_forward.3} parent=0 // pred_fallthru
    _
  // Predicated region
  $region18: #{svhn_forward.3} parent=0 // pred_check
    _
  $region19: #{svhn_forward.3} parent=0 // pred_check_branch
    %1936 = sbr.rel (0) target = $region21
  $region20: #{svhn_forward.3} parent=0 // pred_region
    _
  $region21: #{svhn_forward.3} parent=0 // pred_fallthru
    _

// kernel: svhn_forward.4
$region0: #{svhn_forward.4}
  #allocation0 [shape = 'u32[]', space=smem, size = 0x4, offset = 0x4, fixed_abs, tag = 'smem constant byte address 0x4 - core index']
  #allocation1 [shape = 'u32[72,128]{1,0:T(1,128)}', space=vmem, size = 0x9000, scoped, tag = 'internal scratch']
  %s0 = inlined_call_operand.vmem [shape: bf16[4,50,800], index: 0, kind: input, shape index: {}]
  %s1 = inlined_call_operand.vmem [shape: bf16[800,48], index: 1, kind: input, shape index: {}]
  %s2 = inlined_call_operand.vmem [shape: f32[1,48], index: 2, kind: input, shape index: {}]
  %s3 = inlined_call_operand.vmem [shape: bf16[50,48], index: 3, kind: output, shape index: {}]
  %s4 = sld [smem:[#allocation0]]
  $region22: #{svhn_forward.4} parent=0
    _
  %s6 = ssub.s32 1, %s4
  %s7 = scalar_select 0, %s6, %s4
  // Predicated region
  $region2: #{svhn_forward.4} parent=0 // pred_check
    _
  $region3: #{svhn_forward.4} parent=0 // pred_check_branch
    %9 = sbr.rel (0) target = $region5
  $region4: #{svhn_forward.4} parent=0 // pred_region
    _
  $region5: #{svhn_forward.4} parent=0 // pred_fallthru
    _
  // Predicated region
  $region6: #{svhn_forward.4} parent=0 // pred_check
    _
  $region7: #{svhn_forward.4} parent=0 // pred_check_branch
    %11 = sbr.rel (0) target = $region9
  $region8: #{svhn_forward.4} parent=0 // pred_region
    _
  $region9: #{svhn_forward.4} parent=0 // pred_fallthru
    _
  // Predicated region
  $region10: #{svhn_forward.4} parent=0 // pred_check
    _
  $region11: #{svhn_forward.4} parent=0 // pred_check_branch
    %13 = sbr.rel (0) target = $region13
  $region12: #{svhn_forward.4} parent=0 // pred_region
    _
  $region13: #{svhn_forward.4} parent=0 // pred_fallthru
    _
  %v15 = vld [vmem:[%s1] sm:$0xf]
  %v16 = vld [vmem:[%s1 + $0x4] sm:$0xf]
  %v17 = vld [vmem:[%s1 + $0x8] sm:$0xf]
  %v18 = vld [vmem:[%s1 + $0xc] sm:$0xf]
  %v19 = vld [vmem:[%s1 + $0x10] sm:$0xf]
  %v20 = vld [vmem:[%s1 + $0x14] sm:$0xf]
  %v21 = vld [vmem:[%s1 + $0x18] sm:$0xf]
  %v22 = vld [vmem:[%s1 + $0x1c] sm:$0xf]
  %v23 = vld [vmem:[%s1 + $0x20] sm:$0xf]
  %v24 = vld [vmem:[%s1 + $0x24] sm:$0xf]
  %v25 = vld [vmem:[%s1 + $0x28] sm:$0xf]
  %v26 = vld [vmem:[%s1 + $0x2c] sm:$0xf]
  %v27 = vld [vmem:[%s1 + $0x30] sm:$0xf]
  %v28 = vld [vmem:[%s1 + $0x34] sm:$0xf]
  %v29 = vld [vmem:[%s1 + $0x38] sm:$0xf]
  %v30 = vld [vmem:[%s1 + $0x3c] sm:$0xf]
  %v31 = vld [vmem:[%s1 + $0x40] sm:$0xf]
  %v32 = vld [vmem:[%s1 + $0x44] sm:$0xf]
  %v33 = vld [vmem:[%s1 + $0x48] sm:$0xf]
  %v34 = vld [vmem:[%s1 + $0x4c] sm:$0xf]
  %v35 = vld [vmem:[%s1 + $0x50] sm:$0xf]
  %v36 = vld [vmem:[%s1 + $0x54] sm:$0xf]
  %v37 = vld [vmem:[%s1 + $0x58] sm:$0xf]
  %v38 = vld [vmem:[%s1 + $0x5c] sm:$0xf]
  %v39 = vld [vmem:[%s1 + $0x60] sm:$0xf]
  %v40 = vld [vmem:[%s1 + $0x64] sm:$0xf]
  %v41 = vld [vmem:[%s1 + $0x68] sm:$0xf]
  %v42 = vld [vmem:[%s1 + $0x6c] sm:$0xf]
  %v43 = vld [vmem:[%s1 + $0x70] sm:$0xf]
  %v44 = vld [vmem:[%s1 + $0x74] sm:$0xf]
  %v45 = vld [vmem:[%s1 + $0x78] sm:$0xf]
  %v46 = vld [vmem:[%s1 + $0x7c] sm:$0xf]
  %v47 = vld [vmem:[%s1 + $0x80] sm:$0xf]
  %v48 = vld [vmem:[%s1 + $0x84] sm:$0xf]
  %v49 = vld [vmem:[%s1 + $0x88] sm:$0xf]
  %v50 = vld [vmem:[%s1 + $0x8c] sm:$0xf]
  %v51 = vld [vmem:[%s1 + $0x90] sm:$0xf]
  %v52 = vld [vmem:[%s1 + $0x94] sm:$0xf]
  %v53 = vld [vmem:[%s1 + $0x98] sm:$0xf]
  %v54 = vld [vmem:[%s1 + $0x9c] sm:$0xf]
  %v55 = vld [vmem:[%s1 + $0xa0] sm:$0xf]
  %v56 = vld [vmem:[%s1 + $0xa4] sm:$0xf]
  %v57 = vld [vmem:[%s1 + $0xa8] sm:$0xf]
  %v58 = vld [vmem:[%s1 + $0xac] sm:$0xf]
  %v59 = vld [vmem:[%s1 + $0xb0] sm:$0xf]
  %v60 = vld [vmem:[%s1 + $0xb4] sm:$0xf]
  %v61 = vld [vmem:[%s1 + $0xb8] sm:$0xf]
  %v62 = vld [vmem:[%s1 + $0xbc] sm:$0xf]
  %v63 = vld [vmem:[%s1 + $0xc0] sm:$0xf]
  %v64 = vld [vmem:[%s1 + $0xc4] sm:$0xf]
  %v65 = vld [vmem:[%s1 + $0xc8] sm:$0xf]
  %v66 = vld [vmem:[%s1 + $0xcc] sm:$0xf]
  %v67 = vld [vmem:[%s1 + $0xd0] sm:$0xf]
  %v68 = vld [vmem:[%s1 + $0xd4] sm:$0xf]
  %v69 = vld [vmem:[%s1 + $0xd8] sm:$0xf]
  %v70 = vld [vmem:[%s1 + $0xdc] sm:$0xf]
  %v71 = vld [vmem:[%s1 + $0xe0] sm:$0xf]
  %v72 = vld [vmem:[%s1 + $0xe4] sm:$0xf]
  %v73 = vld [vmem:[%s1 + $0xe8] sm:$0xf]
  %v74 = vld [vmem:[%s1 + $0xec] sm:$0xf]
  %v75 = vld [vmem:[%s1 + $0xf0] sm:$0xf]
  %v76 = vld [vmem:[%s1 + $0xf4] sm:$0xf]
  %v77 = vld [vmem:[%s1 + $0xf8] sm:$0xf]
  %v78 = vld [vmem:[%s1 + $0xfc] sm:$0xf]
  %v79 = vld [vmem:[%s1 + $0x100] sm:$0xf]
  %v80 = vld [vmem:[%s1 + $0x104] sm:$0xf]
  %v81 = vld [vmem:[%s1 + $0x108] sm:$0xf]
  %v82 = vld [vmem:[%s1 + $0x10c] sm:$0xf]
  %v83 = vld [vmem:[%s1 + $0x110] sm:$0xf]
  %v84 = vld [vmem:[%s1 + $0x114] sm:$0xf]
  %v85 = vld [vmem:[%s1 + $0x118] sm:$0xf]
  %v86 = vld [vmem:[%s1 + $0x11c] sm:$0xf]
  %v87 = vld [vmem:[%s1 + $0x120] sm:$0xf]
  %v88 = vld [vmem:[%s1 + $0x124] sm:$0xf]
  %v89 = vld [vmem:[%s1 + $0x128] sm:$0xf]
  %v90 = vld [vmem:[%s1 + $0x12c] sm:$0xf]
  %v91 = vld [vmem:[%s1 + $0x130] sm:$0xf]
  %v92 = vld [vmem:[%s1 + $0x134] sm:$0xf]
  %v93 = vld [vmem:[%s1 + $0x138] sm:$0xf]
  %v94 = vld [vmem:[%s1 + $0x13c] sm:$0xf]
  %v95 = vld [vmem:[%s1 + $0x140] sm:$0xf]
  %v96 = vld [vmem:[%s1 + $0x144] sm:$0xf]
  %v97 = vld [vmem:[%s1 + $0x148] sm:$0xf]
  %v98 = vld [vmem:[%s1 + $0x14c] sm:$0xf]
  %v99 = vld [vmem:[%s1 + $0x150] sm:$0xf]
  %v100 = vld [vmem:[%s1 + $0x154] sm:$0xf]
  %v101 = vld [vmem:[%s1 + $0x158] sm:$0xf]
  %v102 = vld [vmem:[%s1 + $0x15c] sm:$0xf]
  %v103 = vld [vmem:[%s1 + $0x160] sm:$0xf]
  %v104 = vld [vmem:[%s1 + $0x164] sm:$0xf]
  %v105 = vld [vmem:[%s1 + $0x168] sm:$0xf]
  %v106 = vld [vmem:[%s1 + $0x16c] sm:$0xf]
  %v107 = vld [vmem:[%s1 + $0x170] sm:$0xf]
  %v108 = vld [vmem:[%s1 + $0x174] sm:$0xf]
  %v109 = vld [vmem:[%s1 + $0x178] sm:$0xf]
  %v110 = vld [vmem:[%s1 + $0x17c] sm:$0xf]
  %v111 = vld [vmem:[%s1 + $0x180] sm:$0xf]
  %v112 = vld [vmem:[%s1 + $0x184] sm:$0xf]
  %v113 = vld [vmem:[%s1 + $0x188] sm:$0xf]
  %v114 = vld [vmem:[%s1 + $0x18c] sm:$0xf]
  %v115 = vld [vmem:[%s0] sm:$0xff]
  %v116 = vld [vmem:[%s0 + $0x8] sm:$0xff]
  %v117 = vld [vmem:[%s0 + $0x10] sm:$0xff]
  %v118 = vld [vmem:[%s0 + $0x18] sm:$0xf]
  %v119 = vld [vmem:[%s0 + $0x1c] sm:$0xff]
  %v120 = vld [vmem:[%s0 + $0x24] sm:$0xff]
  %v121 = vld [vmem:[%s0 + $0x2c] sm:$0xff]
  %v122 = vld [vmem:[%s0 + $0x34] sm:$0xf]
  %v123 = vld [vmem:[%s0 + $0x38] sm:$0xff]
  %v124 = vld [vmem:[%s0 + $0x40] sm:$0xff]
  %v125 = vld [vmem:[%s0 + $0x48] sm:$0xff]
  %v126 = vld [vmem:[%s0 + $0x50] sm:$0xf]
  %v127 = vld [vmem:[%s0 + $0x54] sm:$0xff]
  %v128 = vld [vmem:[%s0 + $0x5c] sm:$0xff]
  %v129 = vld [vmem:[%s0 + $0x64] sm:$0xff]
  %v130 = vld [vmem:[%s0 + $0x6c] sm:$0xf]
  %v131 = vld [vmem:[%s0 + $0x70] sm:$0xff]
  %v132 = vld [vmem:[%s0 + $0x78] sm:$0xff]
  %v133 = vld [vmem:[%s0 + $0x80] sm:$0xff]
  %v134 = vld [vmem:[%s0 + $0x88] sm:$0xf]
  %v135 = vld [vmem:[%s0 + $0x8c] sm:$0xff]
  %v136 = vld [vmem:[%s0 + $0x94] sm:$0xff]
  %v137 = vld [vmem:[%s0 + $0x9c] sm:$0xff]
  %v138 = vld [vmem:[%s0 + $0xa4] sm:$0xf]
  %v139 = vld [vmem:[%s0 + $0xa8] sm:$0x11]
  %v140 = vld [vmem:[%s0 + $0xb0] sm:$0x11]
  %v141 = vld [vmem:[%s0 + $0xb8] sm:$0x11]
  %v142 = vld [vmem:[%s0 + $0xc0] sm:$0x1]
  %v171 = vunpack.c.l.b16 %v115
  %v172 = vunpack.c.h.b16 %v115
  %v173 = vunpack.c.l.b16 %v116
  %v174 = vunpack.c.h.b16 %v116
  %v175 = vunpack.c.l.b16 %v117
  %v176 = vunpack.c.h.b16 %v117
  %v177 = vunpack.c.l.b16 %v118
  %v178 = vunpack.c.l.b16 %v119
  %v179 = vunpack.c.h.b16 %v119
  %v180 = vunpack.c.l.b16 %v120
  %v181 = vunpack.c.h.b16 %v120
  %v182 = vunpack.c.l.b16 %v121
  %v183 = vunpack.c.h.b16 %v121
  %v184 = vunpack.c.l.b16 %v122
  %v185 = vunpack.c.l.b16 %v123
  %v186 = vunpack.c.h.b16 %v123
  %v187 = vunpack.c.l.b16 %v124
  %v188 = vunpack.c.h.b16 %v124
  %v189 = vunpack.c.l.b16 %v125
  %v190 = vunpack.c.h.b16 %v125
  %v191 = vunpack.c.l.b16 %v126
  %v192 = vunpack.c.l.b16 %v127
  %v193 = vunpack.c.h.b16 %v127
  %v194 = vunpack.c.l.b16 %v128
  %v195 = vunpack.c.h.b16 %v128
  %v196 = vunpack.c.l.b16 %v129
  %v197 = vunpack.c.h.b16 %v129
  %v198 = vunpack.c.l.b16 %v130
  %v199 = vunpack.c.l.b16 %v131
  %v200 = vunpack.c.h.b16 %v131
  %v201 = vunpack.c.l.b16 %v132
  %v202 = vunpack.c.h.b16 %v132
  %v203 = vunpack.c.l.b16 %v133
  %v204 = vunpack.c.h.b16 %v133
  %v205 = vunpack.c.l.b16 %v134
  %v206 = vunpack.c.l.b16 %v135
  %v207 = vunpack.c.h.b16 %v135
  %v208 = vunpack.c.l.b16 %v136
  %v209 = vunpack.c.h.b16 %v136
  %v210 = vunpack.c.l.b16 %v137
  %v211 = vunpack.c.h.b16 %v137
  %v212 = vunpack.c.l.b16 %v138
  %v213 = vunpack.c.l.b16 %v139
  %v214 = vunpack.c.h.b16 %v139
  %v215 = vunpack.c.l.b16 %v140
  %v216 = vunpack.c.h.b16 %v140
  %v217 = vunpack.c.l.b16 %v141
  %v218 = vunpack.c.h.b16 %v141
  %v219 = vunpack.c.l.b16 %v142
  %v220 = vpack.c.b16 %v178, %v171
  %v221 = vpack.c.b16 %v179, %v172
  %v222 = vpack.c.b16 %v180, %v173
  %v223 = vpack.c.b16 %v181, %v174
  %v224 = vpack.c.b16 %v182, %v175
  %v225 = vpack.c.b16 %v183, %v176
  %v226 = vpack.c.b16 %v184, %v177
  %v227 = vpack.c.b16 %v192, %v185
  %v228 = vpack.c.b16 %v193, %v186
  %v229 = vpack.c.b16 %v194, %v187
  %v230 = vpack.c.b16 %v195, %v188
  %v231 = vpack.c.b16 %v196, %v189
  %v232 = vpack.c.b16 %v197, %v190
  %v233 = vpack.c.b16 %v198, %v191
  %v234 = vpack.c.b16 %v206, %v199
  %v235 = vpack.c.b16 %v207, %v200
  %v236 = vpack.c.b16 %v208, %v201
  %v237 = vpack.c.b16 %v209, %v202
  %v238 = vpack.c.b16 %v210, %v203
  %v239 = vpack.c.b16 %v211, %v204
  %v240 = vpack.c.b16 %v212, %v205
  %v241 = vpack.c.b16 %v213, %v213
  %v242 = vpack.c.b16 %v214, %v214
  %v243 = vpack.c.b16 %v215, %v215
  %v244 = vpack.c.b16 %v216, %v216
  %v245 = vpack.c.b16 %v217, %v217
  %v246 = vpack.c.b16 %v218, %v218
  %v247 = vpack.c.b16 %v219, %v219
  %v372 = vunpack.c.l.b16 %v15
  %v373 = vunpack.c.l.b16 %v16
  %v374 = vunpack.c.l.b16 %v17
  %v375 = vunpack.c.l.b16 %v18
  %v376 = vunpack.c.l.b16 %v19
  %v377 = vunpack.c.l.b16 %v20
  %v378 = vunpack.c.l.b16 %v21
  %v379 = vunpack.c.l.b16 %v22
  %v380 = vunpack.c.l.b16 %v23
  %v381 = vunpack.c.l.b16 %v24
  %v382 = vunpack.c.l.b16 %v25
  %v383 = vunpack.c.l.b16 %v26
  %v384 = vunpack.c.l.b16 %v27
  %v385 = vunpack.c.l.b16 %v28
  %v386 = vunpack.c.l.b16 %v29
  %v387 = vunpack.c.l.b16 %v30
  %v388 = vunpack.c.l.b16 %v31
  %v389 = vunpack.c.l.b16 %v32
  %v390 = vunpack.c.l.b16 %v33
  %v391 = vunpack.c.l.b16 %v34
  %v392 = vunpack.c.l.b16 %v35
  %v393 = vunpack.c.l.b16 %v36
  %v394 = vunpack.c.l.b16 %v37
  %v395 = vunpack.c.l.b16 %v38
  %v396 = vunpack.c.l.b16 %v39
  %v397 = vunpack.c.l.b16 %v40
  %v398 = vunpack.c.l.b16 %v41
  %v399 = vunpack.c.l.b16 %v42
  %v400 = vunpack.c.l.b16 %v43
  %v401 = vunpack.c.l.b16 %v44
  %v402 = vunpack.c.l.b16 %v45
  %v403 = vunpack.c.l.b16 %v46
  %v404 = vunpack.c.l.b16 %v47
  %v405 = vunpack.c.l.b16 %v48
  %v406 = vunpack.c.l.b16 %v49
  %v407 = vunpack.c.l.b16 %v50
  %v408 = vunpack.c.l.b16 %v51
  %v409 = vunpack.c.l.b16 %v52
  %v410 = vunpack.c.l.b16 %v53
  %v411 = vunpack.c.l.b16 %v54
  %v412 = vunpack.c.l.b16 %v55
  %v413 = vunpack.c.l.b16 %v56
  %v414 = vunpack.c.l.b16 %v57
  %v415 = vunpack.c.l.b16 %v58
  %v416 = vunpack.c.l.b16 %v59
  %v417 = vunpack.c.l.b16 %v60
  %v418 = vunpack.c.l.b16 %v61
  %v419 = vunpack.c.l.b16 %v62
  %v420 = vunpack.c.l.b16 %v63
  %v421 = vunpack.c.l.b16 %v64
  %v422 = vunpack.c.l.b16 %v65
  %v423 = vunpack.c.l.b16 %v66
  %v424 = vunpack.c.l.b16 %v67
  %v425 = vunpack.c.l.b16 %v68
  %v426 = vunpack.c.l.b16 %v69
  %v427 = vunpack.c.l.b16 %v70
  %v428 = vunpack.c.l.b16 %v71
  %v429 = vunpack.c.l.b16 %v72
  %v430 = vunpack.c.l.b16 %v73
  %v431 = vunpack.c.l.b16 %v74
  %v432 = vunpack.c.l.b16 %v75
  %v433 = vunpack.c.l.b16 %v76
  %v434 = vunpack.c.l.b16 %v77
  %v435 = vunpack.c.l.b16 %v78
  %v436 = vunpack.c.l.b16 %v79
  %v437 = vunpack.c.l.b16 %v80
  %v438 = vunpack.c.l.b16 %v81
  %v439 = vunpack.c.l.b16 %v82
  %v440 = vunpack.c.l.b16 %v83
  %v441 = vunpack.c.l.b16 %v84
  %v442 = vunpack.c.l.b16 %v85
  %v443 = vunpack.c.l.b16 %v86
  %v444 = vunpack.c.l.b16 %v87
  %v445 = vunpack.c.l.b16 %v88
  %v446 = vunpack.c.l.b16 %v89
  %v447 = vunpack.c.l.b16 %v90
  %v448 = vunpack.c.l.b16 %v91
  %v449 = vunpack.c.l.b16 %v92
  %v450 = vunpack.c.l.b16 %v93
  %v451 = vunpack.c.l.b16 %v94
  %v452 = vunpack.c.l.b16 %v95
  %v453 = vunpack.c.l.b16 %v96
  %v454 = vunpack.c.l.b16 %v97
  %v455 = vunpack.c.l.b16 %v98
  %v456 = vunpack.c.l.b16 %v99
  %v457 = vunpack.c.l.b16 %v100
  %v458 = vunpack.c.l.b16 %v101
  %v459 = vunpack.c.l.b16 %v102
  %v460 = vunpack.c.l.b16 %v103
  %v461 = vunpack.c.l.b16 %v104
  %v462 = vunpack.c.l.b16 %v105
  %v463 = vunpack.c.l.b16 %v106
  %v464 = vunpack.c.l.b16 %v107
  %v465 = vunpack.c.l.b16 %v108
  %v466 = vunpack.c.l.b16 %v109
  %v467 = vunpack.c.l.b16 %v110
  %v468 = vunpack.c.l.b16 %v111
  %v469 = vunpack.c.l.b16 %v112
  %v470 = vunpack.c.l.b16 %v113
  %v471 = vunpack.c.l.b16 %v114
  %v472 = vpack.c.b16 %v373, %v372
  %v473 = vpack.c.b16 %v375, %v374
  %v474 = vpack.c.b16 %v377, %v376
  %v475 = vpack.c.b16 %v379, %v378
  %v476 = vpack.c.b16 %v381, %v380
  %v477 = vpack.c.b16 %v383, %v382
  %v478 = vpack.c.b16 %v385, %v384
  %v479 = vpack.c.b16 %v387, %v386
  %v480 = vpack.c.b16 %v389, %v388
  %v481 = vpack.c.b16 %v391, %v390
  %v482 = vpack.c.b16 %v393, %v392
  %v483 = vpack.c.b16 %v395, %v394
  %v484 = vpack.c.b16 %v397, %v396
  %v485 = vpack.c.b16 %v399, %v398
  %v486 = vpack.c.b16 %v401, %v400
  %v487 = vpack.c.b16 %v403, %v402
  %v488 = vpack.c.b16 %v405, %v404
  %v489 = vpack.c.b16 %v407, %v406
  %v490 = vpack.c.b16 %v409, %v408
  %v491 = vpack.c.b16 %v411, %v410
  %v492 = vpack.c.b16 %v413, %v412
  %v493 = vpack.c.b16 %v415, %v414
  %v494 = vpack.c.b16 %v417, %v416
  %v495 = vpack.c.b16 %v419, %v418
  %v496 = vpack.c.b16 %v421, %v420
  %v497 = vpack.c.b16 %v423, %v422
  %v498 = vpack.c.b16 %v425, %v424
  %v499 = vpack.c.b16 %v427, %v426
  %v500 = vpack.c.b16 %v429, %v428
  %v501 = vpack.c.b16 %v431, %v430
  %v502 = vpack.c.b16 %v433, %v432
  %v503 = vpack.c.b16 %v435, %v434
  %v504 = vpack.c.b16 %v437, %v436
  %v505 = vpack.c.b16 %v439, %v438
  %v506 = vpack.c.b16 %v441, %v440
  %v507 = vpack.c.b16 %v443, %v442
  %v508 = vpack.c.b16 %v445, %v444
  %v509 = vpack.c.b16 %v447, %v446
  %v510 = vpack.c.b16 %v449, %v448
  %v511 = vpack.c.b16 %v451, %v450
  %v512 = vpack.c.b16 %v453, %v452
  %v513 = vpack.c.b16 %v455, %v454
  %v514 = vpack.c.b16 %v457, %v456
  %v515 = vpack.c.b16 %v459, %v458
  %v516 = vpack.c.b16 %v461, %v460
  %v517 = vpack.c.b16 %v463, %v462
  %v518 = vpack.c.b16 %v465, %v464
  %v519 = vpack.c.b16 %v467, %v466
  %v520 = vpack.c.b16 %v469, %v468
  %v521 = vpack.c.b16 %v471, %v470
  %vm572 = vcmask 261120
  %v574 = vsel %vm572, %v226, 0
  %v577 = vsel %vm572, %v233, 0
  %v580 = vsel %vm572, %v240, 0
  %v583 = vsel %vm572, %v247, 0
  %585 = vmatpush.bf16.msra.mxu0 %v479
  %586 = vmatpush.bf16.msra.mxu0 %v478
  %587 = vmatpush.bf16.msra.mxu0 %v477
  %588 = vmatpush.bf16.msra.mxu0 %v476
  %589 = vmatpush.bf16.msra.mxu0 %v475
  %590 = vmatpush.bf16.msra.mxu0 %v474
  %591 = vmatpush.bf16.msra.mxu0 %v473
  %592 = vmatpush.bf16.msra.mxu0 %v472
  %593 = vmatmul.bf16.gmra.mxu0 %v220
  %v594 = vpop.f32.mrf.mxu0
  %v595 = vadd.f32 0.0, %v594
  %v596 = vpop.f32.mrf.mxu0
  %v597 = vadd.f32 0.0, %v596
  %598 = vmatmul.bf16.gmra.mxu0 %v227
  %v599 = vpop.f32.mrf.mxu0
  %v600 = vadd.f32 0.0, %v599
  %v601 = vpop.f32.mrf.mxu0
  %v602 = vadd.f32 0.0, %v601
  %603 = vmatmul.bf16.gmra.mxu0 %v234
  %v604 = vpop.f32.mrf.mxu0
  %v605 = vadd.f32 0.0, %v604
  %v606 = vpop.f32.mrf.mxu0
  %v607 = vadd.f32 0.0, %v606
  %608 = vmatmul.bf16.gmra.mxu0 %v241
  %v609 = vpop.f32.mrf.mxu0
  %v610 = vadd.f32 0.0, %v609
  %v611 = vpop.f32.mrf.mxu0
  %612 = vdwg.mxu0
  %613 = vmatpush.bf16.msra.mxu0 %v487
  %614 = vmatpush.bf16.msra.mxu0 %v486
  %615 = vmatpush.bf16.msra.mxu0 %v485
  %616 = vmatpush.bf16.msra.mxu0 %v484
  %617 = vmatpush.bf16.msra.mxu0 %v483
  %618 = vmatpush.bf16.msra.mxu0 %v482
  %619 = vmatpush.bf16.msra.mxu0 %v481
  %620 = vmatpush.bf16.msra.mxu0 %v480
  %621 = vmatmul.bf16.gmra.mxu0 %v221
  %v622 = vpop.f32.mrf.mxu0
  %v623 = vadd.f32 %v595, %v622
  %v624 = vpop.f32.mrf.mxu0
  %v625 = vadd.f32 %v597, %v624
  %626 = vmatmul.bf16.gmra.mxu0 %v228
  %v627 = vpop.f32.mrf.mxu0
  %v628 = vadd.f32 %v600, %v627
  %v629 = vpop.f32.mrf.mxu0
  %v630 = vadd.f32 %v602, %v629
  %631 = vmatmul.bf16.gmra.mxu0 %v235
  %v632 = vpop.f32.mrf.mxu0
  %v633 = vadd.f32 %v605, %v632
  %v634 = vpop.f32.mrf.mxu0
  %v635 = vadd.f32 %v607, %v634
  %636 = vmatmul.bf16.gmra.mxu0 %v242
  %v637 = vpop.f32.mrf.mxu0
  %v638 = vadd.f32 %v610, %v637
  %v639 = vpop.f32.mrf.mxu0
  %640 = vdwg.mxu0
  %641 = vmatpush.bf16.msra.mxu0 %v495
  %642 = vmatpush.bf16.msra.mxu0 %v494
  %643 = vmatpush.bf16.msra.mxu0 %v493
  %644 = vmatpush.bf16.msra.mxu0 %v492
  %645 = vmatpush.bf16.msra.mxu0 %v491
  %646 = vmatpush.bf16.msra.mxu0 %v490
  %647 = vmatpush.bf16.msra.mxu0 %v489
  %648 = vmatpush.bf16.msra.mxu0 %v488
  %649 = vmatmul.bf16.gmra.mxu0 %v222
  %v650 = vpop.f32.mrf.mxu0
  %v651 = vadd.f32 %v623, %v650
  %v652 = vpop.f32.mrf.mxu0
  %v653 = vadd.f32 %v625, %v652
  %654 = vmatmul.bf16.gmra.mxu0 %v229
  %v655 = vpop.f32.mrf.mxu0
  %v656 = vadd.f32 %v628, %v655
  %v657 = vpop.f32.mrf.mxu0
  %v658 = vadd.f32 %v630, %v657
  %659 = vmatmul.bf16.gmra.mxu0 %v236
  %v660 = vpop.f32.mrf.mxu0
  %v661 = vadd.f32 %v633, %v660
  %v662 = vpop.f32.mrf.mxu0
  %v663 = vadd.f32 %v635, %v662
  %664 = vmatmul.bf16.gmra.mxu0 %v243
  %v665 = vpop.f32.mrf.mxu0
  %v666 = vadd.f32 %v638, %v665
  %v667 = vpop.f32.mrf.mxu0
  %668 = vdwg.mxu0
  %669 = vmatpush.bf16.msra.mxu0 %v503
  %670 = vmatpush.bf16.msra.mxu0 %v502
  %671 = vmatpush.bf16.msra.mxu0 %v501
  %672 = vmatpush.bf16.msra.mxu0 %v500
  %673 = vmatpush.bf16.msra.mxu0 %v499
  %674 = vmatpush.bf16.msra.mxu0 %v498
  %675 = vmatpush.bf16.msra.mxu0 %v497
  %676 = vmatpush.bf16.msra.mxu0 %v496
  %677 = vmatmul.bf16.gmra.mxu0 %v223
  %v678 = vpop.f32.mrf.mxu0
  %v679 = vadd.f32 %v651, %v678
  %v680 = vpop.f32.mrf.mxu0
  %v681 = vadd.f32 %v653, %v680
  %682 = vmatmul.bf16.gmra.mxu0 %v230
  %v683 = vpop.f32.mrf.mxu0
  %v684 = vadd.f32 %v656, %v683
  %v685 = vpop.f32.mrf.mxu0
  %v686 = vadd.f32 %v658, %v685
  %687 = vmatmul.bf16.gmra.mxu0 %v237
  %v688 = vpop.f32.mrf.mxu0
  %v689 = vadd.f32 %v661, %v688
  %v690 = vpop.f32.mrf.mxu0
  %v691 = vadd.f32 %v663, %v690
  %692 = vmatmul.bf16.gmra.mxu0 %v244
  %v693 = vpop.f32.mrf.mxu0
  %v694 = vadd.f32 %v666, %v693
  %v695 = vpop.f32.mrf.mxu0
  %696 = vdwg.mxu0
  %697 = vmatpush.bf16.msra.mxu0 %v511
  %698 = vmatpush.bf16.msra.mxu0 %v510
  %699 = vmatpush.bf16.msra.mxu0 %v509
  %700 = vmatpush.bf16.msra.mxu0 %v508
  %701 = vmatpush.bf16.msra.mxu0 %v507
  %702 = vmatpush.bf16.msra.mxu0 %v506
  %703 = vmatpush.bf16.msra.mxu0 %v505
  %704 = vmatpush.bf16.msra.mxu0 %v504
  %705 = vmatmul.bf16.gmra.mxu0 %v224
  %v706 = vpop.f32.mrf.mxu0
  %v707 = vadd.f32 %v679, %v706
  %v708 = vpop.f32.mrf.mxu0
  %v709 = vadd.f32 %v681, %v708
  %710 = vmatmul.bf16.gmra.mxu0 %v231
  %v711 = vpop.f32.mrf.mxu0
  %v712 = vadd.f32 %v684, %v711
  %v713 = vpop.f32.mrf.mxu0
  %v714 = vadd.f32 %v686, %v713
  %715 = vmatmul.bf16.gmra.mxu0 %v238
  %v716 = vpop.f32.mrf.mxu0
  %v717 = vadd.f32 %v689, %v716
  %v718 = vpop.f32.mrf.mxu0
  %v719 = vadd.f32 %v691, %v718
  %720 = vmatmul.bf16.gmra.mxu0 %v245
  %v721 = vpop.f32.mrf.mxu0
  %v722 = vadd.f32 %v694, %v721
  %v723 = vpop.f32.mrf.mxu0
  %724 = vdwg.mxu0
  %725 = vmatpush.bf16.msra.mxu0 %v519
  %726 = vmatpush.bf16.msra.mxu0 %v518
  %727 = vmatpush.bf16.msra.mxu0 %v517
  %728 = vmatpush.bf16.msra.mxu0 %v516
  %729 = vmatpush.bf16.msra.mxu0 %v515
  %730 = vmatpush.bf16.msra.mxu0 %v514
  %731 = vmatpush.bf16.msra.mxu0 %v513
  %732 = vmatpush.bf16.msra.mxu0 %v512
  %733 = vmatmul.bf16.gmra.mxu0 %v225
  %v734 = vpop.f32.mrf.mxu0
  %v735 = vadd.f32 %v707, %v734
  %v736 = vpop.f32.mrf.mxu0
  %v737 = vadd.f32 %v709, %v736
  %738 = vmatmul.bf16.gmra.mxu0 %v232
  %v739 = vpop.f32.mrf.mxu0
  %v740 = vadd.f32 %v712, %v739
  %v741 = vpop.f32.mrf.mxu0
  %v742 = vadd.f32 %v714, %v741
  %743 = vmatmul.bf16.gmra.mxu0 %v239
  %v744 = vpop.f32.mrf.mxu0
  %v745 = vadd.f32 %v717, %v744
  %v746 = vpop.f32.mrf.mxu0
  %v747 = vadd.f32 %v719, %v746
  %748 = vmatmul.bf16.gmra.mxu0 %v246
  %v749 = vpop.f32.mrf.mxu0
  %v750 = vadd.f32 %v722, %v749
  %v751 = vpop.f32.mrf.mxu0
  %752 = vdwg.mxu0
  %753 = vmatpush.bf16.msra.mxu0 0
  %754 = vmatpush.bf16.msra.mxu0 0
  %755 = vmatpush.bf16.msra.mxu0 0
  %756 = vmatpush.bf16.msra.mxu0 0
  %757 = vmatpush.bf16.msra.mxu0 0
  %758 = vmatpush.bf16.msra.mxu0 0
  %759 = vmatpush.bf16.msra.mxu0 %v521
  %760 = vmatpush.bf16.msra.mxu0 %v520
  %761 = vmatmul.bf16.gmra.mxu0 %v574
  %v762 = vpop.f32.mrf.mxu0
  %v763 = vadd.f32 %v735, %v762
  %v764 = vpop.f32.mrf.mxu0
  %v765 = vadd.f32 %v737, %v764
  %766 = vmatmul.bf16.gmra.mxu0 %v577
  %v767 = vpop.f32.mrf.mxu0
  %v768 = vadd.f32 %v740, %v767
  %v769 = vpop.f32.mrf.mxu0
  %v770 = vadd.f32 %v742, %v769
  %771 = vmatmul.bf16.gmra.mxu0 %v580
  %v772 = vpop.f32.mrf.mxu0
  %v773 = vadd.f32 %v745, %v772
  %v774 = vpop.f32.mrf.mxu0
  %v775 = vadd.f32 %v747, %v774
  %776 = vmatmul.bf16.gmra.mxu0 %v583
  %v777 = vpop.f32.mrf.mxu0
  %v778 = vadd.f32 %v750, %v777
  %v779 = vpop.f32.mrf.mxu0
  %780 = vdwg.mxu0
  %s781 = scalar_lea.vmem %s0, 196
  %v782 = vld [vmem:[%s781] sm:$0xff]
  %v783 = vld [vmem:[%s781 + $0x8] sm:$0xff]
  %v784 = vld [vmem:[%s781 + $0x10] sm:$0xff]
  %v785 = vld [vmem:[%s781 + $0x18] sm:$0xf]
  %v786 = vld [vmem:[%s781 + $0x1c] sm:$0xff]
  %v787 = vld [vmem:[%s781 + $0x24] sm:$0xff]
  %v788 = vld [vmem:[%s781 + $0x2c] sm:$0xff]
  %v789 = vld [vmem:[%s781 + $0x34] sm:$0xf]
  %v790 = vld [vmem:[%s781 + $0x38] sm:$0xff]
  %v791 = vld [vmem:[%s781 + $0x40] sm:$0xff]
  %v792 = vld [vmem:[%s781 + $0x48] sm:$0xff]
  %v793 = vld [vmem:[%s781 + $0x50] sm:$0xf]
  %v794 = vld [vmem:[%s781 + $0x54] sm:$0xff]
  %v795 = vld [vmem:[%s781 + $0x5c] sm:$0xff]
  %v796 = vld [vmem:[%s781 + $0x64] sm:$0xff]
  %v797 = vld [vmem:[%s781 + $0x6c] sm:$0xf]
  %v798 = vld [vmem:[%s781 + $0x70] sm:$0xff]
  %v799 = vld [vmem:[%s781 + $0x78] sm:$0xff]
  %v800 = vld [vmem:[%s781 + $0x80] sm:$0xff]
  %v801 = vld [vmem:[%s781 + $0x88] sm:$0xf]
  %v802 = vld [vmem:[%s781 + $0x8c] sm:$0xff]
  %v803 = vld [vmem:[%s781 + $0x94] sm:$0xff]
  %v804 = vld [vmem:[%s781 + $0x9c] sm:$0xff]
  %v805 = vld [vmem:[%s781 + $0xa4] sm:$0xf]
  %v806 = vld [vmem:[%s781 + $0xa8] sm:$0x11]
  %v807 = vld [vmem:[%s781 + $0xb0] sm:$0x11]
  %v808 = vld [vmem:[%s781 + $0xb8] sm:$0x11]
  %v809 = vld [vmem:[%s781 + $0xc0] sm:$0x1]
  %v838 = vunpack.c.l.b16 %v782
  %v839 = vunpack.c.h.b16 %v782
  %v840 = vunpack.c.l.b16 %v783
  %v841 = vunpack.c.h.b16 %v783
  %v842 = vunpack.c.l.b16 %v784
  %v843 = vunpack.c.h.b16 %v784
  %v844 = vunpack.c.l.b16 %v785
  %v845 = vunpack.c.l.b16 %v786
  %v846 = vunpack.c.h.b16 %v786
  %v847 = vunpack.c.l.b16 %v787
  %v848 = vunpack.c.h.b16 %v787
  %v849 = vunpack.c.l.b16 %v788
  %v850 = vunpack.c.h.b16 %v788
  %v851 = vunpack.c.l.b16 %v789
  %v852 = vunpack.c.l.b16 %v790
  %v853 = vunpack.c.h.b16 %v790
  %v854 = vunpack.c.l.b16 %v791
  %v855 = vunpack.c.h.b16 %v791
  %v856 = vunpack.c.l.b16 %v792
  %v857 = vunpack.c.h.b16 %v792
  %v858 = vunpack.c.l.b16 %v793
  %v859 = vunpack.c.l.b16 %v794
  %v860 = vunpack.c.h.b16 %v794
  %v861 = vunpack.c.l.b16 %v795
  %v862 = vunpack.c.h.b16 %v795
  %v863 = vunpack.c.l.b16 %v796
  %v864 = vunpack.c.h.b16 %v796
  %v865 = vunpack.c.l.b16 %v797
  %v866 = vunpack.c.l.b16 %v798
  %v867 = vunpack.c.h.b16 %v798
  %v868 = vunpack.c.l.b16 %v799
  %v869 = vunpack.c.h.b16 %v799
  %v870 = vunpack.c.l.b16 %v800
  %v871 = vunpack.c.h.b16 %v800
  %v872 = vunpack.c.l.b16 %v801
  %v873 = vunpack.c.l.b16 %v802
  %v874 = vunpack.c.h.b16 %v802
  %v875 = vunpack.c.l.b16 %v803
  %v876 = vunpack.c.h.b16 %v803
  %v877 = vunpack.c.l.b16 %v804
  %v878 = vunpack.c.h.b16 %v804
  %v879 = vunpack.c.l.b16 %v805
  %v880 = vunpack.c.l.b16 %v806
  %v881 = vunpack.c.h.b16 %v806
  %v882 = vunpack.c.l.b16 %v807
  %v883 = vunpack.c.h.b16 %v807
  %v884 = vunpack.c.l.b16 %v808
  %v885 = vunpack.c.h.b16 %v808
  %v886 = vunpack.c.l.b16 %v809
  %v887 = vpack.c.b16 %v845, %v838
  %v888 = vpack.c.b16 %v846, %v839
  %v889 = vpack.c.b16 %v847, %v840
  %v890 = vpack.c.b16 %v848, %v841
  %v891 = vpack.c.b16 %v849, %v842
  %v892 = vpack.c.b16 %v850, %v843
  %v893 = vpack.c.b16 %v851, %v844
  %v894 = vpack.c.b16 %v859, %v852
  %v895 = vpack.c.b16 %v860, %v853
  %v896 = vpack.c.b16 %v861, %v854
  %v897 = vpack.c.b16 %v862, %v855
  %v898 = vpack.c.b16 %v863, %v856
  %v899 = vpack.c.b16 %v864, %v857
  %v900 = vpack.c.b16 %v865, %v858
  %v901 = vpack.c.b16 %v873, %v866
  %v902 = vpack.c.b16 %v874, %v867
  %v903 = vpack.c.b16 %v875, %v868
  %v904 = vpack.c.b16 %v876, %v869
  %v905 = vpack.c.b16 %v877, %v870
  %v906 = vpack.c.b16 %v878, %v871
  %v907 = vpack.c.b16 %v879, %v872
  %v908 = vpack.c.b16 %v880, %v880
  %v909 = vpack.c.b16 %v881, %v881
  %v910 = vpack.c.b16 %v882, %v882
  %v911 = vpack.c.b16 %v883, %v883
  %v912 = vpack.c.b16 %v884, %v884
  %v913 = vpack.c.b16 %v885, %v885
  %v914 = vpack.c.b16 %v886, %v886
  %v940 = vsel %vm572, %v893, 0
  %v943 = vsel %vm572, %v900, 0
  %v946 = vsel %vm572, %v907, 0
  %v949 = vsel %vm572, %v914, 0
  %951 = vmatpush.bf16.msra.mxu0 %v479
  %952 = vmatpush.bf16.msra.mxu0 %v478
  %953 = vmatpush.bf16.msra.mxu0 %v477
  %954 = vmatpush.bf16.msra.mxu0 %v476
  %955 = vmatpush.bf16.msra.mxu0 %v475
  %956 = vmatpush.bf16.msra.mxu0 %v474
  %957 = vmatpush.bf16.msra.mxu0 %v473
  %958 = vmatpush.bf16.msra.mxu0 %v472
  %959 = vmatmul.bf16.gmra.mxu0 %v887
  %v960 = vpop.f32.mrf.mxu0
  %v961 = vadd.f32 0.0, %v960
  %v962 = vpop.f32.mrf.mxu0
  %v963 = vadd.f32 0.0, %v962
  %964 = vmatmul.bf16.gmra.mxu0 %v894
  %v965 = vpop.f32.mrf.mxu0
  %v966 = vadd.f32 0.0, %v965
  %v967 = vpop.f32.mrf.mxu0
  %v968 = vadd.f32 0.0, %v967
  %969 = vmatmul.bf16.gmra.mxu0 %v901
  %v970 = vpop.f32.mrf.mxu0
  %v971 = vadd.f32 0.0, %v970
  %v972 = vpop.f32.mrf.mxu0
  %v973 = vadd.f32 0.0, %v972
  %974 = vmatmul.bf16.gmra.mxu0 %v908
  %v975 = vpop.f32.mrf.mxu0
  %v976 = vadd.f32 0.0, %v975
  %v977 = vpop.f32.mrf.mxu0
  %978 = vdwg.mxu0
  %979 = vmatpush.bf16.msra.mxu0 %v487
  %980 = vmatpush.bf16.msra.mxu0 %v486
  %981 = vmatpush.bf16.msra.mxu0 %v485
  %982 = vmatpush.bf16.msra.mxu0 %v484
  %983 = vmatpush.bf16.msra.mxu0 %v483
  %984 = vmatpush.bf16.msra.mxu0 %v482
  %985 = vmatpush.bf16.msra.mxu0 %v481
  %986 = vmatpush.bf16.msra.mxu0 %v480
  %987 = vmatmul.bf16.gmra.mxu0 %v888
  %v988 = vpop.f32.mrf.mxu0
  %v989 = vadd.f32 %v961, %v988
  %v990 = vpop.f32.mrf.mxu0
  %v991 = vadd.f32 %v963, %v990
  %992 = vmatmul.bf16.gmra.mxu0 %v895
  %v993 = vpop.f32.mrf.mxu0
  %v994 = vadd.f32 %v966, %v993
  %v995 = vpop.f32.mrf.mxu0
  %v996 = vadd.f32 %v968, %v995
  %997 = vmatmul.bf16.gmra.mxu0 %v902
  %v998 = vpop.f32.mrf.mxu0
  %v999 = vadd.f32 %v971, %v998
  %v1000 = vpop.f32.mrf.mxu0
  %v1001 = vadd.f32 %v973, %v1000
  %1002 = vmatmul.bf16.gmra.mxu0 %v909
  %v1003 = vpop.f32.mrf.mxu0
  %v1004 = vadd.f32 %v976, %v1003
  %v1005 = vpop.f32.mrf.mxu0
  %1006 = vdwg.mxu0
  %1007 = vmatpush.bf16.msra.mxu0 %v495
  %1008 = vmatpush.bf16.msra.mxu0 %v494
  %1009 = vmatpush.bf16.msra.mxu0 %v493
  %1010 = vmatpush.bf16.msra.mxu0 %v492
  %1011 = vmatpush.bf16.msra.mxu0 %v491
  %1012 = vmatpush.bf16.msra.mxu0 %v490
  %1013 = vmatpush.bf16.msra.mxu0 %v489
  %1014 = vmatpush.bf16.msra.mxu0 %v488
  %1015 = vmatmul.bf16.gmra.mxu0 %v889
  %v1016 = vpop.f32.mrf.mxu0
  %v1017 = vadd.f32 %v989, %v1016
  %v1018 = vpop.f32.mrf.mxu0
  %v1019 = vadd.f32 %v991, %v1018
  %1020 = vmatmul.bf16.gmra.mxu0 %v896
  %v1021 = vpop.f32.mrf.mxu0
  %v1022 = vadd.f32 %v994, %v1021
  %v1023 = vpop.f32.mrf.mxu0
  %v1024 = vadd.f32 %v996, %v1023
  %1025 = vmatmul.bf16.gmra.mxu0 %v903
  %v1026 = vpop.f32.mrf.mxu0
  %v1027 = vadd.f32 %v999, %v1026
  %v1028 = vpop.f32.mrf.mxu0
  %v1029 = vadd.f32 %v1001, %v1028
  %1030 = vmatmul.bf16.gmra.mxu0 %v910
  %v1031 = vpop.f32.mrf.mxu0
  %v1032 = vadd.f32 %v1004, %v1031
  %v1033 = vpop.f32.mrf.mxu0
  %1034 = vdwg.mxu0
  %1035 = vmatpush.bf16.msra.mxu0 %v503
  %1036 = vmatpush.bf16.msra.mxu0 %v502
  %1037 = vmatpush.bf16.msra.mxu0 %v501
  %1038 = vmatpush.bf16.msra.mxu0 %v500
  %1039 = vmatpush.bf16.msra.mxu0 %v499
  %1040 = vmatpush.bf16.msra.mxu0 %v498
  %1041 = vmatpush.bf16.msra.mxu0 %v497
  %1042 = vmatpush.bf16.msra.mxu0 %v496
  %1043 = vmatmul.bf16.gmra.mxu0 %v890
  %v1044 = vpop.f32.mrf.mxu0
  %v1045 = vadd.f32 %v1017, %v1044
  %v1046 = vpop.f32.mrf.mxu0
  %v1047 = vadd.f32 %v1019, %v1046
  %1048 = vmatmul.bf16.gmra.mxu0 %v897
  %v1049 = vpop.f32.mrf.mxu0
  %v1050 = vadd.f32 %v1022, %v1049
  %v1051 = vpop.f32.mrf.mxu0
  %v1052 = vadd.f32 %v1024, %v1051
  %1053 = vmatmul.bf16.gmra.mxu0 %v904
  %v1054 = vpop.f32.mrf.mxu0
  %v1055 = vadd.f32 %v1027, %v1054
  %v1056 = vpop.f32.mrf.mxu0
  %v1057 = vadd.f32 %v1029, %v1056
  %1058 = vmatmul.bf16.gmra.mxu0 %v911
  %v1059 = vpop.f32.mrf.mxu0
  %v1060 = vadd.f32 %v1032, %v1059
  %v1061 = vpop.f32.mrf.mxu0
  %1062 = vdwg.mxu0
  %1063 = vmatpush.bf16.msra.mxu0 %v511
  %1064 = vmatpush.bf16.msra.mxu0 %v510
  %1065 = vmatpush.bf16.msra.mxu0 %v509
  %1066 = vmatpush.bf16.msra.mxu0 %v508
  %1067 = vmatpush.bf16.msra.mxu0 %v507
  %1068 = vmatpush.bf16.msra.mxu0 %v506
  %1069 = vmatpush.bf16.msra.mxu0 %v505
  %1070 = vmatpush.bf16.msra.mxu0 %v504
  %1071 = vmatmul.bf16.gmra.mxu0 %v891
  %v1072 = vpop.f32.mrf.mxu0
  %v1073 = vadd.f32 %v1045, %v1072
  %v1074 = vpop.f32.mrf.mxu0
  %v1075 = vadd.f32 %v1047, %v1074
  %1076 = vmatmul.bf16.gmra.mxu0 %v898
  %v1077 = vpop.f32.mrf.mxu0
  %v1078 = vadd.f32 %v1050, %v1077
  %v1079 = vpop.f32.mrf.mxu0
  %v1080 = vadd.f32 %v1052, %v1079
  %1081 = vmatmul.bf16.gmra.mxu0 %v905
  %v1082 = vpop.f32.mrf.mxu0
  %v1083 = vadd.f32 %v1055, %v1082
  %v1084 = vpop.f32.mrf.mxu0
  %v1085 = vadd.f32 %v1057, %v1084
  %1086 = vmatmul.bf16.gmra.mxu0 %v912
  %v1087 = vpop.f32.mrf.mxu0
  %v1088 = vadd.f32 %v1060, %v1087
  %v1089 = vpop.f32.mrf.mxu0
  %1090 = vdwg.mxu0
  %1091 = vmatpush.bf16.msra.mxu0 %v519
  %1092 = vmatpush.bf16.msra.mxu0 %v518
  %1093 = vmatpush.bf16.msra.mxu0 %v517
  %1094 = vmatpush.bf16.msra.mxu0 %v516
  %1095 = vmatpush.bf16.msra.mxu0 %v515
  %1096 = vmatpush.bf16.msra.mxu0 %v514
  %1097 = vmatpush.bf16.msra.mxu0 %v513
  %1098 = vmatpush.bf16.msra.mxu0 %v512
  %1099 = vmatmul.bf16.gmra.mxu0 %v892
  %v1100 = vpop.f32.mrf.mxu0
  %v1101 = vadd.f32 %v1073, %v1100
  %v1102 = vpop.f32.mrf.mxu0
  %v1103 = vadd.f32 %v1075, %v1102
  %1104 = vmatmul.bf16.gmra.mxu0 %v899
  %v1105 = vpop.f32.mrf.mxu0
  %v1106 = vadd.f32 %v1078, %v1105
  %v1107 = vpop.f32.mrf.mxu0
  %v1108 = vadd.f32 %v1080, %v1107
  %1109 = vmatmul.bf16.gmra.mxu0 %v906
  %v1110 = vpop.f32.mrf.mxu0
  %v1111 = vadd.f32 %v1083, %v1110
  %v1112 = vpop.f32.mrf.mxu0
  %v1113 = vadd.f32 %v1085, %v1112
  %1114 = vmatmul.bf16.gmra.mxu0 %v913
  %v1115 = vpop.f32.mrf.mxu0
  %v1116 = vadd.f32 %v1088, %v1115
  %v1117 = vpop.f32.mrf.mxu0
  %1118 = vdwg.mxu0
  %1119 = vmatpush.bf16.msra.mxu0 0
  %1120 = vmatpush.bf16.msra.mxu0 0
  %1121 = vmatpush.bf16.msra.mxu0 0
  %1122 = vmatpush.bf16.msra.mxu0 0
  %1123 = vmatpush.bf16.msra.mxu0 0
  %1124 = vmatpush.bf16.msra.mxu0 0
  %1125 = vmatpush.bf16.msra.mxu0 %v521
  %1126 = vmatpush.bf16.msra.mxu0 %v520
  %1127 = vmatmul.bf16.gmra.mxu0 %v940
  %v1128 = vpop.f32.mrf.mxu0
  %v1129 = vadd.f32 %v1101, %v1128
  %v1130 = vpop.f32.mrf.mxu0
  %v1131 = vadd.f32 %v1103, %v1130
  %1132 = vmatmul.bf16.gmra.mxu0 %v943
  %v1133 = vpop.f32.mrf.mxu0
  %v1134 = vadd.f32 %v1106, %v1133
  %v1135 = vpop.f32.mrf.mxu0
  %v1136 = vadd.f32 %v1108, %v1135
  %1137 = vmatmul.bf16.gmra.mxu0 %v946
  %v1138 = vpop.f32.mrf.mxu0
  %v1139 = vadd.f32 %v1111, %v1138
  %v1140 = vpop.f32.mrf.mxu0
  %v1141 = vadd.f32 %v1113, %v1140
  %1142 = vmatmul.bf16.gmra.mxu0 %v949
  %v1143 = vpop.f32.mrf.mxu0
  %v1144 = vadd.f32 %v1116, %v1143
  %v1145 = vpop.f32.mrf.mxu0
  %1146 = vdwg.mxu0
  %s1147 = scalar_lea.vmem %s0, 392
  %v1148 = vld [vmem:[%s1147] sm:$0xff]
  %v1149 = vld [vmem:[%s1147 + $0x8] sm:$0xff]
  %v1150 = vld [vmem:[%s1147 + $0x10] sm:$0xff]
  %v1151 = vld [vmem:[%s1147 + $0x18] sm:$0xf]
  %v1152 = vld [vmem:[%s1147 + $0x1c] sm:$0xff]
  %v1153 = vld [vmem:[%s1147 + $0x24] sm:$0xff]
  %v1154 = vld [vmem:[%s1147 + $0x2c] sm:$0xff]
  %v1155 = vld [vmem:[%s1147 + $0x34] sm:$0xf]
  %v1156 = vld [vmem:[%s1147 + $0x38] sm:$0xff]
  %v1157 = vld [vmem:[%s1147 + $0x40] sm:$0xff]
  %v1158 = vld [vmem:[%s1147 + $0x48] sm:$0xff]
  %v1159 = vld [vmem:[%s1147 + $0x50] sm:$0xf]
  %v1160 = vld [vmem:[%s1147 + $0x54] sm:$0xff]
  %v1161 = vld [vmem:[%s1147 + $0x5c] sm:$0xff]
  %v1162 = vld [vmem:[%s1147 + $0x64] sm:$0xff]
  %v1163 = vld [vmem:[%s1147 + $0x6c] sm:$0xf]
  %v1164 = vld [vmem:[%s1147 + $0x70] sm:$0xff]
  %v1165 = vld [vmem:[%s1147 + $0x78] sm:$0xff]
  %v1166 = vld [vmem:[%s1147 + $0x80] sm:$0xff]
  %v1167 = vld [vmem:[%s1147 + $0x88] sm:$0xf]
  %v1168 = vld [vmem:[%s1147 + $0x8c] sm:$0xff]
  %v1169 = vld [vmem:[%s1147 + $0x94] sm:$0xff]
  %v1170 = vld [vmem:[%s1147 + $0x9c] sm:$0xff]
  %v1171 = vld [vmem:[%s1147 + $0xa4] sm:$0xf]
  %v1172 = vld [vmem:[%s1147 + $0xa8] sm:$0x11]
  %v1173 = vld [vmem:[%s1147 + $0xb0] sm:$0x11]
  %v1174 = vld [vmem:[%s1147 + $0xb8] sm:$0x11]
  %v1175 = vld [vmem:[%s1147 + $0xc0] sm:$0x1]
  %v1204 = vunpack.c.l.b16 %v1148
  %v1205 = vunpack.c.h.b16 %v1148
  %v1206 = vunpack.c.l.b16 %v1149
  %v1207 = vunpack.c.h.b16 %v1149
  %v1208 = vunpack.c.l.b16 %v1150
  %v1209 = vunpack.c.h.b16 %v1150
  %v1210 = vunpack.c.l.b16 %v1151
  %v1211 = vunpack.c.l.b16 %v1152
  %v1212 = vunpack.c.h.b16 %v1152
  %v1213 = vunpack.c.l.b16 %v1153
  %v1214 = vunpack.c.h.b16 %v1153
  %v1215 = vunpack.c.l.b16 %v1154
  %v1216 = vunpack.c.h.b16 %v1154
  %v1217 = vunpack.c.l.b16 %v1155
  %v1218 = vunpack.c.l.b16 %v1156
  %v1219 = vunpack.c.h.b16 %v1156
  %v1220 = vunpack.c.l.b16 %v1157
  %v1221 = vunpack.c.h.b16 %v1157
  %v1222 = vunpack.c.l.b16 %v1158
  %v1223 = vunpack.c.h.b16 %v1158
  %v1224 = vunpack.c.l.b16 %v1159
  %v1225 = vunpack.c.l.b16 %v1160
  %v1226 = vunpack.c.h.b16 %v1160
  %v1227 = vunpack.c.l.b16 %v1161
  %v1228 = vunpack.c.h.b16 %v1161
  %v1229 = vunpack.c.l.b16 %v1162
  %v1230 = vunpack.c.h.b16 %v1162
  %v1231 = vunpack.c.l.b16 %v1163
  %v1232 = vunpack.c.l.b16 %v1164
  %v1233 = vunpack.c.h.b16 %v1164
  %v1234 = vunpack.c.l.b16 %v1165
  %v1235 = vunpack.c.h.b16 %v1165
  %v1236 = vunpack.c.l.b16 %v1166
  %v1237 = vunpack.c.h.b16 %v1166
  %v1238 = vunpack.c.l.b16 %v1167
  %v1239 = vunpack.c.l.b16 %v1168
  %v1240 = vunpack.c.h.b16 %v1168
  %v1241 = vunpack.c.l.b16 %v1169
  %v1242 = vunpack.c.h.b16 %v1169
  %v1243 = vunpack.c.l.b16 %v1170
  %v1244 = vunpack.c.h.b16 %v1170
  %v1245 = vunpack.c.l.b16 %v1171
  %v1246 = vunpack.c.l.b16 %v1172
  %v1247 = vunpack.c.h.b16 %v1172
  %v1248 = vunpack.c.l.b16 %v1173
  %v1249 = vunpack.c.h.b16 %v1173
  %v1250 = vunpack.c.l.b16 %v1174
  %v1251 = vunpack.c.h.b16 %v1174
  %v1252 = vunpack.c.l.b16 %v1175
  %v1253 = vpack.c.b16 %v1211, %v1204
  %v1254 = vpack.c.b16 %v1212, %v1205
  %v1255 = vpack.c.b16 %v1213, %v1206
  %v1256 = vpack.c.b16 %v1214, %v1207
  %v1257 = vpack.c.b16 %v1215, %v1208
  %v1258 = vpack.c.b16 %v1216, %v1209
  %v1259 = vpack.c.b16 %v1217, %v1210
  %v1260 = vpack.c.b16 %v1225, %v1218
  %v1261 = vpack.c.b16 %v1226, %v1219
  %v1262 = vpack.c.b16 %v1227, %v1220
  %v1263 = vpack.c.b16 %v1228, %v1221
  %v1264 = vpack.c.b16 %v1229, %v1222
  %v1265 = vpack.c.b16 %v1230, %v1223
  %v1266 = vpack.c.b16 %v1231, %v1224
  %v1267 = vpack.c.b16 %v1239, %v1232
  %v1268 = vpack.c.b16 %v1240, %v1233
  %v1269 = vpack.c.b16 %v1241, %v1234
  %v1270 = vpack.c.b16 %v1242, %v1235
  %v1271 = vpack.c.b16 %v1243, %v1236
  %v1272 = vpack.c.b16 %v1244, %v1237
  %v1273 = vpack.c.b16 %v1245, %v1238
  %v1274 = vpack.c.b16 %v1246, %v1246
  %v1275 = vpack.c.b16 %v1247, %v1247
  %v1276 = vpack.c.b16 %v1248, %v1248
  %v1277 = vpack.c.b16 %v1249, %v1249
  %v1278 = vpack.c.b16 %v1250, %v1250
  %v1279 = vpack.c.b16 %v1251, %v1251
  %v1280 = vpack.c.b16 %v1252, %v1252
  %v1306 = vsel %vm572, %v1259, 0
  %v1309 = vsel %vm572, %v1266, 0
  %v1312 = vsel %vm572, %v1273, 0
  %v1315 = vsel %vm572, %v1280, 0
  %1317 = vmatpush.bf16.msra.mxu0 %v479
  %1318 = vmatpush.bf16.msra.mxu0 %v478
  %1319 = vmatpush.bf16.msra.mxu0 %v477
  %1320 = vmatpush.bf16.msra.mxu0 %v476
  %1321 = vmatpush.bf16.msra.mxu0 %v475
  %1322 = vmatpush.bf16.msra.mxu0 %v474
  %1323 = vmatpush.bf16.msra.mxu0 %v473
  %1324 = vmatpush.bf16.msra.mxu0 %v472
  %1325 = vmatmul.bf16.gmra.mxu0 %v1253
  %v1326 = vpop.f32.mrf.mxu0
  %v1327 = vadd.f32 0.0, %v1326
  %v1328 = vpop.f32.mrf.mxu0
  %v1329 = vadd.f32 0.0, %v1328
  %1330 = vmatmul.bf16.gmra.mxu0 %v1260
  %v1331 = vpop.f32.mrf.mxu0
  %v1332 = vadd.f32 0.0, %v1331
  %v1333 = vpop.f32.mrf.mxu0
  %v1334 = vadd.f32 0.0, %v1333
  %1335 = vmatmul.bf16.gmra.mxu0 %v1267
  %v1336 = vpop.f32.mrf.mxu0
  %v1337 = vadd.f32 0.0, %v1336
  %v1338 = vpop.f32.mrf.mxu0
  %v1339 = vadd.f32 0.0, %v1338
  %1340 = vmatmul.bf16.gmra.mxu0 %v1274
  %v1341 = vpop.f32.mrf.mxu0
  %v1342 = vadd.f32 0.0, %v1341
  %v1343 = vpop.f32.mrf.mxu0
  %1344 = vdwg.mxu0
  %1345 = vmatpush.bf16.msra.mxu0 %v487
  %1346 = vmatpush.bf16.msra.mxu0 %v486
  %1347 = vmatpush.bf16.msra.mxu0 %v485
  %1348 = vmatpush.bf16.msra.mxu0 %v484
  %1349 = vmatpush.bf16.msra.mxu0 %v483
  %1350 = vmatpush.bf16.msra.mxu0 %v482
  %1351 = vmatpush.bf16.msra.mxu0 %v481
  %1352 = vmatpush.bf16.msra.mxu0 %v480
  %1353 = vmatmul.bf16.gmra.mxu0 %v1254
  %v1354 = vpop.f32.mrf.mxu0
  %v1355 = vadd.f32 %v1327, %v1354
  %v1356 = vpop.f32.mrf.mxu0
  %v1357 = vadd.f32 %v1329, %v1356
  %1358 = vmatmul.bf16.gmra.mxu0 %v1261
  %v1359 = vpop.f32.mrf.mxu0
  %v1360 = vadd.f32 %v1332, %v1359
  %v1361 = vpop.f32.mrf.mxu0
  %v1362 = vadd.f32 %v1334, %v1361
  %1363 = vmatmul.bf16.gmra.mxu0 %v1268
  %v1364 = vpop.f32.mrf.mxu0
  %v1365 = vadd.f32 %v1337, %v1364
  %v1366 = vpop.f32.mrf.mxu0
  %v1367 = vadd.f32 %v1339, %v1366
  %1368 = vmatmul.bf16.gmra.mxu0 %v1275
  %v1369 = vpop.f32.mrf.mxu0
  %v1370 = vadd.f32 %v1342, %v1369
  %v1371 = vpop.f32.mrf.mxu0
  %1372 = vdwg.mxu0
  %1373 = vmatpush.bf16.msra.mxu0 %v495
  %1374 = vmatpush.bf16.msra.mxu0 %v494
  %1375 = vmatpush.bf16.msra.mxu0 %v493
  %1376 = vmatpush.bf16.msra.mxu0 %v492
  %1377 = vmatpush.bf16.msra.mxu0 %v491
  %1378 = vmatpush.bf16.msra.mxu0 %v490
  %1379 = vmatpush.bf16.msra.mxu0 %v489
  %1380 = vmatpush.bf16.msra.mxu0 %v488
  %1381 = vmatmul.bf16.gmra.mxu0 %v1255
  %v1382 = vpop.f32.mrf.mxu0
  %v1383 = vadd.f32 %v1355, %v1382
  %v1384 = vpop.f32.mrf.mxu0
  %v1385 = vadd.f32 %v1357, %v1384
  %1386 = vmatmul.bf16.gmra.mxu0 %v1262
  %v1387 = vpop.f32.mrf.mxu0
  %v1388 = vadd.f32 %v1360, %v1387
  %v1389 = vpop.f32.mrf.mxu0
  %v1390 = vadd.f32 %v1362, %v1389
  %1391 = vmatmul.bf16.gmra.mxu0 %v1269
  %v1392 = vpop.f32.mrf.mxu0
  %v1393 = vadd.f32 %v1365, %v1392
  %v1394 = vpop.f32.mrf.mxu0
  %v1395 = vadd.f32 %v1367, %v1394
  %1396 = vmatmul.bf16.gmra.mxu0 %v1276
  %v1397 = vpop.f32.mrf.mxu0
  %v1398 = vadd.f32 %v1370, %v1397
  %v1399 = vpop.f32.mrf.mxu0
  %1400 = vdwg.mxu0
  %1401 = vmatpush.bf16.msra.mxu0 %v503
  %1402 = vmatpush.bf16.msra.mxu0 %v502
  %1403 = vmatpush.bf16.msra.mxu0 %v501
  %1404 = vmatpush.bf16.msra.mxu0 %v500
  %1405 = vmatpush.bf16.msra.mxu0 %v499
  %1406 = vmatpush.bf16.msra.mxu0 %v498
  %1407 = vmatpush.bf16.msra.mxu0 %v497
  %1408 = vmatpush.bf16.msra.mxu0 %v496
  %1409 = vmatmul.bf16.gmra.mxu0 %v1256
  %v1410 = vpop.f32.mrf.mxu0
  %v1411 = vadd.f32 %v1383, %v1410
  %v1412 = vpop.f32.mrf.mxu0
  %v1413 = vadd.f32 %v1385, %v1412
  %1414 = vmatmul.bf16.gmra.mxu0 %v1263
  %v1415 = vpop.f32.mrf.mxu0
  %v1416 = vadd.f32 %v1388, %v1415
  %v1417 = vpop.f32.mrf.mxu0
  %v1418 = vadd.f32 %v1390, %v1417
  %1419 = vmatmul.bf16.gmra.mxu0 %v1270
  %v1420 = vpop.f32.mrf.mxu0
  %v1421 = vadd.f32 %v1393, %v1420
  %v1422 = vpop.f32.mrf.mxu0
  %v1423 = vadd.f32 %v1395, %v1422
  %1424 = vmatmul.bf16.gmra.mxu0 %v1277
  %v1425 = vpop.f32.mrf.mxu0
  %v1426 = vadd.f32 %v1398, %v1425
  %v1427 = vpop.f32.mrf.mxu0
  %1428 = vdwg.mxu0
  %1429 = vmatpush.bf16.msra.mxu0 %v511
  %1430 = vmatpush.bf16.msra.mxu0 %v510
  %1431 = vmatpush.bf16.msra.mxu0 %v509
  %1432 = vmatpush.bf16.msra.mxu0 %v508
  %1433 = vmatpush.bf16.msra.mxu0 %v507
  %1434 = vmatpush.bf16.msra.mxu0 %v506
  %1435 = vmatpush.bf16.msra.mxu0 %v505
  %1436 = vmatpush.bf16.msra.mxu0 %v504
  %1437 = vmatmul.bf16.gmra.mxu0 %v1257
  %v1438 = vpop.f32.mrf.mxu0
  %v1439 = vadd.f32 %v1411, %v1438
  %v1440 = vpop.f32.mrf.mxu0
  %v1441 = vadd.f32 %v1413, %v1440
  %1442 = vmatmul.bf16.gmra.mxu0 %v1264
  %v1443 = vpop.f32.mrf.mxu0
  %v1444 = vadd.f32 %v1416, %v1443
  %v1445 = vpop.f32.mrf.mxu0
  %v1446 = vadd.f32 %v1418, %v1445
  %1447 = vmatmul.bf16.gmra.mxu0 %v1271
  %v1448 = vpop.f32.mrf.mxu0
  %v1449 = vadd.f32 %v1421, %v1448
  %v1450 = vpop.f32.mrf.mxu0
  %v1451 = vadd.f32 %v1423, %v1450
  %1452 = vmatmul.bf16.gmra.mxu0 %v1278
  %v1453 = vpop.f32.mrf.mxu0
  %v1454 = vadd.f32 %v1426, %v1453
  %v1455 = vpop.f32.mrf.mxu0
  %1456 = vdwg.mxu0
  %1457 = vmatpush.bf16.msra.mxu0 %v519
  %1458 = vmatpush.bf16.msra.mxu0 %v518
  %1459 = vmatpush.bf16.msra.mxu0 %v517
  %1460 = vmatpush.bf16.msra.mxu0 %v516
  %1461 = vmatpush.bf16.msra.mxu0 %v515
  %1462 = vmatpush.bf16.msra.mxu0 %v514
  %1463 = vmatpush.bf16.msra.mxu0 %v513
  %1464 = vmatpush.bf16.msra.mxu0 %v512
  %1465 = vmatmul.bf16.gmra.mxu0 %v1258
  %v1466 = vpop.f32.mrf.mxu0
  %v1467 = vadd.f32 %v1439, %v1466
  %v1468 = vpop.f32.mrf.mxu0
  %v1469 = vadd.f32 %v1441, %v1468
  %1470 = vmatmul.bf16.gmra.mxu0 %v1265
  %v1471 = vpop.f32.mrf.mxu0
  %v1472 = vadd.f32 %v1444, %v1471
  %v1473 = vpop.f32.mrf.mxu0
  %v1474 = vadd.f32 %v1446, %v1473
  %1475 = vmatmul.bf16.gmra.mxu0 %v1272
  %v1476 = vpop.f32.mrf.mxu0
  %v1477 = vadd.f32 %v1449, %v1476
  %v1478 = vpop.f32.mrf.mxu0
  %v1479 = vadd.f32 %v1451, %v1478
  %1480 = vmatmul.bf16.gmra.mxu0 %v1279
  %v1481 = vpop.f32.mrf.mxu0
  %v1482 = vadd.f32 %v1454, %v1481
  %v1483 = vpop.f32.mrf.mxu0
  %1484 = vdwg.mxu0
  %1485 = vmatpush.bf16.msra.mxu0 0
  %1486 = vmatpush.bf16.msra.mxu0 0
  %1487 = vmatpush.bf16.msra.mxu0 0
  %1488 = vmatpush.bf16.msra.mxu0 0
  %1489 = vmatpush.bf16.msra.mxu0 0
  %1490 = vmatpush.bf16.msra.mxu0 0
  %1491 = vmatpush.bf16.msra.mxu0 %v521
  %1492 = vmatpush.bf16.msra.mxu0 %v520
  %1493 = vmatmul.bf16.gmra.mxu0 %v1306
  %v1494 = vpop.f32.mrf.mxu0
  %v1495 = vadd.f32 %v1467, %v1494
  %v1496 = vpop.f32.mrf.mxu0
  %v1497 = vadd.f32 %v1469, %v1496
  %1498 = vmatmul.bf16.gmra.mxu0 %v1309
  %v1499 = vpop.f32.mrf.mxu0
  %v1500 = vadd.f32 %v1472, %v1499
  %v1501 = vpop.f32.mrf.mxu0
  %v1502 = vadd.f32 %v1474, %v1501
  %1503 = vmatmul.bf16.gmra.mxu0 %v1312
  %v1504 = vpop.f32.mrf.mxu0
  %v1505 = vadd.f32 %v1477, %v1504
  %v1506 = vpop.f32.mrf.mxu0
  %v1507 = vadd.f32 %v1479, %v1506
  %1508 = vmatmul.bf16.gmra.mxu0 %v1315
  %v1509 = vpop.f32.mrf.mxu0
  %v1510 = vadd.f32 %v1482, %v1509
  %v1511 = vpop.f32.mrf.mxu0
  %1512 = vdwg.mxu0
  %s1513 = scalar_lea.vmem %s0, 588
  %v1514 = vld [vmem:[%s1513] sm:$0xff]
  %v1515 = vld [vmem:[%s1513 + $0x8] sm:$0xff]
  %v1516 = vld [vmem:[%s1513 + $0x10] sm:$0xff]
  %v1517 = vld [vmem:[%s1513 + $0x18] sm:$0xf]
  %v1518 = vld [vmem:[%s1513 + $0x1c] sm:$0xff]
  %v1519 = vld [vmem:[%s1513 + $0x24] sm:$0xff]
  %v1520 = vld [vmem:[%s1513 + $0x2c] sm:$0xff]
  %v1521 = vld [vmem:[%s1513 + $0x34] sm:$0xf]
  %v1522 = vld [vmem:[%s1513 + $0x38] sm:$0xff]
  %v1523 = vld [vmem:[%s1513 + $0x40] sm:$0xff]
  %v1524 = vld [vmem:[%s1513 + $0x48] sm:$0xff]
  %v1525 = vld [vmem:[%s1513 + $0x50] sm:$0xf]
  %v1526 = vld [vmem:[%s1513 + $0x54] sm:$0xff]
  %v1527 = vld [vmem:[%s1513 + $0x5c] sm:$0xff]
  %v1528 = vld [vmem:[%s1513 + $0x64] sm:$0xff]
  %v1529 = vld [vmem:[%s1513 + $0x6c] sm:$0xf]
  %v1530 = vld [vmem:[%s1513 + $0x70] sm:$0xff]
  %v1531 = vld [vmem:[%s1513 + $0x78] sm:$0xff]
  %v1532 = vld [vmem:[%s1513 + $0x80] sm:$0xff]
  %v1533 = vld [vmem:[%s1513 + $0x88] sm:$0xf]
  %v1534 = vld [vmem:[%s1513 + $0x8c] sm:$0xff]
  %v1535 = vld [vmem:[%s1513 + $0x94] sm:$0xff]
  %v1536 = vld [vmem:[%s1513 + $0x9c] sm:$0xff]
  %v1537 = vld [vmem:[%s1513 + $0xa4] sm:$0xf]
  %v1538 = vld [vmem:[%s1513 + $0xa8] sm:$0x11]
  %v1539 = vld [vmem:[%s1513 + $0xb0] sm:$0x11]
  %v1540 = vld [vmem:[%s1513 + $0xb8] sm:$0x11]
  %v1541 = vld [vmem:[%s1513 + $0xc0] sm:$0x1]
  %v1570 = vunpack.c.l.b16 %v1514
  %v1571 = vunpack.c.h.b16 %v1514
  %v1572 = vunpack.c.l.b16 %v1515
  %v1573 = vunpack.c.h.b16 %v1515
  %v1574 = vunpack.c.l.b16 %v1516
  %v1575 = vunpack.c.h.b16 %v1516
  %v1576 = vunpack.c.l.b16 %v1517
  %v1577 = vunpack.c.l.b16 %v1518
  %v1578 = vunpack.c.h.b16 %v1518
  %v1579 = vunpack.c.l.b16 %v1519
  %v1580 = vunpack.c.h.b16 %v1519
  %v1581 = vunpack.c.l.b16 %v1520
  %v1582 = vunpack.c.h.b16 %v1520
  %v1583 = vunpack.c.l.b16 %v1521
  %v1584 = vunpack.c.l.b16 %v1522
  %v1585 = vunpack.c.h.b16 %v1522
  %v1586 = vunpack.c.l.b16 %v1523
  %v1587 = vunpack.c.h.b16 %v1523
  %v1588 = vunpack.c.l.b16 %v1524
  %v1589 = vunpack.c.h.b16 %v1524
  %v1590 = vunpack.c.l.b16 %v1525
  %v1591 = vunpack.c.l.b16 %v1526
  %v1592 = vunpack.c.h.b16 %v1526
  %v1593 = vunpack.c.l.b16 %v1527
  %v1594 = vunpack.c.h.b16 %v1527
  %v1595 = vunpack.c.l.b16 %v1528
  %v1596 = vunpack.c.h.b16 %v1528
  %v1597 = vunpack.c.l.b16 %v1529
  %v1598 = vunpack.c.l.b16 %v1530
  %v1599 = vunpack.c.h.b16 %v1530
  %v1600 = vunpack.c.l.b16 %v1531
  %v1601 = vunpack.c.h.b16 %v1531
  %v1602 = vunpack.c.l.b16 %v1532
  %v1603 = vunpack.c.h.b16 %v1532
  %v1604 = vunpack.c.l.b16 %v1533
  %v1605 = vunpack.c.l.b16 %v1534
  %v1606 = vunpack.c.h.b16 %v1534
  %v1607 = vunpack.c.l.b16 %v1535
  %v1608 = vunpack.c.h.b16 %v1535
  %v1609 = vunpack.c.l.b16 %v1536
  %v1610 = vunpack.c.h.b16 %v1536
  %v1611 = vunpack.c.l.b16 %v1537
  %v1612 = vunpack.c.l.b16 %v1538
  %v1613 = vunpack.c.h.b16 %v1538
  %v1614 = vunpack.c.l.b16 %v1539
  %v1615 = vunpack.c.h.b16 %v1539
  %v1616 = vunpack.c.l.b16 %v1540
  %v1617 = vunpack.c.h.b16 %v1540
  %v1618 = vunpack.c.l.b16 %v1541
  %v1619 = vpack.c.b16 %v1577, %v1570
  %v1620 = vpack.c.b16 %v1578, %v1571
  %v1621 = vpack.c.b16 %v1579, %v1572
  %v1622 = vpack.c.b16 %v1580, %v1573
  %v1623 = vpack.c.b16 %v1581, %v1574
  %v1624 = vpack.c.b16 %v1582, %v1575
  %v1625 = vpack.c.b16 %v1583, %v1576
  %v1626 = vpack.c.b16 %v1591, %v1584
  %v1627 = vpack.c.b16 %v1592, %v1585
  %v1628 = vpack.c.b16 %v1593, %v1586
  %v1629 = vpack.c.b16 %v1594, %v1587
  %v1630 = vpack.c.b16 %v1595, %v1588
  %v1631 = vpack.c.b16 %v1596, %v1589
  %v1632 = vpack.c.b16 %v1597, %v1590
  %v1633 = vpack.c.b16 %v1605, %v1598
  %v1634 = vpack.c.b16 %v1606, %v1599
  %v1635 = vpack.c.b16 %v1607, %v1600
  %v1636 = vpack.c.b16 %v1608, %v1601
  %v1637 = vpack.c.b16 %v1609, %v1602
  %v1638 = vpack.c.b16 %v1610, %v1603
  %v1639 = vpack.c.b16 %v1611, %v1604
  %v1640 = vpack.c.b16 %v1612, %v1612
  %v1641 = vpack.c.b16 %v1613, %v1613
  %v1642 = vpack.c.b16 %v1614, %v1614
  %v1643 = vpack.c.b16 %v1615, %v1615
  %v1644 = vpack.c.b16 %v1616, %v1616
  %v1645 = vpack.c.b16 %v1617, %v1617
  %v1646 = vpack.c.b16 %v1618, %v1618
  %v1672 = vsel %vm572, %v1625, 0
  %v1675 = vsel %vm572, %v1632, 0
  %v1678 = vsel %vm572, %v1639, 0
  %v1681 = vsel %vm572, %v1646, 0
  %1683 = vmatpush.bf16.msra.mxu0 %v479
  %1684 = vmatpush.bf16.msra.mxu0 %v478
  %1685 = vmatpush.bf16.msra.mxu0 %v477
  %1686 = vmatpush.bf16.msra.mxu0 %v476
  %1687 = vmatpush.bf16.msra.mxu0 %v475
  %1688 = vmatpush.bf16.msra.mxu0 %v474
  %1689 = vmatpush.bf16.msra.mxu0 %v473
  %1690 = vmatpush.bf16.msra.mxu0 %v472
  %1691 = vmatmul.bf16.gmra.mxu0 %v1619
  %v1692 = vpop.f32.mrf.mxu0
  %v1693 = vadd.f32 0.0, %v1692
  %v1694 = vpop.f32.mrf.mxu0
  %v1695 = vadd.f32 0.0, %v1694
  %1696 = vmatmul.bf16.gmra.mxu0 %v1626
  %v1697 = vpop.f32.mrf.mxu0
  %v1698 = vadd.f32 0.0, %v1697
  %v1699 = vpop.f32.mrf.mxu0
  %v1700 = vadd.f32 0.0, %v1699
  %1701 = vmatmul.bf16.gmra.mxu0 %v1633
  %v1702 = vpop.f32.mrf.mxu0
  %v1703 = vadd.f32 0.0, %v1702
  %v1704 = vpop.f32.mrf.mxu0
  %v1705 = vadd.f32 0.0, %v1704
  %1706 = vmatmul.bf16.gmra.mxu0 %v1640
  %v1707 = vpop.f32.mrf.mxu0
  %v1708 = vadd.f32 0.0, %v1707
  %v1709 = vpop.f32.mrf.mxu0
  %1710 = vdwg.mxu0
  %1711 = vmatpush.bf16.msra.mxu0 %v487
  %1712 = vmatpush.bf16.msra.mxu0 %v486
  %1713 = vmatpush.bf16.msra.mxu0 %v485
  %1714 = vmatpush.bf16.msra.mxu0 %v484
  %1715 = vmatpush.bf16.msra.mxu0 %v483
  %1716 = vmatpush.bf16.msra.mxu0 %v482
  %1717 = vmatpush.bf16.msra.mxu0 %v481
  %1718 = vmatpush.bf16.msra.mxu0 %v480
  %1719 = vmatmul.bf16.gmra.mxu0 %v1620
  %v1720 = vpop.f32.mrf.mxu0
  %v1721 = vadd.f32 %v1693, %v1720
  %v1722 = vpop.f32.mrf.mxu0
  %v1723 = vadd.f32 %v1695, %v1722
  %1724 = vmatmul.bf16.gmra.mxu0 %v1627
  %v1725 = vpop.f32.mrf.mxu0
  %v1726 = vadd.f32 %v1698, %v1725
  %v1727 = vpop.f32.mrf.mxu0
  %v1728 = vadd.f32 %v1700, %v1727
  %1729 = vmatmul.bf16.gmra.mxu0 %v1634
  %v1730 = vpop.f32.mrf.mxu0
  %v1731 = vadd.f32 %v1703, %v1730
  %v1732 = vpop.f32.mrf.mxu0
  %v1733 = vadd.f32 %v1705, %v1732
  %1734 = vmatmul.bf16.gmra.mxu0 %v1641
  %v1735 = vpop.f32.mrf.mxu0
  %v1736 = vadd.f32 %v1708, %v1735
  %v1737 = vpop.f32.mrf.mxu0
  %1738 = vdwg.mxu0
  %1739 = vmatpush.bf16.msra.mxu0 %v495
  %1740 = vmatpush.bf16.msra.mxu0 %v494
  %1741 = vmatpush.bf16.msra.mxu0 %v493
  %1742 = vmatpush.bf16.msra.mxu0 %v492
  %1743 = vmatpush.bf16.msra.mxu0 %v491
  %1744 = vmatpush.bf16.msra.mxu0 %v490
  %1745 = vmatpush.bf16.msra.mxu0 %v489
  %1746 = vmatpush.bf16.msra.mxu0 %v488
  %1747 = vmatmul.bf16.gmra.mxu0 %v1621
  %v1748 = vpop.f32.mrf.mxu0
  %v1749 = vadd.f32 %v1721, %v1748
  %v1750 = vpop.f32.mrf.mxu0
  %v1751 = vadd.f32 %v1723, %v1750
  %1752 = vmatmul.bf16.gmra.mxu0 %v1628
  %v1753 = vpop.f32.mrf.mxu0
  %v1754 = vadd.f32 %v1726, %v1753
  %v1755 = vpop.f32.mrf.mxu0
  %v1756 = vadd.f32 %v1728, %v1755
  %1757 = vmatmul.bf16.gmra.mxu0 %v1635
  %v1758 = vpop.f32.mrf.mxu0
  %v1759 = vadd.f32 %v1731, %v1758
  %v1760 = vpop.f32.mrf.mxu0
  %v1761 = vadd.f32 %v1733, %v1760
  %1762 = vmatmul.bf16.gmra.mxu0 %v1642
  %v1763 = vpop.f32.mrf.mxu0
  %v1764 = vadd.f32 %v1736, %v1763
  %v1765 = vpop.f32.mrf.mxu0
  %1766 = vdwg.mxu0
  %1767 = vmatpush.bf16.msra.mxu0 %v503
  %1768 = vmatpush.bf16.msra.mxu0 %v502
  %1769 = vmatpush.bf16.msra.mxu0 %v501
  %1770 = vmatpush.bf16.msra.mxu0 %v500
  %1771 = vmatpush.bf16.msra.mxu0 %v499
  %1772 = vmatpush.bf16.msra.mxu0 %v498
  %1773 = vmatpush.bf16.msra.mxu0 %v497
  %1774 = vmatpush.bf16.msra.mxu0 %v496
  %1775 = vmatmul.bf16.gmra.mxu0 %v1622
  %v1776 = vpop.f32.mrf.mxu0
  %v1777 = vadd.f32 %v1749, %v1776
  %v1778 = vpop.f32.mrf.mxu0
  %v1779 = vadd.f32 %v1751, %v1778
  %1780 = vmatmul.bf16.gmra.mxu0 %v1629
  %v1781 = vpop.f32.mrf.mxu0
  %v1782 = vadd.f32 %v1754, %v1781
  %v1783 = vpop.f32.mrf.mxu0
  %v1784 = vadd.f32 %v1756, %v1783
  %1785 = vmatmul.bf16.gmra.mxu0 %v1636
  %v1786 = vpop.f32.mrf.mxu0
  %v1787 = vadd.f32 %v1759, %v1786
  %v1788 = vpop.f32.mrf.mxu0
  %v1789 = vadd.f32 %v1761, %v1788
  %1790 = vmatmul.bf16.gmra.mxu0 %v1643
  %v1791 = vpop.f32.mrf.mxu0
  %v1792 = vadd.f32 %v1764, %v1791
  %v1793 = vpop.f32.mrf.mxu0
  %1794 = vdwg.mxu0
  %1795 = vmatpush.bf16.msra.mxu0 %v511
  %1796 = vmatpush.bf16.msra.mxu0 %v510
  %1797 = vmatpush.bf16.msra.mxu0 %v509
  %1798 = vmatpush.bf16.msra.mxu0 %v508
  %1799 = vmatpush.bf16.msra.mxu0 %v507
  %1800 = vmatpush.bf16.msra.mxu0 %v506
  %1801 = vmatpush.bf16.msra.mxu0 %v505
  %1802 = vmatpush.bf16.msra.mxu0 %v504
  %1803 = vmatmul.bf16.gmra.mxu0 %v1623
  %v1804 = vpop.f32.mrf.mxu0
  %v1805 = vadd.f32 %v1777, %v1804
  %v1806 = vpop.f32.mrf.mxu0
  %v1807 = vadd.f32 %v1779, %v1806
  %1808 = vmatmul.bf16.gmra.mxu0 %v1630
  %v1809 = vpop.f32.mrf.mxu0
  %v1810 = vadd.f32 %v1782, %v1809
  %v1811 = vpop.f32.mrf.mxu0
  %v1812 = vadd.f32 %v1784, %v1811
  %1813 = vmatmul.bf16.gmra.mxu0 %v1637
  %v1814 = vpop.f32.mrf.mxu0
  %v1815 = vadd.f32 %v1787, %v1814
  %v1816 = vpop.f32.mrf.mxu0
  %v1817 = vadd.f32 %v1789, %v1816
  %1818 = vmatmul.bf16.gmra.mxu0 %v1644
  %v1819 = vpop.f32.mrf.mxu0
  %v1820 = vadd.f32 %v1792, %v1819
  %v1821 = vpop.f32.mrf.mxu0
  %1822 = vdwg.mxu0
  %1823 = vmatpush.bf16.msra.mxu0 %v519
  %1824 = vmatpush.bf16.msra.mxu0 %v518
  %1825 = vmatpush.bf16.msra.mxu0 %v517
  %1826 = vmatpush.bf16.msra.mxu0 %v516
  %1827 = vmatpush.bf16.msra.mxu0 %v515
  %1828 = vmatpush.bf16.msra.mxu0 %v514
  %1829 = vmatpush.bf16.msra.mxu0 %v513
  %1830 = vmatpush.bf16.msra.mxu0 %v512
  %1831 = vmatmul.bf16.gmra.mxu0 %v1624
  %v1832 = vpop.f32.mrf.mxu0
  %v1833 = vadd.f32 %v1805, %v1832
  %v1834 = vpop.f32.mrf.mxu0
  %v1835 = vadd.f32 %v1807, %v1834
  %1836 = vmatmul.bf16.gmra.mxu0 %v1631
  %v1837 = vpop.f32.mrf.mxu0
  %v1838 = vadd.f32 %v1810, %v1837
  %v1839 = vpop.f32.mrf.mxu0
  %v1840 = vadd.f32 %v1812, %v1839
  %1841 = vmatmul.bf16.gmra.mxu0 %v1638
  %v1842 = vpop.f32.mrf.mxu0
  %v1843 = vadd.f32 %v1815, %v1842
  %v1844 = vpop.f32.mrf.mxu0
  %v1845 = vadd.f32 %v1817, %v1844
  %1846 = vmatmul.bf16.gmra.mxu0 %v1645
  %v1847 = vpop.f32.mrf.mxu0
  %v1848 = vadd.f32 %v1820, %v1847
  %v1849 = vpop.f32.mrf.mxu0
  %1850 = vdwg.mxu0
  %1851 = vmatpush.bf16.msra.mxu0 0
  %1852 = vmatpush.bf16.msra.mxu0 0
  %1853 = vmatpush.bf16.msra.mxu0 0
  %1854 = vmatpush.bf16.msra.mxu0 0
  %1855 = vmatpush.bf16.msra.mxu0 0
  %1856 = vmatpush.bf16.msra.mxu0 0
  %1857 = vmatpush.bf16.msra.mxu0 %v521
  %1858 = vmatpush.bf16.msra.mxu0 %v520
  %1859 = vmatmul.bf16.gmra.mxu0 %v1672
  %v1860 = vpop.f32.mrf.mxu0
  %v1861 = vadd.f32 %v1833, %v1860
  %v1862 = vpop.f32.mrf.mxu0
  %v1863 = vadd.f32 %v1835, %v1862
  %1864 = vmatmul.bf16.gmra.mxu0 %v1675
  %v1865 = vpop.f32.mrf.mxu0
  %v1866 = vadd.f32 %v1838, %v1865
  %v1867 = vpop.f32.mrf.mxu0
  %v1868 = vadd.f32 %v1840, %v1867
  %1869 = vmatmul.bf16.gmra.mxu0 %v1678
  %v1870 = vpop.f32.mrf.mxu0
  %v1871 = vadd.f32 %v1843, %v1870
  %v1872 = vpop.f32.mrf.mxu0
  %v1873 = vadd.f32 %v1845, %v1872
  %1874 = vmatmul.bf16.gmra.mxu0 %v1681
  %v1875 = vpop.f32.mrf.mxu0
  %v1876 = vadd.f32 %v1848, %v1875
  %v1877 = vpop.f32.mrf.mxu0
  %1878 = vdwg.mxu0
  %v1879 = vmax.f32 %v763, %v1129
  %v1880 = vmax.f32 %v765, %v1131
  %v1881 = vmax.f32 %v768, %v1134
  %v1882 = vmax.f32 %v770, %v1136
  %v1883 = vmax.f32 %v773, %v1139
  %v1884 = vmax.f32 %v775, %v1141
  %v1885 = vmax.f32 %v778, %v1144
  %v1886 = vmax.f32 %v1495, %v1861
  %v1887 = vmax.f32 %v1497, %v1863
  %v1888 = vmax.f32 %v1500, %v1866
  %v1889 = vmax.f32 %v1502, %v1868
  %v1890 = vmax.f32 %v1505, %v1871
  %v1891 = vmax.f32 %v1507, %v1873
  %v1892 = vmax.f32 %v1510, %v1876
  %v1893 = vmax.f32 %v1879, %v1886
  %v1894 = vmax.f32 %v1880, %v1887
  %v1895 = vmax.f32 %v1881, %v1888
  %v1896 = vmax.f32 %v1882, %v1889
  %v1897 = vmax.f32 %v1883, %v1890
  %v1898 = vmax.f32 %v1884, %v1891
  %v1899 = vmax.f32 %v1885, %v1892
  %v1900 = vld [vmem:[%s2] sm:$0x1]
  %v1902 = vperm.slane %v1900, 0
  %v1904 = vadd.f32 %v1893, %v1902
  %v1905 = vadd.f32 %v1894, %v1902
  %v1906 = vadd.f32 %v1895, %v1902
  %v1907 = vadd.f32 %v1896, %v1902
  %v1908 = vadd.f32 %v1897, %v1902
  %v1909 = vadd.f32 %v1898, %v1902
  %v1910 = vadd.f32 %v1899, %v1902
  %v1911 = vpack.c.bf16 %v1904, %v1904
  %v1912 = vpack.c.bf16 %v1905, %v1905
  %v1913 = vpack.c.bf16 %v1906, %v1906
  %v1914 = vpack.c.bf16 %v1907, %v1907
  %v1915 = vpack.c.bf16 %v1908, %v1908
  %v1916 = vpack.c.bf16 %v1909, %v1909
  %v1917 = vpack.c.bf16 %v1910, %v1910
  %vm1918 = vcmask 388096
  %1919 = vst.msk [vmem:[%s3] sm:$0xf] %vm1918, %v1911
  %1920 = vst.msk [vmem:[%s3 + $0x4] sm:$0xf] %vm1918, %v1912
  %1921 = vst.msk [vmem:[%s3 + $0x8] sm:$0xf] %vm1918, %v1913
  %1922 = vst.msk [vmem:[%s3 + $0xc] sm:$0xf] %vm1918, %v1914
  %1923 = vst.msk [vmem:[%s3 + $0x10] sm:$0xf] %vm1918, %v1915
  %1924 = vst.msk [vmem:[%s3 + $0x14] sm:$0xf] %vm1918, %v1916
  %vm1925 = vcmask 385024
  %1926 = vst.msk [vmem:[%s3 + $0x18] sm:$0x1] %vm1925, %v1917
  // Predicated region
  $region14: #{svhn_forward.4} parent=0 // pred_check
    _
  $region15: #{svhn_forward.4} parent=0 // pred_check_branch
    %1928 = sbr.rel (0) target = $region17
  $region16: #{svhn_forward.4} parent=0 // pred_region
    _
  $region17: #{svhn_forward.4} parent=0 // pred_fallthru
    _
  // Predicated region
  $region18: #{svhn_forward.4} parent=0 // pred_check
    _
  $region19: #{svhn_forward.4} parent=0 // pred_check_branch
    %1930 = sbr.rel (0) target = $region21
  $region20: #{svhn_forward.4} parent=0 // pred_region
    _
  $region21: #{svhn_forward.4} parent=0 // pred_fallthru
    _

// kernel: svhn_forward.5
$region0: #{svhn_forward.5}
  #allocation0 [shape = 'u32[]', space=smem, size = 0x4, offset = 0x4, fixed_abs, tag = 'smem constant byte address 0x4 - core index']
  #allocation1 [shape = 'u32[72,128]{1,0:T(1,128)}', space=vmem, size = 0x9000, scoped, tag = 'internal scratch']
  %s0 = inlined_call_operand.vmem [shape: bf16[2,1200], index: 0, kind: input, shape index: {}]
  %s1 = inlined_call_operand.vmem [shape: bf16[1200,100], index: 1, kind: input, shape index: {}]
  %s2 = inlined_call_operand.vmem [shape: f32[1,100], index: 2, kind: input, shape index: {}]
  %s3 = inlined_call_operand.vmem [shape: bf16[100,100], index: 3, kind: input, shape index: {}]
  %s4 = inlined_call_operand.vmem [shape: f32[1,100], index: 4, kind: input, shape index: {}]
  %s5 = inlined_call_operand.vmem [shape: bf16[100,10], index: 5, kind: input, shape index: {}]
  %s6 = inlined_call_operand.vmem [shape: f32[1,10], index: 6, kind: input, shape index: {}]
  %s7 = inlined_call_operand.hbm [shape: f32[2,10], index: 7, kind: output, shape index: {}]
  %s8 = sld [smem:[#allocation0]]
  $region38: #{svhn_forward.5} parent=0
    _
  %s10 = ssub.s32 1, %s8
  %s11 = scalar_select 0, %s10, %s8
  $region1: #{svhn_forward.5} parent=0
    #allocation2 [shape = 'u8[1024]{0}', space=vmem, size = 0x400, scoped, tag = 'output window, operand 0, single buffered']
    #allocation3 [shape = 's32[1]{0}', space=sflag, size = 0x4, scoped, tag = 'scoped memory for svhn_forward.5']
    %12 = vsyncpa [#allocation3], 0
    // Predicated region
    $region2: #{svhn_forward.5} parent=1 // pred_check
      _
    $region3: #{svhn_forward.5} parent=1 // pred_check_branch
      %14 = sbr.rel (0) target = $region5
    $region4: #{svhn_forward.5} parent=1 // pred_region
      _
    $region5: #{svhn_forward.5} parent=1 // pred_fallthru
      _
    // Predicated region
    $region6: #{svhn_forward.5} parent=1 // pred_check
      _
    $region7: #{svhn_forward.5} parent=1 // pred_check_branch
      %16 = sbr.rel (0) target = $region9
    $region8: #{svhn_forward.5} parent=1 // pred_region
      _
    $region9: #{svhn_forward.5} parent=1 // pred_fallthru
      _
    // Predicated region
    $region10: #{svhn_forward.5} parent=1 // pred_check
      _
    $region11: #{svhn_forward.5} parent=1 // pred_check_branch
      %18 = sbr.rel (0) target = $region13
    $region12: #{svhn_forward.5} parent=1 // pred_region
      _
    $region13: #{svhn_forward.5} parent=1 // pred_fallthru
      _
    // Predicated region
    $region14: #{svhn_forward.5} parent=1 // pred_check
      _
    $region15: #{svhn_forward.5} parent=1 // pred_check_branch
      %20 = sbr.rel (0) target = $region17
    $region16: #{svhn_forward.5} parent=1 // pred_region
      _
    $region17: #{svhn_forward.5} parent=1 // pred_fallthru
      _
    // Predicated region
    $region18: #{svhn_forward.5} parent=1 // pred_check
      _
    $region19: #{svhn_forward.5} parent=1 // pred_check_branch
      %22 = sbr.rel (0) target = $region21
    $region20: #{svhn_forward.5} parent=1 // pred_region
      _
    $region21: #{svhn_forward.5} parent=1 // pred_fallthru
      _
    // Predicated region
    $region22: #{svhn_forward.5} parent=1 // pred_check
      _
    $region23: #{svhn_forward.5} parent=1 // pred_check_branch
      %24 = sbr.rel (0) target = $region25
    $region24: #{svhn_forward.5} parent=1 // pred_region
      _
    $region25: #{svhn_forward.5} parent=1 // pred_fallthru
      _
    // Predicated region
    $region26: #{svhn_forward.5} parent=1 // pred_check
      _
    $region27: #{svhn_forward.5} parent=1 // pred_check_branch
      %26 = sbr.rel (0) target = $region29
    $region28: #{svhn_forward.5} parent=1 // pred_region
      _
    $region29: #{svhn_forward.5} parent=1 // pred_fallthru
      _
    %v28 = vld [vmem:[%s0] sm:$0xff]
    %v29 = vld [vmem:[%s0 + $0x8] sm:$0x3]
    %v30 = vld [vmem:[%s1] sm:$0xf]
    %v31 = vld [vmem:[%s1 + $0x4] sm:$0xf]
    %v32 = vld [vmem:[%s1 + $0x8] sm:$0xf]
    %v33 = vld [vmem:[%s1 + $0xc] sm:$0xf]
    %v34 = vld [vmem:[%s1 + $0x10] sm:$0xf]
    %v35 = vld [vmem:[%s1 + $0x14] sm:$0xf]
    %v36 = vld [vmem:[%s1 + $0x18] sm:$0xf]
    %v37 = vld [vmem:[%s1 + $0x1c] sm:$0xf]
    %v38 = vld [vmem:[%s1 + $0x20] sm:$0xf]
    %v39 = vld [vmem:[%s1 + $0x24] sm:$0xf]
    %v40 = vld [vmem:[%s1 + $0x28] sm:$0xf]
    %v41 = vld [vmem:[%s1 + $0x2c] sm:$0xf]
    %v42 = vld [vmem:[%s1 + $0x30] sm:$0xf]
    %v43 = vld [vmem:[%s1 + $0x34] sm:$0xf]
    %v44 = vld [vmem:[%s1 + $0x38] sm:$0xf]
    %v45 = vld [vmem:[%s1 + $0x3c] sm:$0xf]
    %v46 = vld [vmem:[%s1 + $0x40] sm:$0xf]
    %v47 = vld [vmem:[%s1 + $0x44] sm:$0xf]
    %v48 = vld [vmem:[%s1 + $0x48] sm:$0xf]
    %v49 = vld [vmem:[%s1 + $0x4c] sm:$0xf]
    %v50 = vld [vmem:[%s1 + $0x50] sm:$0xf]
    %v51 = vld [vmem:[%s1 + $0x54] sm:$0xf]
    %v52 = vld [vmem:[%s1 + $0x58] sm:$0xf]
    %v53 = vld [vmem:[%s1 + $0x5c] sm:$0xf]
    %v54 = vld [vmem:[%s1 + $0x60] sm:$0xf]
    %v55 = vld [vmem:[%s1 + $0x64] sm:$0xf]
    %v56 = vld [vmem:[%s1 + $0x68] sm:$0xf]
    %v57 = vld [vmem:[%s1 + $0x6c] sm:$0xf]
    %v58 = vld [vmem:[%s1 + $0x70] sm:$0xf]
    %v59 = vld [vmem:[%s1 + $0x74] sm:$0xf]
    %v60 = vld [vmem:[%s1 + $0x78] sm:$0xf]
    %v61 = vld [vmem:[%s1 + $0x7c] sm:$0xf]
    %v62 = vld [vmem:[%s1 + $0x80] sm:$0xf]
    %v63 = vld [vmem:[%s1 + $0x84] sm:$0xf]
    %v64 = vld [vmem:[%s1 + $0x88] sm:$0xf]
    %v65 = vld [vmem:[%s1 + $0x8c] sm:$0xf]
    %v66 = vld [vmem:[%s1 + $0x90] sm:$0xf]
    %v67 = vld [vmem:[%s1 + $0x94] sm:$0xf]
    %v68 = vld [vmem:[%s1 + $0x98] sm:$0xf]
    %v69 = vld [vmem:[%s1 + $0x9c] sm:$0xf]
    %v70 = vld [vmem:[%s1 + $0xa0] sm:$0xf]
    %v71 = vld [vmem:[%s1 + $0xa4] sm:$0xf]
    %v72 = vld [vmem:[%s1 + $0xa8] sm:$0xf]
    %v73 = vld [vmem:[%s1 + $0xac] sm:$0xf]
    %v74 = vld [vmem:[%s1 + $0xb0] sm:$0xf]
    %v75 = vld [vmem:[%s1 + $0xb4] sm:$0xf]
    %v76 = vld [vmem:[%s1 + $0xb8] sm:$0xf]
    %v77 = vld [vmem:[%s1 + $0xbc] sm:$0xf]
    %v78 = vld [vmem:[%s1 + $0xc0] sm:$0xf]
    %v79 = vld [vmem:[%s1 + $0xc4] sm:$0xf]
    %v80 = vld [vmem:[%s1 + $0xc8] sm:$0xf]
    %v81 = vld [vmem:[%s1 + $0xcc] sm:$0xf]
    %v82 = vld [vmem:[%s1 + $0xd0] sm:$0xf]
    %v83 = vld [vmem:[%s1 + $0xd4] sm:$0xf]
    %v84 = vld [vmem:[%s1 + $0xd8] sm:$0xf]
    %v85 = vld [vmem:[%s1 + $0xdc] sm:$0xf]
    %v86 = vld [vmem:[%s1 + $0xe0] sm:$0xf]
    %v87 = vld [vmem:[%s1 + $0xe4] sm:$0xf]
    %v88 = vld [vmem:[%s1 + $0xe8] sm:$0xf]
    %v89 = vld [vmem:[%s1 + $0xec] sm:$0xf]
    %v90 = vld [vmem:[%s1 + $0xf0] sm:$0xf]
    %v91 = vld [vmem:[%s1 + $0xf4] sm:$0xf]
    %v92 = vld [vmem:[%s1 + $0xf8] sm:$0xf]
    %v93 = vld [vmem:[%s1 + $0xfc] sm:$0xf]
    %v94 = vld [vmem:[%s1 + $0x100] sm:$0xf]
    %v95 = vld [vmem:[%s1 + $0x104] sm:$0xf]
    %v96 = vld [vmem:[%s1 + $0x108] sm:$0xf]
    %v97 = vld [vmem:[%s1 + $0x10c] sm:$0xf]
    %v98 = vld [vmem:[%s1 + $0x110] sm:$0xf]
    %v99 = vld [vmem:[%s1 + $0x114] sm:$0xf]
    %v100 = vld [vmem:[%s1 + $0x118] sm:$0xf]
    %v101 = vld [vmem:[%s1 + $0x11c] sm:$0xf]
    %v102 = vld [vmem:[%s1 + $0x120] sm:$0xf]
    %v103 = vld [vmem:[%s1 + $0x124] sm:$0xf]
    %v104 = vld [vmem:[%s1 + $0x128] sm:$0xf]
    %v105 = vld [vmem:[%s1 + $0x12c] sm:$0xf]
    %v106 = vld [vmem:[%s1 + $0x130] sm:$0xf]
    %v107 = vld [vmem:[%s1 + $0x134] sm:$0xf]
    %v108 = vld [vmem:[%s1 + $0x138] sm:$0xf]
    %v109 = vld [vmem:[%s1 + $0x13c] sm:$0xf]
    %v110 = vld [vmem:[%s1 + $0x140] sm:$0xf]
    %v111 = vld [vmem:[%s1 + $0x144] sm:$0xf]
    %v112 = vld [vmem:[%s1 + $0x148] sm:$0xf]
    %v113 = vld [vmem:[%s1 + $0x14c] sm:$0xf]
    %v114 = vld [vmem:[%s1 + $0x150] sm:$0xf]
    %v115 = vld [vmem:[%s1 + $0x154] sm:$0xf]
    %v116 = vld [vmem:[%s1 + $0x158] sm:$0xf]
    %v117 = vld [vmem:[%s1 + $0x15c] sm:$0xf]
    %v118 = vld [vmem:[%s1 + $0x160] sm:$0xf]
    %v119 = vld [vmem:[%s1 + $0x164] sm:$0xf]
    %v120 = vld [vmem:[%s1 + $0x168] sm:$0xf]
    %v121 = vld [vmem:[%s1 + $0x16c] sm:$0xf]
    %v122 = vld [vmem:[%s1 + $0x170] sm:$0xf]
    %v123 = vld [vmem:[%s1 + $0x174] sm:$0xf]
    %v124 = vld [vmem:[%s1 + $0x178] sm:$0xf]
    %v125 = vld [vmem:[%s1 + $0x17c] sm:$0xf]
    %v126 = vld [vmem:[%s1 + $0x180] sm:$0xf]
    %v127 = vld [vmem:[%s1 + $0x184] sm:$0xf]
    %v128 = vld [vmem:[%s1 + $0x188] sm:$0xf]
    %v129 = vld [vmem:[%s1 + $0x18c] sm:$0xf]
    %v130 = vld [vmem:[%s1 + $0x190] sm:$0xf]
    %v131 = vld [vmem:[%s1 + $0x194] sm:$0xf]
    %v132 = vld [vmem:[%s1 + $0x198] sm:$0xf]
    %v133 = vld [vmem:[%s1 + $0x19c] sm:$0xf]
    %v134 = vld [vmem:[%s1 + $0x1a0] sm:$0xf]
    %v135 = vld [vmem:[%s1 + $0x1a4] sm:$0xf]
    %v136 = vld [vmem:[%s1 + $0x1a8] sm:$0xf]
    %v137 = vld [vmem:[%s1 + $0x1ac] sm:$0xf]
    %v138 = vld [vmem:[%s1 + $0x1b0] sm:$0xf]
    %v139 = vld [vmem:[%s1 + $0x1b4] sm:$0xf]
    %v140 = vld [vmem:[%s1 + $0x1b8] sm:$0xf]
    %v141 = vld [vmem:[%s1 + $0x1bc] sm:$0xf]
    %v142 = vld [vmem:[%s1 + $0x1c0] sm:$0xf]
    %v143 = vld [vmem:[%s1 + $0x1c4] sm:$0xf]
    %v144 = vld [vmem:[%s1 + $0x1c8] sm:$0xf]
    %v145 = vld [vmem:[%s1 + $0x1cc] sm:$0xf]
    %v146 = vld [vmem:[%s1 + $0x1d0] sm:$0xf]
    %v147 = vld [vmem:[%s1 + $0x1d4] sm:$0xf]
    %v148 = vld [vmem:[%s1 + $0x1d8] sm:$0xf]
    %v149 = vld [vmem:[%s1 + $0x1dc] sm:$0xf]
    %v150 = vld [vmem:[%s1 + $0x1e0] sm:$0xf]
    %v151 = vld [vmem:[%s1 + $0x1e4] sm:$0xf]
    %v152 = vld [vmem:[%s1 + $0x1e8] sm:$0xf]
    %v153 = vld [vmem:[%s1 + $0x1ec] sm:$0xf]
    %v154 = vld [vmem:[%s1 + $0x1f0] sm:$0xf]
    %v155 = vld [vmem:[%s1 + $0x1f4] sm:$0xf]
    %v156 = vld [vmem:[%s1 + $0x1f8] sm:$0xf]
    %v157 = vld [vmem:[%s1 + $0x1fc] sm:$0xf]
    %v158 = vld [vmem:[%s1 + $0x200] sm:$0xf]
    %v159 = vld [vmem:[%s1 + $0x204] sm:$0xf]
    %v160 = vld [vmem:[%s1 + $0x208] sm:$0xf]
    %v161 = vld [vmem:[%s1 + $0x20c] sm:$0xf]
    %v162 = vld [vmem:[%s1 + $0x210] sm:$0xf]
    %v163 = vld [vmem:[%s1 + $0x214] sm:$0xf]
    %v164 = vld [vmem:[%s1 + $0x218] sm:$0xf]
    %v165 = vld [vmem:[%s1 + $0x21c] sm:$0xf]
    %v166 = vld [vmem:[%s1 + $0x220] sm:$0xf]
    %v167 = vld [vmem:[%s1 + $0x224] sm:$0xf]
    %v168 = vld [vmem:[%s1 + $0x228] sm:$0xf]
    %v169 = vld [vmem:[%s1 + $0x22c] sm:$0xf]
    %v170 = vld [vmem:[%s1 + $0x230] sm:$0xf]
    %v171 = vld [vmem:[%s1 + $0x234] sm:$0xf]
    %v172 = vld [vmem:[%s1 + $0x238] sm:$0xf]
    %v173 = vld [vmem:[%s1 + $0x23c] sm:$0xf]
    %v174 = vld [vmem:[%s1 + $0x240] sm:$0xf]
    %v175 = vld [vmem:[%s1 + $0x244] sm:$0xf]
    %v176 = vld [vmem:[%s1 + $0x248] sm:$0xf]
    %v177 = vld [vmem:[%s1 + $0x24c] sm:$0xf]
    %v178 = vld [vmem:[%s1 + $0x250] sm:$0xf]
    %v179 = vld [vmem:[%s1 + $0x254] sm:$0xf]
    %v180 = vld [vmem:[%s2] sm:$0x1]
    %v182 = vperm.slane %v180, 0
    %185 = vst [vmem:[#allocation1] ss:$9 sm:$0xff] %v28
    %v186 = vld [vmem:[#allocation1] sm:$0xff]
    %v187 = vld [vmem:[#allocation1 + $0x9] sm:$0xff]
    %v188 = vld [vmem:[#allocation1 + $0x12] sm:$0xff]
    %v189 = vld [vmem:[#allocation1 + $0x1b] sm:$0xff]
    %v190 = vld [vmem:[#allocation1 + $0x24] sm:$0xff]
    %v191 = vld [vmem:[#allocation1 + $0x2d] sm:$0xff]
    %v192 = vld [vmem:[#allocation1 + $0x36] sm:$0xff]
    %v193 = vld [vmem:[#allocation1 + $0x3f] sm:$0xff]
    %195 = vst [vmem:[#allocation1] ss:$9 sm:$0xff] %v29
    %v196 = vld [vmem:[#allocation1] sm:$0xff]
    %v197 = vld [vmem:[#allocation1 + $0x9] sm:$0xff]
    %v357 = vunpack.c.l.b16 %v30
    %v358 = vunpack.c.l.b16 %v31
    %v359 = vunpack.c.l.b16 %v32
    %v360 = vunpack.c.l.b16 %v33
    %v361 = vunpack.c.l.b16 %v34
    %v362 = vunpack.c.l.b16 %v35
    %v363 = vunpack.c.l.b16 %v36
    %v364 = vunpack.c.l.b16 %v37
    %v365 = vunpack.c.l.b16 %v38
    %v366 = vunpack.c.l.b16 %v39
    %v367 = vunpack.c.l.b16 %v40
    %v368 = vunpack.c.l.b16 %v41
    %v369 = vunpack.c.l.b16 %v42
    %v370 = vunpack.c.l.b16 %v43
    %v371 = vunpack.c.l.b16 %v44
    %v372 = vunpack.c.l.b16 %v45
    %v373 = vunpack.c.l.b16 %v46
    %v374 = vunpack.c.l.b16 %v47
    %v375 = vunpack.c.l.b16 %v48
    %v376 = vunpack.c.l.b16 %v49
    %v377 = vunpack.c.l.b16 %v50
    %v378 = vunpack.c.l.b16 %v51
    %v379 = vunpack.c.l.b16 %v52
    %v380 = vunpack.c.l.b16 %v53
    %v381 = vunpack.c.l.b16 %v54
    %v382 = vunpack.c.l.b16 %v55
    %v383 = vunpack.c.l.b16 %v56
    %v384 = vunpack.c.l.b16 %v57
    %v385 = vunpack.c.l.b16 %v58
    %v386 = vunpack.c.l.b16 %v59
    %v387 = vunpack.c.l.b16 %v60
    %v388 = vunpack.c.l.b16 %v61
    %v389 = vunpack.c.l.b16 %v62
    %v390 = vunpack.c.l.b16 %v63
    %v391 = vunpack.c.l.b16 %v64
    %v392 = vunpack.c.l.b16 %v65
    %v393 = vunpack.c.l.b16 %v66
    %v394 = vunpack.c.l.b16 %v67
    %v395 = vunpack.c.l.b16 %v68
    %v396 = vunpack.c.l.b16 %v69
    %v397 = vunpack.c.l.b16 %v70
    %v398 = vunpack.c.l.b16 %v71
    %v399 = vunpack.c.l.b16 %v72
    %v400 = vunpack.c.l.b16 %v73
    %v401 = vunpack.c.l.b16 %v74
    %v402 = vunpack.c.l.b16 %v75
    %v403 = vunpack.c.l.b16 %v76
    %v404 = vunpack.c.l.b16 %v77
    %v405 = vunpack.c.l.b16 %v78
    %v406 = vunpack.c.l.b16 %v79
    %v407 = vunpack.c.l.b16 %v80
    %v408 = vunpack.c.l.b16 %v81
    %v409 = vunpack.c.l.b16 %v82
    %v410 = vunpack.c.l.b16 %v83
    %v411 = vunpack.c.l.b16 %v84
    %v412 = vunpack.c.l.b16 %v85
    %v413 = vunpack.c.l.b16 %v86
    %v414 = vunpack.c.l.b16 %v87
    %v415 = vunpack.c.l.b16 %v88
    %v416 = vunpack.c.l.b16 %v89
    %v417 = vunpack.c.l.b16 %v90
    %v418 = vunpack.c.l.b16 %v91
    %v419 = vunpack.c.l.b16 %v92
    %v420 = vunpack.c.l.b16 %v93
    %v421 = vunpack.c.l.b16 %v94
    %v422 = vunpack.c.l.b16 %v95
    %v423 = vunpack.c.l.b16 %v96
    %v424 = vunpack.c.l.b16 %v97
    %v425 = vunpack.c.l.b16 %v98
    %v426 = vunpack.c.l.b16 %v99
    %v427 = vunpack.c.l.b16 %v100
    %v428 = vunpack.c.l.b16 %v101
    %v429 = vunpack.c.l.b16 %v102
    %v430 = vunpack.c.l.b16 %v103
    %v431 = vunpack.c.l.b16 %v104
    %v432 = vunpack.c.l.b16 %v105
    %v433 = vunpack.c.l.b16 %v106
    %v434 = vunpack.c.l.b16 %v107
    %v435 = vunpack.c.l.b16 %v108
    %v436 = vunpack.c.l.b16 %v109
    %v437 = vunpack.c.l.b16 %v110
    %v438 = vunpack.c.l.b16 %v111
    %v439 = vunpack.c.l.b16 %v112
    %v440 = vunpack.c.l.b16 %v113
    %v441 = vunpack.c.l.b16 %v114
    %v442 = vunpack.c.l.b16 %v115
    %v443 = vunpack.c.l.b16 %v116
    %v444 = vunpack.c.l.b16 %v117
    %v445 = vunpack.c.l.b16 %v118
    %v446 = vunpack.c.l.b16 %v119
    %v447 = vunpack.c.l.b16 %v120
    %v448 = vunpack.c.l.b16 %v121
    %v449 = vunpack.c.l.b16 %v122
    %v450 = vunpack.c.l.b16 %v123
    %v451 = vunpack.c.l.b16 %v124
    %v452 = vunpack.c.l.b16 %v125
    %v453 = vunpack.c.l.b16 %v126
    %v454 = vunpack.c.l.b16 %v127
    %v455 = vunpack.c.l.b16 %v128
    %v456 = vunpack.c.l.b16 %v129
    %v457 = vunpack.c.l.b16 %v130
    %v458 = vunpack.c.l.b16 %v131
    %v459 = vunpack.c.l.b16 %v132
    %v460 = vunpack.c.l.b16 %v133
    %v461 = vunpack.c.l.b16 %v134
    %v462 = vunpack.c.l.b16 %v135
    %v463 = vunpack.c.l.b16 %v136
    %v464 = vunpack.c.l.b16 %v137
    %v465 = vunpack.c.l.b16 %v138
    %v466 = vunpack.c.l.b16 %v139
    %v467 = vunpack.c.l.b16 %v140
    %v468 = vunpack.c.l.b16 %v141
    %v469 = vunpack.c.l.b16 %v142
    %v470 = vunpack.c.l.b16 %v143
    %v471 = vunpack.c.l.b16 %v144
    %v472 = vunpack.c.l.b16 %v145
    %v473 = vunpack.c.l.b16 %v146
    %v474 = vunpack.c.l.b16 %v147
    %v475 = vunpack.c.l.b16 %v148
    %v476 = vunpack.c.l.b16 %v149
    %v477 = vunpack.c.l.b16 %v150
    %v478 = vunpack.c.l.b16 %v151
    %v479 = vunpack.c.l.b16 %v152
    %v480 = vunpack.c.l.b16 %v153
    %v481 = vunpack.c.l.b16 %v154
    %v482 = vunpack.c.l.b16 %v155
    %v483 = vunpack.c.l.b16 %v156
    %v484 = vunpack.c.l.b16 %v157
    %v485 = vunpack.c.l.b16 %v158
    %v486 = vunpack.c.l.b16 %v159
    %v487 = vunpack.c.l.b16 %v160
    %v488 = vunpack.c.l.b16 %v161
    %v489 = vunpack.c.l.b16 %v162
    %v490 = vunpack.c.l.b16 %v163
    %v491 = vunpack.c.l.b16 %v164
    %v492 = vunpack.c.l.b16 %v165
    %v493 = vunpack.c.l.b16 %v166
    %v494 = vunpack.c.l.b16 %v167
    %v495 = vunpack.c.l.b16 %v168
    %v496 = vunpack.c.l.b16 %v169
    %v497 = vunpack.c.l.b16 %v170
    %v498 = vunpack.c.l.b16 %v171
    %v499 = vunpack.c.l.b16 %v172
    %v500 = vunpack.c.l.b16 %v173
    %v501 = vunpack.c.l.b16 %v174
    %v502 = vunpack.c.l.b16 %v175
    %v503 = vunpack.c.l.b16 %v176
    %v504 = vunpack.c.l.b16 %v177
    %v505 = vunpack.c.l.b16 %v178
    %v506 = vunpack.c.l.b16 %v179
    %v507 = vpack.c.b16 %v358, %v357
    %v508 = vpack.c.b16 %v360, %v359
    %v509 = vpack.c.b16 %v362, %v361
    %v510 = vpack.c.b16 %v364, %v363
    %v511 = vpack.c.b16 %v366, %v365
    %v512 = vpack.c.b16 %v368, %v367
    %v513 = vpack.c.b16 %v370, %v369
    %v514 = vpack.c.b16 %v372, %v371
    %v515 = vpack.c.b16 %v374, %v373
    %v516 = vpack.c.b16 %v376, %v375
    %v517 = vpack.c.b16 %v378, %v377
    %v518 = vpack.c.b16 %v380, %v379
    %v519 = vpack.c.b16 %v382, %v381
    %v520 = vpack.c.b16 %v384, %v383
    %v521 = vpack.c.b16 %v386, %v385
    %v522 = vpack.c.b16 %v388, %v387
    %v523 = vpack.c.b16 %v390, %v389
    %v524 = vpack.c.b16 %v392, %v391
    %v525 = vpack.c.b16 %v394, %v393
    %v526 = vpack.c.b16 %v396, %v395
    %v527 = vpack.c.b16 %v398, %v397
    %v528 = vpack.c.b16 %v400, %v399
    %v529 = vpack.c.b16 %v402, %v401
    %v530 = vpack.c.b16 %v404, %v403
    %v531 = vpack.c.b16 %v406, %v405
    %v532 = vpack.c.b16 %v408, %v407
    %v533 = vpack.c.b16 %v410, %v409
    %v534 = vpack.c.b16 %v412, %v411
    %v535 = vpack.c.b16 %v414, %v413
    %v536 = vpack.c.b16 %v416, %v415
    %v537 = vpack.c.b16 %v418, %v417
    %v538 = vpack.c.b16 %v420, %v419
    %v539 = vpack.c.b16 %v422, %v421
    %v540 = vpack.c.b16 %v424, %v423
    %v541 = vpack.c.b16 %v426, %v425
    %v542 = vpack.c.b16 %v428, %v427
    %v543 = vpack.c.b16 %v430, %v429
    %v544 = vpack.c.b16 %v432, %v431
    %v545 = vpack.c.b16 %v434, %v433
    %v546 = vpack.c.b16 %v436, %v435
    %v547 = vpack.c.b16 %v438, %v437
    %v548 = vpack.c.b16 %v440, %v439
    %v549 = vpack.c.b16 %v442, %v441
    %v550 = vpack.c.b16 %v444, %v443
    %v551 = vpack.c.b16 %v446, %v445
    %v552 = vpack.c.b16 %v448, %v447
    %v553 = vpack.c.b16 %v450, %v449
    %v554 = vpack.c.b16 %v452, %v451
    %v555 = vpack.c.b16 %v454, %v453
    %v556 = vpack.c.b16 %v456, %v455
    %v557 = vpack.c.b16 %v458, %v457
    %v558 = vpack.c.b16 %v460, %v459
    %v559 = vpack.c.b16 %v462, %v461
    %v560 = vpack.c.b16 %v464, %v463
    %v561 = vpack.c.b16 %v466, %v465
    %v562 = vpack.c.b16 %v468, %v467
    %v563 = vpack.c.b16 %v470, %v469
    %v564 = vpack.c.b16 %v472, %v471
    %v565 = vpack.c.b16 %v474, %v473
    %v566 = vpack.c.b16 %v476, %v475
    %v567 = vpack.c.b16 %v478, %v477
    %v568 = vpack.c.b16 %v480, %v479
    %v569 = vpack.c.b16 %v482, %v481
    %v570 = vpack.c.b16 %v484, %v483
    %v571 = vpack.c.b16 %v486, %v485
    %v572 = vpack.c.b16 %v488, %v487
    %v573 = vpack.c.b16 %v490, %v489
    %v574 = vpack.c.b16 %v492, %v491
    %v575 = vpack.c.b16 %v494, %v493
    %v576 = vpack.c.b16 %v496, %v495
    %v577 = vpack.c.b16 %v498, %v497
    %v578 = vpack.c.b16 %v500, %v499
    %v579 = vpack.c.b16 %v502, %v501
    %v580 = vpack.c.b16 %v504, %v503
    %v581 = vpack.c.b16 %v506, %v505
    %vm657 = vcmask 392192
    %v658 = vsel %vm657, %v197, 0
    %660 = vmatpush.bf16.msra.mxu0 %v514
    %661 = vmatpush.bf16.msra.mxu0 %v513
    %662 = vmatpush.bf16.msra.mxu0 %v512
    %663 = vmatpush.bf16.msra.mxu0 %v511
    %664 = vmatpush.bf16.msra.mxu0 %v510
    %665 = vmatpush.bf16.msra.mxu0 %v509
    %666 = vmatpush.bf16.msra.mxu0 %v508
    %667 = vmatpush.bf16.msra.mxu0 %v507
    %668 = vmatmul.bf16.gmra.mxu0 %v186
    %v669 = vpop.f32.mrf.mxu0
    %v670 = vadd.f32 %v182, %v669
    %v671 = vpop.f32.mrf.mxu0
    %672 = vdwg.mxu0
    %673 = vmatpush.bf16.msra.mxu0 %v522
    %674 = vmatpush.bf16.msra.mxu0 %v521
    %675 = vmatpush.bf16.msra.mxu0 %v520
    %676 = vmatpush.bf16.msra.mxu0 %v519
    %677 = vmatpush.bf16.msra.mxu0 %v518
    %678 = vmatpush.bf16.msra.mxu0 %v517
    %679 = vmatpush.bf16.msra.mxu0 %v516
    %680 = vmatpush.bf16.msra.mxu0 %v515
    %681 = vmatmul.bf16.gmra.mxu0 %v187
    %v682 = vpop.f32.mrf.mxu0
    %v683 = vadd.f32 %v670, %v682
    %v684 = vpop.f32.mrf.mxu0
    %685 = vdwg.mxu0
    %686 = vmatpush.bf16.msra.mxu0 %v530
    %687 = vmatpush.bf16.msra.mxu0 %v529
    %688 = vmatpush.bf16.msra.mxu0 %v528
    %689 = vmatpush.bf16.msra.mxu0 %v527
    %690 = vmatpush.bf16.msra.mxu0 %v526
    %691 = vmatpush.bf16.msra.mxu0 %v525
    %692 = vmatpush.bf16.msra.mxu0 %v524
    %693 = vmatpush.bf16.msra.mxu0 %v523
    %694 = vmatmul.bf16.gmra.mxu0 %v188
    %v695 = vpop.f32.mrf.mxu0
    %v696 = vadd.f32 %v683, %v695
    %v697 = vpop.f32.mrf.mxu0
    %698 = vdwg.mxu0
    %699 = vmatpush.bf16.msra.mxu0 %v538
    %700 = vmatpush.bf16.msra.mxu0 %v537
    %701 = vmatpush.bf16.msra.mxu0 %v536
    %702 = vmatpush.bf16.msra.mxu0 %v535
    %703 = vmatpush.bf16.msra.mxu0 %v534
    %704 = vmatpush.bf16.msra.mxu0 %v533
    %705 = vmatpush.bf16.msra.mxu0 %v532
    %706 = vmatpush.bf16.msra.mxu0 %v531
    %707 = vmatmul.bf16.gmra.mxu0 %v189
    %v708 = vpop.f32.mrf.mxu0
    %v709 = vadd.f32 %v696, %v708
    %v710 = vpop.f32.mrf.mxu0
    %711 = vdwg.mxu0
    %712 = vmatpush.bf16.msra.mxu0 %v546
    %713 = vmatpush.bf16.msra.mxu0 %v545
    %714 = vmatpush.bf16.msra.mxu0 %v544
    %715 = vmatpush.bf16.msra.mxu0 %v543
    %716 = vmatpush.bf16.msra.mxu0 %v542
    %717 = vmatpush.bf16.msra.mxu0 %v541
    %718 = vmatpush.bf16.msra.mxu0 %v540
    %719 = vmatpush.bf16.msra.mxu0 %v539
    %720 = vmatmul.bf16.gmra.mxu0 %v190
    %v721 = vpop.f32.mrf.mxu0
    %v722 = vadd.f32 %v709, %v721
    %v723 = vpop.f32.mrf.mxu0
    %724 = vdwg.mxu0
    %725 = vmatpush.bf16.msra.mxu0 %v554
    %726 = vmatpush.bf16.msra.mxu0 %v553
    %727 = vmatpush.bf16.msra.mxu0 %v552
    %728 = vmatpush.bf16.msra.mxu0 %v551
    %729 = vmatpush.bf16.msra.mxu0 %v550
    %730 = vmatpush.bf16.msra.mxu0 %v549
    %731 = vmatpush.bf16.msra.mxu0 %v548
    %732 = vmatpush.bf16.msra.mxu0 %v547
    %733 = vmatmul.bf16.gmra.mxu0 %v191
    %v734 = vpop.f32.mrf.mxu0
    %v735 = vadd.f32 %v722, %v734
    %v736 = vpop.f32.mrf.mxu0
    %737 = vdwg.mxu0
    %738 = vmatpush.bf16.msra.mxu0 %v562
    %739 = vmatpush.bf16.msra.mxu0 %v561
    %740 = vmatpush.bf16.msra.mxu0 %v560
    %741 = vmatpush.bf16.msra.mxu0 %v559
    %742 = vmatpush.bf16.msra.mxu0 %v558
    %743 = vmatpush.bf16.msra.mxu0 %v557
    %744 = vmatpush.bf16.msra.mxu0 %v556
    %745 = vmatpush.bf16.msra.mxu0 %v555
    %746 = vmatmul.bf16.gmra.mxu0 %v192
    %v747 = vpop.f32.mrf.mxu0
    %v748 = vadd.f32 %v735, %v747
    %v749 = vpop.f32.mrf.mxu0
    %750 = vdwg.mxu0
    %751 = vmatpush.bf16.msra.mxu0 %v570
    %752 = vmatpush.bf16.msra.mxu0 %v569
    %753 = vmatpush.bf16.msra.mxu0 %v568
    %754 = vmatpush.bf16.msra.mxu0 %v567
    %755 = vmatpush.bf16.msra.mxu0 %v566
    %756 = vmatpush.bf16.msra.mxu0 %v565
    %757 = vmatpush.bf16.msra.mxu0 %v564
    %758 = vmatpush.bf16.msra.mxu0 %v563
    %759 = vmatmul.bf16.gmra.mxu0 %v193
    %v760 = vpop.f32.mrf.mxu0
    %v761 = vadd.f32 %v748, %v760
    %v762 = vpop.f32.mrf.mxu0
    %763 = vdwg.mxu0
    %764 = vmatpush.bf16.msra.mxu0 %v578
    %765 = vmatpush.bf16.msra.mxu0 %v577
    %766 = vmatpush.bf16.msra.mxu0 %v576
    %767 = vmatpush.bf16.msra.mxu0 %v575
    %768 = vmatpush.bf16.msra.mxu0 %v574
    %769 = vmatpush.bf16.msra.mxu0 %v573
    %770 = vmatpush.bf16.msra.mxu0 %v572
    %771 = vmatpush.bf16.msra.mxu0 %v571
    %772 = vmatmul.bf16.gmra.mxu0 %v196
    %v773 = vpop.f32.mrf.mxu0
    %v774 = vadd.f32 %v761, %v773
    %v775 = vpop.f32.mrf.mxu0
    %776 = vdwg.mxu0
    %777 = vmatpush.bf16.msra.mxu0 0
    %778 = vmatpush.bf16.msra.mxu0 0
    %779 = vmatpush.bf16.msra.mxu0 0
    %780 = vmatpush.bf16.msra.mxu0 0
    %781 = vmatpush.bf16.msra.mxu0 0
    %782 = vmatpush.bf16.msra.mxu0 %v581
    %783 = vmatpush.bf16.msra.mxu0 %v580
    %784 = vmatpush.bf16.msra.mxu0 %v579
    %785 = vmatmul.bf16.gmra.mxu0 %v658
    %v786 = vpop.f32.mrf.mxu0
    %v787 = vadd.f32 %v774, %v786
    %v788 = vpop.f32.mrf.mxu0
    %789 = vdwg.mxu0
    %v790 = vmax.f32 %v787, 0.0
    %v791 = vpack.c.bf16 %v790, %v790
    %v792 = vld [vmem:[%s3] sm:$0xf]
    %v793 = vld [vmem:[%s3 + $0x4] sm:$0xf]
    %v794 = vld [vmem:[%s3 + $0x8] sm:$0xf]
    %v795 = vld [vmem:[%s3 + $0xc] sm:$0xf]
    %v796 = vld [vmem:[%s3 + $0x10] sm:$0xf]
    %v797 = vld [vmem:[%s3 + $0x14] sm:$0xf]
    %v798 = vld [vmem:[%s3 + $0x18] sm:$0xf]
    %v799 = vld [vmem:[%s3 + $0x1c] sm:$0xf]
    %v800 = vld [vmem:[%s3 + $0x20] sm:$0xf]
    %v801 = vld [vmem:[%s3 + $0x24] sm:$0xf]
    %v802 = vld [vmem:[%s3 + $0x28] sm:$0xf]
    %v803 = vld [vmem:[%s3 + $0x2c] sm:$0xf]
    %v804 = vld [vmem:[%s3 + $0x30] sm:$0x3]
    %v805 = vld [vmem:[%s4] sm:$0x1]
    %v807 = vperm.slane %v805, 0
    %v822 = vunpack.c.l.b16 %v792
    %v823 = vunpack.c.l.b16 %v793
    %v824 = vunpack.c.l.b16 %v794
    %v825 = vunpack.c.l.b16 %v795
    %v826 = vunpack.c.l.b16 %v796
    %v827 = vunpack.c.l.b16 %v797
    %v828 = vunpack.c.l.b16 %v798
    %v829 = vunpack.c.l.b16 %v799
    %v830 = vunpack.c.l.b16 %v800
    %v831 = vunpack.c.l.b16 %v801
    %v832 = vunpack.c.l.b16 %v802
    %v833 = vunpack.c.l.b16 %v803
    %v834 = vunpack.c.l.b16 %v804
    %v835 = vpack.c.b16 %v823, %v822
    %v836 = vpack.c.b16 %v825, %v824
    %v837 = vpack.c.b16 %v827, %v826
    %v838 = vpack.c.b16 %v829, %v828
    %v839 = vpack.c.b16 %v831, %v830
    %v840 = vpack.c.b16 %v833, %v832
    %v841 = vpack.c.b16 %v834, %v834
    %vm848 = vcmask 818176
    %v850 = vsel %vm848, %v791, 0
    %vm852 = vcmask 1041408
    %v854 = vsel %vm852, %v841, 0
    %856 = vmatpush.bf16.msra.mxu0 0
    %857 = vmatpush.bf16.msra.mxu0 %v854
    %858 = vmatpush.bf16.msra.mxu0 %v840
    %859 = vmatpush.bf16.msra.mxu0 %v839
    %860 = vmatpush.bf16.msra.mxu0 %v838
    %861 = vmatpush.bf16.msra.mxu0 %v837
    %862 = vmatpush.bf16.msra.mxu0 %v836
    %863 = vmatpush.bf16.msra.mxu0 %v835
    %864 = vmatmul.bf16.gmra.mxu0 %v850
    %v865 = vpop.f32.mrf.mxu0
    %v866 = vadd.f32 %v807, %v865
    %v867 = vpop.f32.mrf.mxu0
    %868 = vdwg.mxu0
    %v869 = vmax.f32 %v866, 0.0
    %v870 = vpack.c.bf16 %v869, %v869
    %v871 = vld [vmem:[%s5] sm:$0xf]
    %v872 = vld [vmem:[%s5 + $0x4] sm:$0xf]
    %v873 = vld [vmem:[%s5 + $0x8] sm:$0xf]
    %v874 = vld [vmem:[%s5 + $0xc] sm:$0xf]
    %v875 = vld [vmem:[%s5 + $0x10] sm:$0xf]
    %v876 = vld [vmem:[%s5 + $0x14] sm:$0xf]
    %v877 = vld [vmem:[%s5 + $0x18] sm:$0xf]
    %v878 = vld [vmem:[%s5 + $0x1c] sm:$0xf]
    %v879 = vld [vmem:[%s5 + $0x20] sm:$0xf]
    %v880 = vld [vmem:[%s5 + $0x24] sm:$0xf]
    %v881 = vld [vmem:[%s5 + $0x28] sm:$0xf]
    %v882 = vld [vmem:[%s5 + $0x2c] sm:$0xf]
    %v883 = vld [vmem:[%s5 + $0x30] sm:$0x3]
    %v884 = vld [vmem:[%s6] sm:$0x1]
    %v886 = vperm.slane %v884, 0
    %v901 = vunpack.c.l.b16 %v871
    %v902 = vunpack.c.l.b16 %v872
    %v903 = vunpack.c.l.b16 %v873
    %v904 = vunpack.c.l.b16 %v874
    %v905 = vunpack.c.l.b16 %v875
    %v906 = vunpack.c.l.b16 %v876
    %v907 = vunpack.c.l.b16 %v877
    %v908 = vunpack.c.l.b16 %v878
    %v909 = vunpack.c.l.b16 %v879
    %v910 = vunpack.c.l.b16 %v880
    %v911 = vunpack.c.l.b16 %v881
    %v912 = vunpack.c.l.b16 %v882
    %v913 = vunpack.c.l.b16 %v883
    %v914 = vpack.c.b16 %v902, %v901
    %v915 = vpack.c.b16 %v904, %v903
    %v916 = vpack.c.b16 %v906, %v905
    %v917 = vpack.c.b16 %v908, %v907
    %v918 = vpack.c.b16 %v910, %v909
    %v919 = vpack.c.b16 %v912, %v911
    %v920 = vpack.c.b16 %v913, %v913
    %v928 = vsel %vm848, %v870, 0
    %v931 = vsel %vm852, %v920, 0
    %933 = vmatpush.bf16.msra.mxu0 0
    %934 = vmatpush.bf16.msra.mxu0 %v931
    %935 = vmatpush.bf16.msra.mxu0 %v919
    %936 = vmatpush.bf16.msra.mxu0 %v918
    %937 = vmatpush.bf16.msra.mxu0 %v917
    %938 = vmatpush.bf16.msra.mxu0 %v916
    %939 = vmatpush.bf16.msra.mxu0 %v915
    %940 = vmatpush.bf16.msra.mxu0 %v914
    %941 = vmatmul.bf16.gmra.mxu0 %v928
    %v942 = vpop.f32.mrf.mxu0
    %v943 = vadd.f32 %v886, %v942
    %v944 = vpop.f32.mrf.mxu0
    %945 = vdwg.mxu0
    %vm946 = vcmask 74752
    %v947 = vsel %vm946, %v943, -inf
    %948 = vmax.xlane.f32.xlu0 %v947
    %v949 = vpop.xlane.xlu0 %948
    %v950 = vsub.f32 %v943, %v949
    %v951 = vmul.f32 %v950, 1.442695
    %v952 = vpow.pop %v951
    %v953 = vsel %vm946, %v952, 0.0
    %954 = vadd.xlane.f32.xlu0 %v953
    %v955 = vpop.xlane.xlu0 %954
    %v956 = vlog2.pop %v955
    %v957 = vmul.f32 %v956, 0.6931472
    %v958 = vsub.f32 %v950, %v957
    %959 = vst.msk [vmem:[#allocation2] sm:$0x3] %vm946, %v958
    // Predicated region
    $region30: #{svhn_forward.5} parent=1 // pred_check
      _
    $region31: #{svhn_forward.5} parent=1 // pred_check_branch
      %961 = sbr.rel (0) target = $region33
    $region32: #{svhn_forward.5} parent=1 // pred_region
      %963 = vsyncadd [#allocation3], 0
      %s965 = sshll.u32 [#allocation2], 4
      %s966 = int_to_ptr.vmem [resolvable:$true] %s965
      %s967 = sshll.u32 %s7, 4
      %s968 = int_to_ptr.hbm [resolvable:$true] %s967
      %970 = dma.vmem_to_hbm [thread:$0]  %s966, 32, %s968, [#allocation3]
    $region33: #{svhn_forward.5} parent=1 // pred_fallthru
      _
    // Predicated region
    $region34: #{svhn_forward.5} parent=1 // pred_check
      _
    $region35: #{svhn_forward.5} parent=1 // pred_check_branch
      %972 = sbr.rel (0) target = $region37
    $region36: #{svhn_forward.5} parent=1 // pred_region
      %974 = dma.done [#allocation3], 32
    $region37: #{svhn_forward.5} parent=1 // pred_fallthru
      _
    %975 = vsyncpa [#allocation3], 1

</llo_original>
